<compile_context>
chip_gen: v7x
topology: tpu7x:2x2x1
jax: 0.10.0
libtpu: 0.0.40
codegen_flags: <defaults>
</compile_context>

<pallas_src>
import functools

import numpy as np
import jax
import jax.numpy as jnp
from jax import lax
from jax.experimental import pallas as pl
from jax.experimental.pallas import tpu as pltpu

EPS = 1e-5


# ---------------------------------------------------------------------------
# Host-side helpers.
# ---------------------------------------------------------------------------
def _make_tap_masks(H, W):
    """(9, H*W) f32 border masks, one per 3x3 tap (tap k = dy*3 + dx)."""
    col = np.arange(H * W) % W
    row = np.arange(H * W) // W
    masks = np.ones((9, H * W), np.float32)
    for dy in range(3):
        for dx in range(3):
            r, c = dy - 1, dx - 1
            valid = np.ones(H * W, bool)
            if c < 0:
                valid &= col >= -c
            if c > 0:
                valid &= col < W - c
            if r < 0:
                valid &= row >= -r
            if r > 0:
                valid &= row < H - r
            masks[dy * 3 + dx] = valid.astype(np.float32)
    return jnp.asarray(masks)


def _images_per_block(N, C, HW, *, target_bytes=2 * 1024 * 1024, max_ib=8):
    """Images folded into one grid step.

    Amortizes the ~600-cycle per-grid-step overhead and enlarges DMAs, while
    keeping >= 2 'parallel' grid steps (when N >= 2) so both v7x TensorCores
    receive work. Must divide N so every block is full.
    """
    per_img = C * HW * 4
    best = 1
    for ib in range(1, min(N, max_ib) + 1):
        if N % ib:
            continue
        if ib > 1 and ib * per_img > target_bytes:
            continue
        if N >= 2 and N // ib < 2:
            continue
        best = ib
    return best


# ---------------------------------------------------------------------------
# In-kernel building blocks (lane-dense (C, H*W) slabs).
# ---------------------------------------------------------------------------
def _pointwise(pwt, acc):
    """1x1 conv: (C_out, C_in) x (C_in, HW) -> (C_out, HW), f32 accumulate."""
    c_in = acc.shape[0]
    if c_in <= 8:
        # Tiny contraction: unrolled VPU FMAs beat a sliver MXU matmul.
        y = pwt[:, 0:1] * acc[0:1, :]
        for ci in range(1, c_in):
            y = y + pwt[:, ci:ci + 1] * acc[ci:ci + 1, :]
        return y
    # Production channel counts: MXU path, bf16 operands + f32 accumulation
    # (native MXU rate on v6e/v7x; on v5e pad C toward 128).
    return jnp.dot(pwt.astype(jnp.bfloat16), acc.astype(jnp.bfloat16),
                   preferred_element_type=jnp.float32)


def _depthwise3x3_flat(x, dwt, masks, W):
    """Depthwise 3x3, stride 1, pad 1, on a flattened (C, H*W) slab.

    Each tap is a lane rotation (pltpu.roll -> XLU slot) of the flattened image
    multiplied by a precomputed border mask row -> no padded scratch, no in-kernel
    iota/div/mod/compare sequences.
    """
    HW = x.shape[1]
    acc = x * dwt[:, 4:5]                               # center tap: no shift, no mask
    for dy in range(3):
        for dx in range(3):
            if dy == 1 and dx == 1:
                continue
            k = dy * 3 + dx
            s = (dy - 1) * W + (dx - 1)                 # flat offset of this tap
            # shifted[:, p] = x[:, p + s]  (wrap-around killed by the mask)
            shifted = pltpu.roll(x, shift=(-s) % HW, axis=1)
            acc = acc + (shifted * masks[k:k + 1, :]) * dwt[:, k:k + 1]
    return acc


def _dwsep_block(x, dwt, pwt, masks, W):
    return _pointwise(pwt, _depthwise3x3_flat(x, dwt, masks, W))


# ---------------------------------------------------------------------------
# Pallas kernels (grid = (N // images_per_block,), "parallel").
# ---------------------------------------------------------------------------
def _stage1_kernel(x_ref, masks_ref, dwt_ref, pwt_ref, y_ref, stat_ref, *, W):
    masks = masks_ref[...]
    dwt = dwt_ref[...]
    pwt = pwt_ref[...]
    c_out = pwt.shape[0]
    ssum = jnp.zeros((c_out, 1), jnp.float32)
    ssq = jnp.zeros((c_out, 1), jnp.float32)
    for ib in range(x_ref.shape[0]):                    # static, small (<= 8)
        x = x_ref[ib].astype(jnp.float32)               # (Cin, HW)
        y = _dwsep_block(x, dwt, pwt, masks, W)         # (Cout, HW), f32
        y_ref[ib] = y.astype(y_ref.dtype)               # bf16 (or f32) writeback
        ssum = ssum + jnp.sum(y, axis=1, keepdims=True)
        ssq = ssq + jnp.sum(y * y, axis=1, keepdims=True)
    stat_ref[0] = jnp.concatenate([ssum, ssq], axis=1)  # packed (Cout, 2)


def _stage2_kernel(x_ref, masks_ref, scale_ref, shift_ref, dwt_ref, pwt_ref,
                   y_ref, stat_ref, *, W):
    masks = masks_ref[...]
    scale = scale_ref[...]
    shift = shift_ref[...]
    dwt = dwt_ref[...]
    pwt = pwt_ref[...]
    c_out = pwt.shape[0]
    ssum = jnp.zeros((c_out, 1), jnp.float32)
    ssq = jnp.zeros((c_out, 1), jnp.float32)
    for ib in range(x_ref.shape[0]):
        # Fused BN1 (precomputed per-channel scale/shift) + ReLU.
        h = jnp.maximum(x_ref[ib].astype(jnp.float32) * scale + shift, 0.0)
        y = _dwsep_block(h, dwt, pwt, masks, W)
        y_ref[ib] = y.astype(y_ref.dtype)
        ssum = ssum + jnp.sum(y, axis=1, keepdims=True)
        ssq = ssq + jnp.sum(y * y, axis=1, keepdims=True)
    stat_ref[0] = jnp.concatenate([ssum, ssq], axis=1)


def _bn_relu_kernel(x_ref, scale_ref, shift_ref, o_ref):
    scale = scale_ref[...]
    shift = shift_ref[...]
    for ib in range(x_ref.shape[0]):
        o_ref[ib] = jnp.maximum(
            x_ref[ib].astype(jnp.float32) * scale + shift, 0.0).astype(o_ref.dtype)


# ---------------------------------------------------------------------------
# Tiny JAX glue: fold batch stats + gamma/beta into per-channel scale/shift.
# NOTE: one-pass E[x^2]-E[x]^2 in f32; for very large N*H*W switch to a shifted
# sum-of-squares to avoid cancellation.
# ---------------------------------------------------------------------------
def _bn_affine(stats, count, gamma, beta):
    ssum = jnp.sum(stats[:, :, 0], axis=0)              # (Cout,)
    ssq = jnp.sum(stats[:, :, 1], axis=0)
    mean = ssum / count
    var = jnp.maximum(ssq / count - mean * mean, 0.0)   # biased var (BN forward)
    inv = lax.rsqrt(var + EPS)
    scale = gamma * inv
    shift = beta - mean * scale
    return scale[:, None].astype(jnp.float32), shift[:, None].astype(jnp.float32)


# ---------------------------------------------------------------------------
# Wrapper: NCHW in / NCHW out.
# ---------------------------------------------------------------------------
def double_conv_depthwise_sep(x_nchw, params, *, interstage_dtype=jnp.bfloat16):
    N, Cin, H, W = x_nchw.shape
    Cout = params["pw1"].shape[1]
    HW = H * W

    # Free contiguous reshape: no transpose, no pad, no extra HBM pass.
    x = x_nchw.reshape(N, Cin, HW).astype(jnp.float32)
    masks = _make_tap_masks(H, W)                        # (9, HW) constant

    # Kernel-friendly weight layouts (tiny arrays).
    dw1t = params["dw1"].T.astype(jnp.float32)           # (Cin, 9)
    pw1t = params["pw1"].T.astype(jnp.float32)           # (Cout, Cin)
    dw2t = params["dw2"].T.astype(jnp.float32)           # (Cout, 9)
    pw2t = params["pw2"].T.astype(jnp.float32)           # (Cout, Cout)

    ib = _images_per_block(N, max(Cin, Cout), HW)
    nblk = N // ib

    blk_bytes = ib * max(Cin, Cout) * HW * 4
    cparams = pltpu.CompilerParams(
        dimension_semantics=("parallel",),                # image blocks independent
        # double-buffered in+out blocks + headroom; capped for v7x's 64 MiB VMEM
        vmem_limit_bytes=int(min(56 * 1024 * 1024,
                                 max(32 * 1024 * 1024, 8 * blk_bytes))),
    )

    img_spec = lambda C: pl.BlockSpec((ib, C, HW), lambda n: (n, 0, 0))
    w_spec = lambda shape: pl.BlockSpec(shape, lambda n: (0, 0))
    stat_spec = pl.BlockSpec((1, Cout, 2), lambda n: (n, 0, 0))
    stat_shape = jax.ShapeDtypeStruct((nblk, Cout, 2), jnp.float32)

    # ---- stage 1: depthwise 3x3 #1 + 1x1 #1, per-block BN1 partial sums ----
    y1, st1 = pl.pallas_call(
        functools.partial(_stage1_kernel, W=W),
        grid=(nblk,),
        in_specs=[img_spec(Cin), w_spec((9, HW)), w_spec((Cin, 9)),
                  w_spec((Cout, Cin))],
        out_specs=(img_spec(Cout), stat_spec),
        out_shape=(jax.ShapeDtypeStruct((N, Cout, HW), interstage_dtype), stat_shape),
        compiler_params=cparams,
    )(x, masks, dw1t, pw1t)

    scale1, shift1 = _bn_affine(st1, N * HW, params["g1"][0], params["b1"][0])

    # ---- stage 2: BN1+ReLU fused with depthwise 3x3 #2 + 1x1 #2, BN2 partials ----
    y2, st2 = pl.pallas_call(
        functools.partial(_stage2_kernel, W=W),
        grid=(nblk,),
        in_specs=[img_spec(Cout), w_spec((9, HW)), w_spec((Cout, 1)),
                  w_spec((Cout, 1)), w_spec((Cout, 9)), w_spec((Cout, Cout))],
        out_specs=(img_spec(Cout), stat_spec),
        out_shape=(jax.ShapeDtypeStruct((N, Cout, HW), interstage_dtype), stat_shape),
        compiler_params=cparams,
    )(y1, masks, scale1, shift1, dw2t, pw2t)

    scale2, shift2 = _bn_affine(st2, N * HW, params["g2"][0], params["b2"][0])

    # ---- stage 3: BN2 + ReLU (lane-dense elementwise) ----
    # TODO(synk): stage 3 + the BN2 affine fold could be merged into a single
    # multi-phase pallas_call (phase axis 'arbitrary', per-channel accumulators in
    # VMEM scratch), but that conflicts with 'parallel' megacore sharding of the
    # image axis on v7x; kept as a separate call.
    out = pl.pallas_call(
        _bn_relu_kernel,
        grid=(nblk,),
        in_specs=[img_spec(Cout), w_spec((Cout, 1)), w_spec((Cout, 1))],
        out_specs=img_spec(Cout),
        out_shape=jax.ShapeDtypeStruct((N, Cout, HW), jnp.float32),
        compiler_params=cparams,
    )(y2, scale2, shift2)

    return out.reshape(N, Cout, H, W)


# ---------------------------------------------------------------------------
# Pure-JAX reference (mirrors the PyTorch module, NCHW) for correctness check.
# ---------------------------------------------------------------------------
def _dw_to_oihw(dw_k, C):      # (9, C) -> (C, 1, 3, 3)
    return jnp.transpose(dw_k.reshape(3, 3, C), (2, 0, 1))[:, None, :, :]


def _pw_to_oihw(pw_k):         # (Cin, Cout) -> (Cout, Cin, 1, 1)
    return jnp.transpose(pw_k, (1, 0))[:, :, None, None]


def _bn_relu_ref(x, gamma, beta):
    mu = jnp.mean(x, axis=(0, 2, 3), keepdims=True)
    var = jnp.var(x, axis=(0, 2, 3), keepdims=True)      # biased, as in PyTorch BN fwd
    y = (x - mu) * lax.rsqrt(var + EPS)
    y = y * gamma[None, :, None, None] + beta[None, :, None, None]
    return jnp.maximum(y, 0.0)


def reference_forward(x, params):
    Cin = x.shape[1]
    dn = ("NCHW", "OIHW", "NCHW")
    h = lax.conv_general_dilated(x, _dw_to_oihw(params["dw1"], Cin), (1, 1),
                                 ((1, 1), (1, 1)), dimension_numbers=dn,
                                 feature_group_count=Cin)
    h = lax.conv_general_dilated(h, _pw_to_oihw(params["pw1"]), (1, 1),
                                 ((0, 0), (0, 0)), dimension_numbers=dn)
    h = _bn_relu_ref(h, params["g1"][0], params["b1"][0])

    Cout = h.shape[1]
    h = lax.conv_general_dilated(h, _dw_to_oihw(params["dw2"], Cout), (1, 1),
                                 ((1, 1), (1, 1)), dimension_numbers=dn,
                                 feature_group_count=Cout)
    h = lax.conv_general_dilated(h, _pw_to_oihw(params["pw2"]), (1, 1),
                                 ((0, 0), (0, 0)), dimension_numbers=dn)
    h = _bn_relu_ref(h, params["g2"][0], params["b2"][0])
    return h


def init_params(key, in_channels, out_channels):
    ks = jax.random.split(key, 8)
    return {
        "dw1": 0.2 * jax.random.normal(ks[0], (9, in_channels), jnp.float32),
        "pw1": 0.2 * jax.random.normal(ks[1], (in_channels, out_channels), jnp.float32),
        "g1": 1.0 + 0.1 * jax.random.normal(ks[2], (1, out_channels), jnp.float32),
        "b1": 0.1 * jax.random.normal(ks[3], (1, out_channels), jnp.float32),
        "dw2": 0.2 * jax.random.normal(ks[4], (9, out_channels), jnp.float32),
        "pw2": 0.2 * jax.random.normal(ks[5], (out_channels, out_channels), jnp.float32),
        "g2": 1.0 + 0.1 * jax.random.normal(ks[6], (1, out_channels), jnp.float32),
        "b2": 0.1 * jax.random.normal(ks[7], (1, out_channels), jnp.float32),
    }


if __name__ == "__main__":
    key = jax.random.PRNGKey(0)
    k_x, k_p = jax.random.split(key)

    Cin, Cout, H, W = 4, 8, 16, 16
    params = init_params(k_p, Cin, Cout)

    # ---- batched run: multiple images per grid step + bf16 inter-stage acts ----
    xb = jax.random.normal(k_x, (8, Cin, H, W), jnp.float32)     # NCHW
    fwd_bf16 = jax.jit(
        lambda a, p: double_conv_depthwise_sep(a, p, interstage_dtype=jnp.bfloat16))
    out_b = jax.block_until_ready(fwd_bf16(xb, params))
    ref_b = jax.block_until_ready(reference_forward(xb, params))
    assert out_b.shape == (8, Cout, H, W), out_b.shape
    # bf16 inter-stage activations perturb values by ~0.2-0.5% relative.
    assert jnp.allclose(out_b, ref_b, atol=5e-2, rtol=5e-2), \
        f"bf16-intermediate path max abs err {float(jnp.max(jnp.abs(out_b - ref_b)))}"

    # ---- small run (batch=2) with f32 intermediates: tight tolerance ----
    xs = xb[:2]
    fwd_f32 = jax.jit(
        lambda a, p: double_conv_depthwise_sep(a, p, interstage_dtype=jnp.float32))
    out_s = jax.block_until_ready(fwd_f32(xs, params))
    ref_s = jax.block_until_ready(reference_forward(xs, params))
    assert out_s.shape == (2, Cout, H, W), out_s.shape
    assert jnp.allclose(out_s, ref_s, atol=2e-3, rtol=2e-3), \
        f"f32-intermediate path max abs err {float(jnp.max(jnp.abs(out_s - ref_s)))}"

    print("KERNEL_OK")
</pallas_src>

<mosaic_0001>
module attributes {stable_mosaic.version = 11 : i64} {
  func.func @_stage1_kernel(%arg0: i32, %arg1: memref<4x4x256xf32, #tpu.memory_space<vmem>>, %arg2: memref<9x256xf32, #tpu.memory_space<vmem>>, %arg3: memref<4x9xf32, #tpu.memory_space<vmem>>, %arg4: memref<8x4xf32, #tpu.memory_space<vmem>>, %arg5: memref<4x8x256xbf16, #tpu.memory_space<vmem>>, %arg6: memref<1x8x2xf32, #tpu.memory_space<vmem>>) attributes {dimension_semantics = [#tpu.dimension_semantics<parallel>], iteration_bounds = array<i64: 2>, scalar_prefetch = 0 : i64, scratch_operands = 0 : i64, tpu.core_type = #tpu.core_type<tc>, window_params = [{transform_indices = @transform_0, window_bounds = array<i64: 4, 4, 256>}, {pipeline_mode = #tpu.pipeline_mode<synchronous>, transform_indices = @transform_1, window_bounds = array<i64: 9, 256>}, {pipeline_mode = #tpu.pipeline_mode<synchronous>, transform_indices = @transform_2, window_bounds = array<i64: 4, 9>}, {pipeline_mode = #tpu.pipeline_mode<synchronous>, transform_indices = @transform_3, window_bounds = array<i64: 8, 4>}, {transform_indices = @transform_4, window_bounds = array<i64: 4, 8, 256>}, {transform_indices = @transform_5, window_bounds = array<i64: 1, 8, 2>}]} {
    %c0 = arith.constant 0 : index
    %c0_0 = arith.constant 0 : index
    %0 = vector.load %arg2[%c0, %c0_0] : memref<9x256xf32, #tpu.memory_space<vmem>>, vector<9x256xf32>
    %c0_1 = arith.constant 0 : index
    %c0_2 = arith.constant 0 : index
    %1 = vector.load %arg3[%c0_1, %c0_2] : memref<4x9xf32, #tpu.memory_space<vmem>>, vector<4x9xf32>
    %c0_3 = arith.constant 0 : index
    %c0_4 = arith.constant 0 : index
    %2 = vector.load %arg4[%c0_3, %c0_4] : memref<8x4xf32, #tpu.memory_space<vmem>>, vector<8x4xf32>
    %cst = arith.constant 0.000000e+00 : f32
    %3 = vector.broadcast %cst : f32 to vector<8x1xf32>
    %cst_5 = arith.constant 0.000000e+00 : f32
    %4 = vector.broadcast %cst_5 : f32 to vector<8x1xf32>
    %c0_6 = arith.constant 0 : index
    %c0_7 = arith.constant 0 : index
    %c0_8 = arith.constant 0 : index
    %5 = vector.load %arg1[%c0_6, %c0_7, %c0_8] : memref<4x4x256xf32, #tpu.memory_space<vmem>>, vector<1x4x256xf32>
    %6 = vector.shape_cast %5 : vector<1x4x256xf32> to vector<4x256xf32>
    %7 = vector.extract_strided_slice %1 {offsets = [0, 4], sizes = [4, 1], strides = [1, 1]} : vector<4x9xf32> to vector<4x1xf32>
    %8 = vector.broadcast %7 : vector<4x1xf32> to vector<4x256xf32>
    %9 = arith.mulf %6, %8 : vector<4x256xf32>
    %c17_i32 = arith.constant 17 : i32
    %10 = tpu.dynamic_rotate %6 by %c17_i32 dim 1 : vector<4x256xf32>, i32 -> vector<4x256xf32>
    %11 = vector.extract_strided_slice %0 {offsets = [0, 0], sizes = [1, 256], strides = [1, 1]} : vector<9x256xf32> to vector<1x256xf32>
    %12 = vector.broadcast %11 : vector<1x256xf32> to vector<4x256xf32>
    %13 = arith.mulf %10, %12 : vector<4x256xf32>
    %14 = vector.extract_strided_slice %1 {offsets = [0, 0], sizes = [4, 1], strides = [1, 1]} : vector<4x9xf32> to vector<4x1xf32>
    %15 = vector.broadcast %14 : vector<4x1xf32> to vector<4x256xf32>
    %16 = arith.mulf %13, %15 : vector<4x256xf32>
    %17 = arith.addf %9, %16 : vector<4x256xf32>
    %c16_i32 = arith.constant 16 : i32
    %18 = tpu.dynamic_rotate %6 by %c16_i32 dim 1 : vector<4x256xf32>, i32 -> vector<4x256xf32>
    %19 = vector.extract_strided_slice %0 {offsets = [1, 0], sizes = [1, 256], strides = [1, 1]} : vector<9x256xf32> to vector<1x256xf32>
    %20 = vector.broadcast %19 : vector<1x256xf32> to vector<4x256xf32>
    %21 = arith.mulf %18, %20 : vector<4x256xf32>
    %22 = vector.extract_strided_slice %1 {offsets = [0, 1], sizes = [4, 1], strides = [1, 1]} : vector<4x9xf32> to vector<4x1xf32>
    %23 = vector.broadcast %22 : vector<4x1xf32> to vector<4x256xf32>
    %24 = arith.mulf %21, %23 : vector<4x256xf32>
    %25 = arith.addf %17, %24 : vector<4x256xf32>
    %c15_i32 = arith.constant 15 : i32
    %26 = tpu.dynamic_rotate %6 by %c15_i32 dim 1 : vector<4x256xf32>, i32 -> vector<4x256xf32>
    %27 = vector.extract_strided_slice %0 {offsets = [2, 0], sizes = [1, 256], strides = [1, 1]} : vector<9x256xf32> to vector<1x256xf32>
    %28 = vector.broadcast %27 : vector<1x256xf32> to vector<4x256xf32>
    %29 = arith.mulf %26, %28 : vector<4x256xf32>
    %30 = vector.extract_strided_slice %1 {offsets = [0, 2], sizes = [4, 1], strides = [1, 1]} : vector<4x9xf32> to vector<4x1xf32>
    %31 = vector.broadcast %30 : vector<4x1xf32> to vector<4x256xf32>
    %32 = arith.mulf %29, %31 : vector<4x256xf32>
    %33 = arith.addf %25, %32 : vector<4x256xf32>
    %c1_i32 = arith.constant 1 : i32
    %34 = tpu.dynamic_rotate %6 by %c1_i32 dim 1 : vector<4x256xf32>, i32 -> vector<4x256xf32>
    %35 = vector.extract_strided_slice %0 {offsets = [3, 0], sizes = [1, 256], strides = [1, 1]} : vector<9x256xf32> to vector<1x256xf32>
    %36 = vector.broadcast %35 : vector<1x256xf32> to vector<4x256xf32>
    %37 = arith.mulf %34, %36 : vector<4x256xf32>
    %38 = vector.extract_strided_slice %1 {offsets = [0, 3], sizes = [4, 1], strides = [1, 1]} : vector<4x9xf32> to vector<4x1xf32>
    %39 = vector.broadcast %38 : vector<4x1xf32> to vector<4x256xf32>
    %40 = arith.mulf %37, %39 : vector<4x256xf32>
    %41 = arith.addf %33, %40 : vector<4x256xf32>
    %c255_i32 = arith.constant 255 : i32
    %42 = tpu.dynamic_rotate %6 by %c255_i32 dim 1 : vector<4x256xf32>, i32 -> vector<4x256xf32>
    %43 = vector.extract_strided_slice %0 {offsets = [5, 0], sizes = [1, 256], strides = [1, 1]} : vector<9x256xf32> to vector<1x256xf32>
    %44 = vector.broadcast %43 : vector<1x256xf32> to vector<4x256xf32>
    %45 = arith.mulf %42, %44 : vector<4x256xf32>
    %46 = vector.extract_strided_slice %1 {offsets = [0, 5], sizes = [4, 1], strides = [1, 1]} : vector<4x9xf32> to vector<4x1xf32>
    %47 = vector.broadcast %46 : vector<4x1xf32> to vector<4x256xf32>
    %48 = arith.mulf %45, %47 : vector<4x256xf32>
    %49 = arith.addf %41, %48 : vector<4x256xf32>
    %c241_i32 = arith.constant 241 : i32
    %50 = tpu.dynamic_rotate %6 by %c241_i32 dim 1 : vector<4x256xf32>, i32 -> vector<4x256xf32>
    %51 = vector.extract_strided_slice %0 {offsets = [6, 0], sizes = [1, 256], strides = [1, 1]} : vector<9x256xf32> to vector<1x256xf32>
    %52 = vector.broadcast %51 : vector<1x256xf32> to vector<4x256xf32>
    %53 = arith.mulf %50, %52 : vector<4x256xf32>
    %54 = vector.extract_strided_slice %1 {offsets = [0, 6], sizes = [4, 1], strides = [1, 1]} : vector<4x9xf32> to vector<4x1xf32>
    %55 = vector.broadcast %54 : vector<4x1xf32> to vector<4x256xf32>
    %56 = arith.mulf %53, %55 : vector<4x256xf32>
    %57 = arith.addf %49, %56 : vector<4x256xf32>
    %c240_i32 = arith.constant 240 : i32
    %58 = tpu.dynamic_rotate %6 by %c240_i32 dim 1 : vector<4x256xf32>, i32 -> vector<4x256xf32>
    %59 = vector.extract_strided_slice %0 {offsets = [7, 0], sizes = [1, 256], strides = [1, 1]} : vector<9x256xf32> to vector<1x256xf32>
    %60 = vector.broadcast %59 : vector<1x256xf32> to vector<4x256xf32>
    %61 = arith.mulf %58, %60 : vector<4x256xf32>
    %62 = vector.extract_strided_slice %1 {offsets = [0, 7], sizes = [4, 1], strides = [1, 1]} : vector<4x9xf32> to vector<4x1xf32>
    %63 = vector.broadcast %62 : vector<4x1xf32> to vector<4x256xf32>
    %64 = arith.mulf %61, %63 : vector<4x256xf32>
    %65 = arith.addf %57, %64 : vector<4x256xf32>
    %c239_i32 = arith.constant 239 : i32
    %66 = tpu.dynamic_rotate %6 by %c239_i32 dim 1 : vector<4x256xf32>, i32 -> vector<4x256xf32>
    %67 = vector.extract_strided_slice %0 {offsets = [8, 0], sizes = [1, 256], strides = [1, 1]} : vector<9x256xf32> to vector<1x256xf32>
    %68 = vector.broadcast %67 : vector<1x256xf32> to vector<4x256xf32>
    %69 = arith.mulf %66, %68 : vector<4x256xf32>
    %70 = vector.extract_strided_slice %1 {offsets = [0, 8], sizes = [4, 1], strides = [1, 1]} : vector<4x9xf32> to vector<4x1xf32>
    %71 = vector.broadcast %70 : vector<4x1xf32> to vector<4x256xf32>
    %72 = arith.mulf %69, %71 : vector<4x256xf32>
    %73 = arith.addf %65, %72 : vector<4x256xf32>
    %74 = vector.extract_strided_slice %2 {offsets = [0, 0], sizes = [8, 1], strides = [1, 1]} : vector<8x4xf32> to vector<8x1xf32>
    %75 = vector.extract_strided_slice %73 {offsets = [0, 0], sizes = [1, 256], strides = [1, 1]} : vector<4x256xf32> to vector<1x256xf32>
    %76 = vector.broadcast %74 : vector<8x1xf32> to vector<8x256xf32>
    %77 = vector.broadcast %75 : vector<1x256xf32> to vector<8x256xf32>
    %78 = arith.mulf %76, %77 : vector<8x256xf32>
    %79 = vector.extract_strided_slice %2 {offsets = [0, 1], sizes = [8, 1], strides = [1, 1]} : vector<8x4xf32> to vector<8x1xf32>
    %80 = vector.extract_strided_slice %73 {offsets = [1, 0], sizes = [1, 256], strides = [1, 1]} : vector<4x256xf32> to vector<1x256xf32>
    %81 = vector.broadcast %79 : vector<8x1xf32> to vector<8x256xf32>
    %82 = vector.broadcast %80 : vector<1x256xf32> to vector<8x256xf32>
    %83 = arith.mulf %81, %82 : vector<8x256xf32>
    %84 = arith.addf %78, %83 : vector<8x256xf32>
    %85 = vector.extract_strided_slice %2 {offsets = [0, 2], sizes = [8, 1], strides = [1, 1]} : vector<8x4xf32> to vector<8x1xf32>
    %86 = vector.extract_strided_slice %73 {offsets = [2, 0], sizes = [1, 256], strides = [1, 1]} : vector<4x256xf32> to vector<1x256xf32>
    %87 = vector.broadcast %85 : vector<8x1xf32> to vector<8x256xf32>
    %88 = vector.broadcast %86 : vector<1x256xf32> to vector<8x256xf32>
    %89 = arith.mulf %87, %88 : vector<8x256xf32>
    %90 = arith.addf %84, %89 : vector<8x256xf32>
    %91 = vector.extract_strided_slice %2 {offsets = [0, 3], sizes = [8, 1], strides = [1, 1]} : vector<8x4xf32> to vector<8x1xf32>
    %92 = vector.extract_strided_slice %73 {offsets = [3, 0], sizes = [1, 256], strides = [1, 1]} : vector<4x256xf32> to vector<1x256xf32>
    %93 = vector.broadcast %91 : vector<8x1xf32> to vector<8x256xf32>
    %94 = vector.broadcast %92 : vector<1x256xf32> to vector<8x256xf32>
    %95 = arith.mulf %93, %94 : vector<8x256xf32>
    %96 = arith.addf %90, %95 : vector<8x256xf32>
    %97 = arith.truncf %96 : vector<8x256xf32> to vector<8x256xbf16>
    %c0_9 = arith.constant 0 : index
    %c0_10 = arith.constant 0 : index
    %c0_11 = arith.constant 0 : index
    %98 = vector.load %arg5[%c0_9, %c0_10, %c0_11] : memref<4x8x256xbf16, #tpu.memory_space<vmem>>, vector<1x8x256xbf16>
    %99 = vector.shape_cast %98 : vector<1x8x256xbf16> to vector<8x256xbf16>
    %100 = vector.shape_cast %97 : vector<8x256xbf16> to vector<1x8x256xbf16>
    tpu.vector_store %arg5[%c0_9, %c0_10, %c0_11], %100 {strides = array<i32>} : memref<4x8x256xbf16, #tpu.memory_space<vmem>>, vector<1x8x256xbf16>,
    %cst_12 = arith.constant dense<0.000000e+00> : vector<8xf32>
    %101 = vector.multi_reduction <add>, %96, %cst_12 [1] : vector<8x256xf32> to vector<8xf32>
    %102 = vector.shape_cast %101 : vector<8xf32> to vector<8x1xf32>
    %103 = arith.addf %3, %102 : vector<8x1xf32>
    %104 = arith.mulf %96, %96 : vector<8x256xf32>
    %cst_13 = arith.constant dense<0.000000e+00> : vector<8xf32>
    %105 = vector.multi_reduction <add>, %104, %cst_13 [1] : vector<8x256xf32> to vector<8xf32>
    %106 = vector.shape_cast %105 : vector<8xf32> to vector<8x1xf32>
    %107 = arith.addf %4, %106 : vector<8x1xf32>
    %c1 = arith.constant 1 : index
    %c0_14 = arith.constant 0 : index
    %c0_15 = arith.constant 0 : index
    %108 = vector.load %arg1[%c1, %c0_14, %c0_15] : memref<4x4x256xf32, #tpu.memory_space<vmem>>, vector<1x4x256xf32>
    %109 = vector.shape_cast %108 : vector<1x4x256xf32> to vector<4x256xf32>
    %110 = vector.extract_strided_slice %1 {offsets = [0, 4], sizes = [4, 1], strides = [1, 1]} : vector<4x9xf32> to vector<4x1xf32>
    %111 = vector.broadcast %110 : vector<4x1xf32> to vector<4x256xf32>
    %112 = arith.mulf %109, %111 : vector<4x256xf32>
    %c17_i32_16 = arith.constant 17 : i32
    %113 = tpu.dynamic_rotate %109 by %c17_i32_16 dim 1 : vector<4x256xf32>, i32 -> vector<4x256xf32>
    %114 = vector.extract_strided_slice %0 {offsets = [0, 0], sizes = [1, 256], strides = [1, 1]} : vector<9x256xf32> to vector<1x256xf32>
    %115 = vector.broadcast %114 : vector<1x256xf32> to vector<4x256xf32>
    %116 = arith.mulf %113, %115 : vector<4x256xf32>
    %117 = vector.extract_strided_slice %1 {offsets = [0, 0], sizes = [4, 1], strides = [1, 1]} : vector<4x9xf32> to vector<4x1xf32>
    %118 = vector.broadcast %117 : vector<4x1xf32> to vector<4x256xf32>
    %119 = arith.mulf %116, %118 : vector<4x256xf32>
    %120 = arith.addf %112, %119 : vector<4x256xf32>
    %c16_i32_17 = arith.constant 16 : i32
    %121 = tpu.dynamic_rotate %109 by %c16_i32_17 dim 1 : vector<4x256xf32>, i32 -> vector<4x256xf32>
    %122 = vector.extract_strided_slice %0 {offsets = [1, 0], sizes = [1, 256], strides = [1, 1]} : vector<9x256xf32> to vector<1x256xf32>
    %123 = vector.broadcast %122 : vector<1x256xf32> to vector<4x256xf32>
    %124 = arith.mulf %121, %123 : vector<4x256xf32>
    %125 = vector.extract_strided_slice %1 {offsets = [0, 1], sizes = [4, 1], strides = [1, 1]} : vector<4x9xf32> to vector<4x1xf32>
    %126 = vector.broadcast %125 : vector<4x1xf32> to vector<4x256xf32>
    %127 = arith.mulf %124, %126 : vector<4x256xf32>
    %128 = arith.addf %120, %127 : vector<4x256xf32>
    %c15_i32_18 = arith.constant 15 : i32
    %129 = tpu.dynamic_rotate %109 by %c15_i32_18 dim 1 : vector<4x256xf32>, i32 -> vector<4x256xf32>
    %130 = vector.extract_strided_slice %0 {offsets = [2, 0], sizes = [1, 256], strides = [1, 1]} : vector<9x256xf32> to vector<1x256xf32>
    %131 = vector.broadcast %130 : vector<1x256xf32> to vector<4x256xf32>
    %132 = arith.mulf %129, %131 : vector<4x256xf32>
    %133 = vector.extract_strided_slice %1 {offsets = [0, 2], sizes = [4, 1], strides = [1, 1]} : vector<4x9xf32> to vector<4x1xf32>
    %134 = vector.broadcast %133 : vector<4x1xf32> to vector<4x256xf32>
    %135 = arith.mulf %132, %134 : vector<4x256xf32>
    %136 = arith.addf %128, %135 : vector<4x256xf32>
    %c1_i32_19 = arith.constant 1 : i32
    %137 = tpu.dynamic_rotate %109 by %c1_i32_19 dim 1 : vector<4x256xf32>, i32 -> vector<4x256xf32>
    %138 = vector.extract_strided_slice %0 {offsets = [3, 0], sizes = [1, 256], strides = [1, 1]} : vector<9x256xf32> to vector<1x256xf32>
    %139 = vector.broadcast %138 : vector<1x256xf32> to vector<4x256xf32>
    %140 = arith.mulf %137, %139 : vector<4x256xf32>
    %141 = vector.extract_strided_slice %1 {offsets = [0, 3], sizes = [4, 1], strides = [1, 1]} : vector<4x9xf32> to vector<4x1xf32>
    %142 = vector.broadcast %141 : vector<4x1xf32> to vector<4x256xf32>
    %143 = arith.mulf %140, %142 : vector<4x256xf32>
    %144 = arith.addf %136, %143 : vector<4x256xf32>
    %c255_i32_20 = arith.constant 255 : i32
    %145 = tpu.dynamic_rotate %109 by %c255_i32_20 dim 1 : vector<4x256xf32>, i32 -> vector<4x256xf32>
    %146 = vector.extract_strided_slice %0 {offsets = [5, 0], sizes = [1, 256], strides = [1, 1]} : vector<9x256xf32> to vector<1x256xf32>
    %147 = vector.broadcast %146 : vector<1x256xf32> to vector<4x256xf32>
    %148 = arith.mulf %145, %147 : vector<4x256xf32>
    %149 = vector.extract_strided_slice %1 {offsets = [0, 5], sizes = [4, 1], strides = [1, 1]} : vector<4x9xf32> to vector<4x1xf32>
    %150 = vector.broadcast %149 : vector<4x1xf32> to vector<4x256xf32>
    %151 = arith.mulf %148, %150 : vector<4x256xf32>
    %152 = arith.addf %144, %151 : vector<4x256xf32>
    %c241_i32_21 = arith.constant 241 : i32
    %153 = tpu.dynamic_rotate %109 by %c241_i32_21 dim 1 : vector<4x256xf32>, i32 -> vector<4x256xf32>
    %154 = vector.extract_strided_slice %0 {offsets = [6, 0], sizes = [1, 256], strides = [1, 1]} : vector<9x256xf32> to vector<1x256xf32>
    %155 = vector.broadcast %154 : vector<1x256xf32> to vector<4x256xf32>
    %156 = arith.mulf %153, %155 : vector<4x256xf32>
    %157 = vector.extract_strided_slice %1 {offsets = [0, 6], sizes = [4, 1], strides = [1, 1]} : vector<4x9xf32> to vector<4x1xf32>
    %158 = vector.broadcast %157 : vector<4x1xf32> to vector<4x256xf32>
    %159 = arith.mulf %156, %158 : vector<4x256xf32>
    %160 = arith.addf %152, %159 : vector<4x256xf32>
    %c240_i32_22 = arith.constant 240 : i32
    %161 = tpu.dynamic_rotate %109 by %c240_i32_22 dim 1 : vector<4x256xf32>, i32 -> vector<4x256xf32>
    %162 = vector.extract_strided_slice %0 {offsets = [7, 0], sizes = [1, 256], strides = [1, 1]} : vector<9x256xf32> to vector<1x256xf32>
    %163 = vector.broadcast %162 : vector<1x256xf32> to vector<4x256xf32>
    %164 = arith.mulf %161, %163 : vector<4x256xf32>
    %165 = vector.extract_strided_slice %1 {offsets = [0, 7], sizes = [4, 1], strides = [1, 1]} : vector<4x9xf32> to vector<4x1xf32>
    %166 = vector.broadcast %165 : vector<4x1xf32> to vector<4x256xf32>
    %167 = arith.mulf %164, %166 : vector<4x256xf32>
    %168 = arith.addf %160, %167 : vector<4x256xf32>
    %c239_i32_23 = arith.constant 239 : i32
    %169 = tpu.dynamic_rotate %109 by %c239_i32_23 dim 1 : vector<4x256xf32>, i32 -> vector<4x256xf32>
    %170 = vector.extract_strided_slice %0 {offsets = [8, 0], sizes = [1, 256], strides = [1, 1]} : vector<9x256xf32> to vector<1x256xf32>
    %171 = vector.broadcast %170 : vector<1x256xf32> to vector<4x256xf32>
    %172 = arith.mulf %169, %171 : vector<4x256xf32>
    %173 = vector.extract_strided_slice %1 {offsets = [0, 8], sizes = [4, 1], strides = [1, 1]} : vector<4x9xf32> to vector<4x1xf32>
    %174 = vector.broadcast %173 : vector<4x1xf32> to vector<4x256xf32>
    %175 = arith.mulf %172, %174 : vector<4x256xf32>
    %176 = arith.addf %168, %175 : vector<4x256xf32>
    %177 = vector.extract_strided_slice %2 {offsets = [0, 0], sizes = [8, 1], strides = [1, 1]} : vector<8x4xf32> to vector<8x1xf32>
    %178 = vector.extract_strided_slice %176 {offsets = [0, 0], sizes = [1, 256], strides = [1, 1]} : vector<4x256xf32> to vector<1x256xf32>
    %179 = vector.broadcast %177 : vector<8x1xf32> to vector<8x256xf32>
    %180 = vector.broadcast %178 : vector<1x256xf32> to vector<8x256xf32>
    %181 = arith.mulf %179, %180 : vector<8x256xf32>
    %182 = vector.extract_strided_slice %2 {offsets = [0, 1], sizes = [8, 1], strides = [1, 1]} : vector<8x4xf32> to vector<8x1xf32>
    %183 = vector.extract_strided_slice %176 {offsets = [1, 0], sizes = [1, 256], strides = [1, 1]} : vector<4x256xf32> to vector<1x256xf32>
    %184 = vector.broadcast %182 : vector<8x1xf32> to vector<8x256xf32>
    %185 = vector.broadcast %183 : vector<1x256xf32> to vector<8x256xf32>
    %186 = arith.mulf %184, %185 : vector<8x256xf32>
    %187 = arith.addf %181, %186 : vector<8x256xf32>
    %188 = vector.extract_strided_slice %2 {offsets = [0, 2], sizes = [8, 1], strides = [1, 1]} : vector<8x4xf32> to vector<8x1xf32>
    %189 = vector.extract_strided_slice %176 {offsets = [2, 0], sizes = [1, 256], strides = [1, 1]} : vector<4x256xf32> to vector<1x256xf32>
    %190 = vector.broadcast %188 : vector<8x1xf32> to vector<8x256xf32>
    %191 = vector.broadcast %189 : vector<1x256xf32> to vector<8x256xf32>
    %192 = arith.mulf %190, %191 : vector<8x256xf32>
    %193 = arith.addf %187, %192 : vector<8x256xf32>
    %194 = vector.extract_strided_slice %2 {offsets = [0, 3], sizes = [8, 1], strides = [1, 1]} : vector<8x4xf32> to vector<8x1xf32>
    %195 = vector.extract_strided_slice %176 {offsets = [3, 0], sizes = [1, 256], strides = [1, 1]} : vector<4x256xf32> to vector<1x256xf32>
    %196 = vector.broadcast %194 : vector<8x1xf32> to vector<8x256xf32>
    %197 = vector.broadcast %195 : vector<1x256xf32> to vector<8x256xf32>
    %198 = arith.mulf %196, %197 : vector<8x256xf32>
    %199 = arith.addf %193, %198 : vector<8x256xf32>
    %200 = arith.truncf %199 : vector<8x256xf32> to vector<8x256xbf16>
    %c1_24 = arith.constant 1 : index
    %c0_25 = arith.constant 0 : index
    %c0_26 = arith.constant 0 : index
    %201 = vector.load %arg5[%c1_24, %c0_25, %c0_26] : memref<4x8x256xbf16, #tpu.memory_space<vmem>>, vector<1x8x256xbf16>
    %202 = vector.shape_cast %201 : vector<1x8x256xbf16> to vector<8x256xbf16>
    %203 = vector.shape_cast %200 : vector<8x256xbf16> to vector<1x8x256xbf16>
    tpu.vector_store %arg5[%c1_24, %c0_25, %c0_26], %203 {strides = array<i32>} : memref<4x8x256xbf16, #tpu.memory_space<vmem>>, vector<1x8x256xbf16>,
    %cst_27 = arith.constant dense<0.000000e+00> : vector<8xf32>
    %204 = vector.multi_reduction <add>, %199, %cst_27 [1] : vector<8x256xf32> to vector<8xf32>
    %205 = vector.shape_cast %204 : vector<8xf32> to vector<8x1xf32>
    %206 = arith.addf %103, %205 : vector<8x1xf32>
    %207 = arith.mulf %199, %199 : vector<8x256xf32>
    %cst_28 = arith.constant dense<0.000000e+00> : vector<8xf32>
    %208 = vector.multi_reduction <add>, %207, %cst_28 [1] : vector<8x256xf32> to vector<8xf32>
    %209 = vector.shape_cast %208 : vector<8xf32> to vector<8x1xf32>
    %210 = arith.addf %107, %209 : vector<8x1xf32>
    %c2 = arith.constant 2 : index
    %c0_29 = arith.constant 0 : index
    %c0_30 = arith.constant 0 : index
    %211 = vector.load %arg1[%c2, %c0_29, %c0_30] : memref<4x4x256xf32, #tpu.memory_space<vmem>>, vector<1x4x256xf32>
    %212 = vector.shape_cast %211 : vector<1x4x256xf32> to vector<4x256xf32>
    %213 = vector.extract_strided_slice %1 {offsets = [0, 4], sizes = [4, 1], strides = [1, 1]} : vector<4x9xf32> to vector<4x1xf32>
    %214 = vector.broadcast %213 : vector<4x1xf32> to vector<4x256xf32>
    %215 = arith.mulf %212, %214 : vector<4x256xf32>
    %c17_i32_31 = arith.constant 17 : i32
    %216 = tpu.dynamic_rotate %212 by %c17_i32_31 dim 1 : vector<4x256xf32>, i32 -> vector<4x256xf32>
    %217 = vector.extract_strided_slice %0 {offsets = [0, 0], sizes = [1, 256], strides = [1, 1]} : vector<9x256xf32> to vector<1x256xf32>
    %218 = vector.broadcast %217 : vector<1x256xf32> to vector<4x256xf32>
    %219 = arith.mulf %216, %218 : vector<4x256xf32>
    %220 = vector.extract_strided_slice %1 {offsets = [0, 0], sizes = [4, 1], strides = [1, 1]} : vector<4x9xf32> to vector<4x1xf32>
    %221 = vector.broadcast %220 : vector<4x1xf32> to vector<4x256xf32>
    %222 = arith.mulf %219, %221 : vector<4x256xf32>
    %223 = arith.addf %215, %222 : vector<4x256xf32>
    %c16_i32_32 = arith.constant 16 : i32
    %224 = tpu.dynamic_rotate %212 by %c16_i32_32 dim 1 : vector<4x256xf32>, i32 -> vector<4x256xf32>
    %225 = vector.extract_strided_slice %0 {offsets = [1, 0], sizes = [1, 256], strides = [1, 1]} : vector<9x256xf32> to vector<1x256xf32>
    %226 = vector.broadcast %225 : vector<1x256xf32> to vector<4x256xf32>
    %227 = arith.mulf %224, %226 : vector<4x256xf32>
    %228 = vector.extract_strided_slice %1 {offsets = [0, 1], sizes = [4, 1], strides = [1, 1]} : vector<4x9xf32> to vector<4x1xf32>
    %229 = vector.broadcast %228 : vector<4x1xf32> to vector<4x256xf32>
    %230 = arith.mulf %227, %229 : vector<4x256xf32>
    %231 = arith.addf %223, %230 : vector<4x256xf32>
    %c15_i32_33 = arith.constant 15 : i32
    %232 = tpu.dynamic_rotate %212 by %c15_i32_33 dim 1 : vector<4x256xf32>, i32 -> vector<4x256xf32>
    %233 = vector.extract_strided_slice %0 {offsets = [2, 0], sizes = [1, 256], strides = [1, 1]} : vector<9x256xf32> to vector<1x256xf32>
    %234 = vector.broadcast %233 : vector<1x256xf32> to vector<4x256xf32>
    %235 = arith.mulf %232, %234 : vector<4x256xf32>
    %236 = vector.extract_strided_slice %1 {offsets = [0, 2], sizes = [4, 1], strides = [1, 1]} : vector<4x9xf32> to vector<4x1xf32>
    %237 = vector.broadcast %236 : vector<4x1xf32> to vector<4x256xf32>
    %238 = arith.mulf %235, %237 : vector<4x256xf32>
    %239 = arith.addf %231, %238 : vector<4x256xf32>
    %c1_i32_34 = arith.constant 1 : i32
    %240 = tpu.dynamic_rotate %212 by %c1_i32_34 dim 1 : vector<4x256xf32>, i32 -> vector<4x256xf32>
    %241 = vector.extract_strided_slice %0 {offsets = [3, 0], sizes = [1, 256], strides = [1, 1]} : vector<9x256xf32> to vector<1x256xf32>
    %242 = vector.broadcast %241 : vector<1x256xf32> to vector<4x256xf32>
    %243 = arith.mulf %240, %242 : vector<4x256xf32>
    %244 = vector.extract_strided_slice %1 {offsets = [0, 3], sizes = [4, 1], strides = [1, 1]} : vector<4x9xf32> to vector<4x1xf32>
    %245 = vector.broadcast %244 : vector<4x1xf32> to vector<4x256xf32>
    %246 = arith.mulf %243, %245 : vector<4x256xf32>
    %247 = arith.addf %239, %246 : vector<4x256xf32>
    %c255_i32_35 = arith.constant 255 : i32
    %248 = tpu.dynamic_rotate %212 by %c255_i32_35 dim 1 : vector<4x256xf32>, i32 -> vector<4x256xf32>
    %249 = vector.extract_strided_slice %0 {offsets = [5, 0], sizes = [1, 256], strides = [1, 1]} : vector<9x256xf32> to vector<1x256xf32>
    %250 = vector.broadcast %249 : vector<1x256xf32> to vector<4x256xf32>
    %251 = arith.mulf %248, %250 : vector<4x256xf32>
    %252 = vector.extract_strided_slice %1 {offsets = [0, 5], sizes = [4, 1], strides = [1, 1]} : vector<4x9xf32> to vector<4x1xf32>
    %253 = vector.broadcast %252 : vector<4x1xf32> to vector<4x256xf32>
    %254 = arith.mulf %251, %253 : vector<4x256xf32>
    %255 = arith.addf %247, %254 : vector<4x256xf32>
    %c241_i32_36 = arith.constant 241 : i32
    %256 = tpu.dynamic_rotate %212 by %c241_i32_36 dim 1 : vector<4x256xf32>, i32 -> vector<4x256xf32>
    %257 = vector.extract_strided_slice %0 {offsets = [6, 0], sizes = [1, 256], strides = [1, 1]} : vector<9x256xf32> to vector<1x256xf32>
    %258 = vector.broadcast %257 : vector<1x256xf32> to vector<4x256xf32>
    %259 = arith.mulf %256, %258 : vector<4x256xf32>
    %260 = vector.extract_strided_slice %1 {offsets = [0, 6], sizes = [4, 1], strides = [1, 1]} : vector<4x9xf32> to vector<4x1xf32>
    %261 = vector.broadcast %260 : vector<4x1xf32> to vector<4x256xf32>
    %262 = arith.mulf %259, %261 : vector<4x256xf32>
    %263 = arith.addf %255, %262 : vector<4x256xf32>
    %c240_i32_37 = arith.constant 240 : i32
    %264 = tpu.dynamic_rotate %212 by %c240_i32_37 dim 1 : vector<4x256xf32>, i32 -> vector<4x256xf32>
    %265 = vector.extract_strided_slice %0 {offsets = [7, 0], sizes = [1, 256], strides = [1, 1]} : vector<9x256xf32> to vector<1x256xf32>
    %266 = vector.broadcast %265 : vector<1x256xf32> to vector<4x256xf32>
    %267 = arith.mulf %264, %266 : vector<4x256xf32>
    %268 = vector.extract_strided_slice %1 {offsets = [0, 7], sizes = [4, 1], strides = [1, 1]} : vector<4x9xf32> to vector<4x1xf32>
    %269 = vector.broadcast %268 : vector<4x1xf32> to vector<4x256xf32>
    %270 = arith.mulf %267, %269 : vector<4x256xf32>
    %271 = arith.addf %263, %270 : vector<4x256xf32>
    %c239_i32_38 = arith.constant 239 : i32
    %272 = tpu.dynamic_rotate %212 by %c239_i32_38 dim 1 : vector<4x256xf32>, i32 -> vector<4x256xf32>
    %273 = vector.extract_strided_slice %0 {offsets = [8, 0], sizes = [1, 256], strides = [1, 1]} : vector<9x256xf32> to vector<1x256xf32>
    %274 = vector.broadcast %273 : vector<1x256xf32> to vector<4x256xf32>
    %275 = arith.mulf %272, %274 : vector<4x256xf32>
    %276 = vector.extract_strided_slice %1 {offsets = [0, 8], sizes = [4, 1], strides = [1, 1]} : vector<4x9xf32> to vector<4x1xf32>
    %277 = vector.broadcast %276 : vector<4x1xf32> to vector<4x256xf32>
    %278 = arith.mulf %275, %277 : vector<4x256xf32>
    %279 = arith.addf %271, %278 : vector<4x256xf32>
    %280 = vector.extract_strided_slice %2 {offsets = [0, 0], sizes = [8, 1], strides = [1, 1]} : vector<8x4xf32> to vector<8x1xf32>
    %281 = vector.extract_strided_slice %279 {offsets = [0, 0], sizes = [1, 256], strides = [1, 1]} : vector<4x256xf32> to vector<1x256xf32>
    %282 = vector.broadcast %280 : vector<8x1xf32> to vector<8x256xf32>
    %283 = vector.broadcast %281 : vector<1x256xf32> to vector<8x256xf32>
    %284 = arith.mulf %282, %283 : vector<8x256xf32>
    %285 = vector.extract_strided_slice %2 {offsets = [0, 1], sizes = [8, 1], strides = [1, 1]} : vector<8x4xf32> to vector<8x1xf32>
    %286 = vector.extract_strided_slice %279 {offsets = [1, 0], sizes = [1, 256], strides = [1, 1]} : vector<4x256xf32> to vector<1x256xf32>
    %287 = vector.broadcast %285 : vector<8x1xf32> to vector<8x256xf32>
    %288 = vector.broadcast %286 : vector<1x256xf32> to vector<8x256xf32>
    %289 = arith.mulf %287, %288 : vector<8x256xf32>
    %290 = arith.addf %284, %289 : vector<8x256xf32>
    %291 = vector.extract_strided_slice %2 {offsets = [0, 2], sizes = [8, 1], strides = [1, 1]} : vector<8x4xf32> to vector<8x1xf32>
    %292 = vector.extract_strided_slice %279 {offsets = [2, 0], sizes = [1, 256], strides = [1, 1]} : vector<4x256xf32> to vector<1x256xf32>
    %293 = vector.broadcast %291 : vector<8x1xf32> to vector<8x256xf32>
    %294 = vector.broadcast %292 : vector<1x256xf32> to vector<8x256xf32>
    %295 = arith.mulf %293, %294 : vector<8x256xf32>
    %296 = arith.addf %290, %295 : vector<8x256xf32>
    %297 = vector.extract_strided_slice %2 {offsets = [0, 3], sizes = [8, 1], strides = [1, 1]} : vector<8x4xf32> to vector<8x1xf32>
    %298 = vector.extract_strided_slice %279 {offsets = [3, 0], sizes = [1, 256], strides = [1, 1]} : vector<4x256xf32> to vector<1x256xf32>
    %299 = vector.broadcast %297 : vector<8x1xf32> to vector<8x256xf32>
    %300 = vector.broadcast %298 : vector<1x256xf32> to vector<8x256xf32>
    %301 = arith.mulf %299, %300 : vector<8x256xf32>
    %302 = arith.addf %296, %301 : vector<8x256xf32>
    %303 = arith.truncf %302 : vector<8x256xf32> to vector<8x256xbf16>
    %c2_39 = arith.constant 2 : index
    %c0_40 = arith.constant 0 : index
    %c0_41 = arith.constant 0 : index
    %304 = vector.load %arg5[%c2_39, %c0_40, %c0_41] : memref<4x8x256xbf16, #tpu.memory_space<vmem>>, vector<1x8x256xbf16>
    %305 = vector.shape_cast %304 : vector<1x8x256xbf16> to vector<8x256xbf16>
    %306 = vector.shape_cast %303 : vector<8x256xbf16> to vector<1x8x256xbf16>
    tpu.vector_store %arg5[%c2_39, %c0_40, %c0_41], %306 {strides = array<i32>} : memref<4x8x256xbf16, #tpu.memory_space<vmem>>, vector<1x8x256xbf16>,
    %cst_42 = arith.constant dense<0.000000e+00> : vector<8xf32>
    %307 = vector.multi_reduction <add>, %302, %cst_42 [1] : vector<8x256xf32> to vector<8xf32>
    %308 = vector.shape_cast %307 : vector<8xf32> to vector<8x1xf32>
    %309 = arith.addf %206, %308 : vector<8x1xf32>
    %310 = arith.mulf %302, %302 : vector<8x256xf32>
    %cst_43 = arith.constant dense<0.000000e+00> : vector<8xf32>
    %311 = vector.multi_reduction <add>, %310, %cst_43 [1] : vector<8x256xf32> to vector<8xf32>
    %312 = vector.shape_cast %311 : vector<8xf32> to vector<8x1xf32>
    %313 = arith.addf %210, %312 : vector<8x1xf32>
    %c3 = arith.constant 3 : index
    %c0_44 = arith.constant 0 : index
    %c0_45 = arith.constant 0 : index
    %314 = vector.load %arg1[%c3, %c0_44, %c0_45] : memref<4x4x256xf32, #tpu.memory_space<vmem>>, vector<1x4x256xf32>
    %315 = vector.shape_cast %314 : vector<1x4x256xf32> to vector<4x256xf32>
    %316 = vector.extract_strided_slice %1 {offsets = [0, 4], sizes = [4, 1], strides = [1, 1]} : vector<4x9xf32> to vector<4x1xf32>
    %317 = vector.broadcast %316 : vector<4x1xf32> to vector<4x256xf32>
    %318 = arith.mulf %315, %317 : vector<4x256xf32>
    %c17_i32_46 = arith.constant 17 : i32
    %319 = tpu.dynamic_rotate %315 by %c17_i32_46 dim 1 : vector<4x256xf32>, i32 -> vector<4x256xf32>
    %320 = vector.extract_strided_slice %0 {offsets = [0, 0], sizes = [1, 256], strides = [1, 1]} : vector<9x256xf32> to vector<1x256xf32>
    %321 = vector.broadcast %320 : vector<1x256xf32> to vector<4x256xf32>
    %322 = arith.mulf %319, %321 : vector<4x256xf32>
    %323 = vector.extract_strided_slice %1 {offsets = [0, 0], sizes = [4, 1], strides = [1, 1]} : vector<4x9xf32> to vector<4x1xf32>
    %324 = vector.broadcast %323 : vector<4x1xf32> to vector<4x256xf32>
    %325 = arith.mulf %322, %324 : vector<4x256xf32>
    %326 = arith.addf %318, %325 : vector<4x256xf32>
    %c16_i32_47 = arith.constant 16 : i32
    %327 = tpu.dynamic_rotate %315 by %c16_i32_47 dim 1 : vector<4x256xf32>, i32 -> vector<4x256xf32>
    %328 = vector.extract_strided_slice %0 {offsets = [1, 0], sizes = [1, 256], strides = [1, 1]} : vector<9x256xf32> to vector<1x256xf32>
    %329 = vector.broadcast %328 : vector<1x256xf32> to vector<4x256xf32>
    %330 = arith.mulf %327, %329 : vector<4x256xf32>
    %331 = vector.extract_strided_slice %1 {offsets = [0, 1], sizes = [4, 1], strides = [1, 1]} : vector<4x9xf32> to vector<4x1xf32>
    %332 = vector.broadcast %331 : vector<4x1xf32> to vector<4x256xf32>
    %333 = arith.mulf %330, %332 : vector<4x256xf32>
    %334 = arith.addf %326, %333 : vector<4x256xf32>
    %c15_i32_48 = arith.constant 15 : i32
    %335 = tpu.dynamic_rotate %315 by %c15_i32_48 dim 1 : vector<4x256xf32>, i32 -> vector<4x256xf32>
    %336 = vector.extract_strided_slice %0 {offsets = [2, 0], sizes = [1, 256], strides = [1, 1]} : vector<9x256xf32> to vector<1x256xf32>
    %337 = vector.broadcast %336 : vector<1x256xf32> to vector<4x256xf32>
    %338 = arith.mulf %335, %337 : vector<4x256xf32>
    %339 = vector.extract_strided_slice %1 {offsets = [0, 2], sizes = [4, 1], strides = [1, 1]} : vector<4x9xf32> to vector<4x1xf32>
    %340 = vector.broadcast %339 : vector<4x1xf32> to vector<4x256xf32>
    %341 = arith.mulf %338, %340 : vector<4x256xf32>
    %342 = arith.addf %334, %341 : vector<4x256xf32>
    %c1_i32_49 = arith.constant 1 : i32
    %343 = tpu.dynamic_rotate %315 by %c1_i32_49 dim 1 : vector<4x256xf32>, i32 -> vector<4x256xf32>
    %344 = vector.extract_strided_slice %0 {offsets = [3, 0], sizes = [1, 256], strides = [1, 1]} : vector<9x256xf32> to vector<1x256xf32>
    %345 = vector.broadcast %344 : vector<1x256xf32> to vector<4x256xf32>
    %346 = arith.mulf %343, %345 : vector<4x256xf32>
    %347 = vector.extract_strided_slice %1 {offsets = [0, 3], sizes = [4, 1], strides = [1, 1]} : vector<4x9xf32> to vector<4x1xf32>
    %348 = vector.broadcast %347 : vector<4x1xf32> to vector<4x256xf32>
    %349 = arith.mulf %346, %348 : vector<4x256xf32>
    %350 = arith.addf %342, %349 : vector<4x256xf32>
    %c255_i32_50 = arith.constant 255 : i32
    %351 = tpu.dynamic_rotate %315 by %c255_i32_50 dim 1 : vector<4x256xf32>, i32 -> vector<4x256xf32>
    %352 = vector.extract_strided_slice %0 {offsets = [5, 0], sizes = [1, 256], strides = [1, 1]} : vector<9x256xf32> to vector<1x256xf32>
    %353 = vector.broadcast %352 : vector<1x256xf32> to vector<4x256xf32>
    %354 = arith.mulf %351, %353 : vector<4x256xf32>
    %355 = vector.extract_strided_slice %1 {offsets = [0, 5], sizes = [4, 1], strides = [1, 1]} : vector<4x9xf32> to vector<4x1xf32>
    %356 = vector.broadcast %355 : vector<4x1xf32> to vector<4x256xf32>
    %357 = arith.mulf %354, %356 : vector<4x256xf32>
    %358 = arith.addf %350, %357 : vector<4x256xf32>
    %c241_i32_51 = arith.constant 241 : i32
    %359 = tpu.dynamic_rotate %315 by %c241_i32_51 dim 1 : vector<4x256xf32>, i32 -> vector<4x256xf32>
    %360 = vector.extract_strided_slice %0 {offsets = [6, 0], sizes = [1, 256], strides = [1, 1]} : vector<9x256xf32> to vector<1x256xf32>
    %361 = vector.broadcast %360 : vector<1x256xf32> to vector<4x256xf32>
    %362 = arith.mulf %359, %361 : vector<4x256xf32>
    %363 = vector.extract_strided_slice %1 {offsets = [0, 6], sizes = [4, 1], strides = [1, 1]} : vector<4x9xf32> to vector<4x1xf32>
    %364 = vector.broadcast %363 : vector<4x1xf32> to vector<4x256xf32>
    %365 = arith.mulf %362, %364 : vector<4x256xf32>
    %366 = arith.addf %358, %365 : vector<4x256xf32>
    %c240_i32_52 = arith.constant 240 : i32
    %367 = tpu.dynamic_rotate %315 by %c240_i32_52 dim 1 : vector<4x256xf32>, i32 -> vector<4x256xf32>
    %368 = vector.extract_strided_slice %0 {offsets = [7, 0], sizes = [1, 256], strides = [1, 1]} : vector<9x256xf32> to vector<1x256xf32>
    %369 = vector.broadcast %368 : vector<1x256xf32> to vector<4x256xf32>
    %370 = arith.mulf %367, %369 : vector<4x256xf32>
    %371 = vector.extract_strided_slice %1 {offsets = [0, 7], sizes = [4, 1], strides = [1, 1]} : vector<4x9xf32> to vector<4x1xf32>
    %372 = vector.broadcast %371 : vector<4x1xf32> to vector<4x256xf32>
    %373 = arith.mulf %370, %372 : vector<4x256xf32>
    %374 = arith.addf %366, %373 : vector<4x256xf32>
    %c239_i32_53 = arith.constant 239 : i32
    %375 = tpu.dynamic_rotate %315 by %c239_i32_53 dim 1 : vector<4x256xf32>, i32 -> vector<4x256xf32>
    %376 = vector.extract_strided_slice %0 {offsets = [8, 0], sizes = [1, 256], strides = [1, 1]} : vector<9x256xf32> to vector<1x256xf32>
    %377 = vector.broadcast %376 : vector<1x256xf32> to vector<4x256xf32>
    %378 = arith.mulf %375, %377 : vector<4x256xf32>
    %379 = vector.extract_strided_slice %1 {offsets = [0, 8], sizes = [4, 1], strides = [1, 1]} : vector<4x9xf32> to vector<4x1xf32>
    %380 = vector.broadcast %379 : vector<4x1xf32> to vector<4x256xf32>
    %381 = arith.mulf %378, %380 : vector<4x256xf32>
    %382 = arith.addf %374, %381 : vector<4x256xf32>
    %383 = vector.extract_strided_slice %2 {offsets = [0, 0], sizes = [8, 1], strides = [1, 1]} : vector<8x4xf32> to vector<8x1xf32>
    %384 = vector.extract_strided_slice %382 {offsets = [0, 0], sizes = [1, 256], strides = [1, 1]} : vector<4x256xf32> to vector<1x256xf32>
    %385 = vector.broadcast %383 : vector<8x1xf32> to vector<8x256xf32>
    %386 = vector.broadcast %384 : vector<1x256xf32> to vector<8x256xf32>
    %387 = arith.mulf %385, %386 : vector<8x256xf32>
    %388 = vector.extract_strided_slice %2 {offsets = [0, 1], sizes = [8, 1], strides = [1, 1]} : vector<8x4xf32> to vector<8x1xf32>
    %389 = vector.extract_strided_slice %382 {offsets = [1, 0], sizes = [1, 256], strides = [1, 1]} : vector<4x256xf32> to vector<1x256xf32>
    %390 = vector.broadcast %388 : vector<8x1xf32> to vector<8x256xf32>
    %391 = vector.broadcast %389 : vector<1x256xf32> to vector<8x256xf32>
    %392 = arith.mulf %390, %391 : vector<8x256xf32>
    %393 = arith.addf %387, %392 : vector<8x256xf32>
    %394 = vector.extract_strided_slice %2 {offsets = [0, 2], sizes = [8, 1], strides = [1, 1]} : vector<8x4xf32> to vector<8x1xf32>
    %395 = vector.extract_strided_slice %382 {offsets = [2, 0], sizes = [1, 256], strides = [1, 1]} : vector<4x256xf32> to vector<1x256xf32>
    %396 = vector.broadcast %394 : vector<8x1xf32> to vector<8x256xf32>
    %397 = vector.broadcast %395 : vector<1x256xf32> to vector<8x256xf32>
    %398 = arith.mulf %396, %397 : vector<8x256xf32>
    %399 = arith.addf %393, %398 : vector<8x256xf32>
    %400 = vector.extract_strided_slice %2 {offsets = [0, 3], sizes = [8, 1], strides = [1, 1]} : vector<8x4xf32> to vector<8x1xf32>
    %401 = vector.extract_strided_slice %382 {offsets = [3, 0], sizes = [1, 256], strides = [1, 1]} : vector<4x256xf32> to vector<1x256xf32>
    %402 = vector.broadcast %400 : vector<8x1xf32> to vector<8x256xf32>
    %403 = vector.broadcast %401 : vector<1x256xf32> to vector<8x256xf32>
    %404 = arith.mulf %402, %403 : vector<8x256xf32>
    %405 = arith.addf %399, %404 : vector<8x256xf32>
    %406 = arith.truncf %405 : vector<8x256xf32> to vector<8x256xbf16>
    %c3_54 = arith.constant 3 : index
    %c0_55 = arith.constant 0 : index
    %c0_56 = arith.constant 0 : index
    %407 = vector.load %arg5[%c3_54, %c0_55, %c0_56] : memref<4x8x256xbf16, #tpu.memory_space<vmem>>, vector<1x8x256xbf16>
    %408 = vector.shape_cast %407 : vector<1x8x256xbf16> to vector<8x256xbf16>
    %409 = vector.shape_cast %406 : vector<8x256xbf16> to vector<1x8x256xbf16>
    tpu.vector_store %arg5[%c3_54, %c0_55, %c0_56], %409 {strides = array<i32>} : memref<4x8x256xbf16, #tpu.memory_space<vmem>>, vector<1x8x256xbf16>,
    %cst_57 = arith.constant dense<0.000000e+00> : vector<8xf32>
    %410 = vector.multi_reduction <add>, %405, %cst_57 [1] : vector<8x256xf32> to vector<8xf32>
    %411 = vector.shape_cast %410 : vector<8xf32> to vector<8x1xf32>
    %412 = arith.addf %309, %411 : vector<8x1xf32>
    %413 = arith.mulf %405, %405 : vector<8x256xf32>
    %cst_58 = arith.constant dense<0.000000e+00> : vector<8xf32>
    %414 = vector.multi_reduction <add>, %413, %cst_58 [1] : vector<8x256xf32> to vector<8xf32>
    %415 = vector.shape_cast %414 : vector<8xf32> to vector<8x1xf32>
    %416 = arith.addf %313, %415 : vector<8x1xf32>
    %417 = tpu.concatenate %412, %416 in 1 : vector<8x1xf32>, vector<8x1xf32> -> vector<8x2xf32>
    %c0_59 = arith.constant 0 : index
    %c0_60 = arith.constant 0 : index
    %c0_61 = arith.constant 0 : index
    %418 = vector.load %arg6[%c0_59, %c0_60, %c0_61] : memref<1x8x2xf32, #tpu.memory_space<vmem>>, vector<1x8x2xf32>
    %419 = vector.shape_cast %418 : vector<1x8x2xf32> to vector<8x2xf32>
    %420 = vector.shape_cast %417 : vector<8x2xf32> to vector<1x8x2xf32>
    tpu.vector_store %arg6[%c0_59, %c0_60, %c0_61], %420 {strides = array<i32>} : memref<1x8x2xf32, #tpu.memory_space<vmem>>, vector<1x8x2xf32>,
    return
  }
  func.func @transform_0(%arg0: i32) -> (i32, i32, i32) {
    %c0_i32 = arith.constant 0 : i32
    %c0_i32_0 = arith.constant 0 : i32
    %c0_i32_1 = arith.constant 0 : i32
    return %arg0, %c0_i32, %c0_i32_0 : i32, i32, i32
  }
  func.func @transform_1(%arg0: i32) -> (i32, i32) {
    %c0_i32 = arith.constant 0 : i32
    %c0_i32_0 = arith.constant 0 : i32
    %c0_i32_1 = arith.constant 0 : i32
    return %c0_i32, %c0_i32_0 : i32, i32
  }
  func.func @transform_2(%arg0: i32) -> (i32, i32) {
    %c0_i32 = arith.constant 0 : i32
    %c0_i32_0 = arith.constant 0 : i32
    %c0_i32_1 = arith.constant 0 : i32
    return %c0_i32, %c0_i32_0 : i32, i32
  }
  func.func @transform_3(%arg0: i32) -> (i32, i32) {
    %c0_i32 = arith.constant 0 : i32
    %c0_i32_0 = arith.constant 0 : i32
    %c0_i32_1 = arith.constant 0 : i32
    return %c0_i32, %c0_i32_0 : i32, i32
  }
  func.func @transform_4(%arg0: i32) -> (i32, i32, i32) {
    %c0_i32 = arith.constant 0 : i32
    %c0_i32_0 = arith.constant 0 : i32
    %c0_i32_1 = arith.constant 0 : i32
    return %arg0, %c0_i32, %c0_i32_0 : i32, i32, i32
  }
  func.func @transform_5(%arg0: i32) -> (i32, i32, i32) {
    %c0_i32 = arith.constant 0 : i32
    %c0_i32_0 = arith.constant 0 : i32
    %c0_i32_1 = arith.constant 0 : i32
    return %arg0, %c0_i32, %c0_i32_0 : i32, i32, i32
  }
}

module attributes {stable_mosaic.version = 11 : i64} {
  func.func @_bn_relu_kernel(%arg0: i32, %arg1: memref<4x8x256xbf16, #tpu.memory_space<vmem>>, %arg2: memref<8x1xf32, #tpu.memory_space<vmem>>, %arg3: memref<8x1xf32, #tpu.memory_space<vmem>>, %arg4: memref<4x8x256xf32, #tpu.memory_space<vmem>>) attributes {dimension_semantics = [#tpu.dimension_semantics<parallel>], iteration_bounds = array<i64: 2>, scalar_prefetch = 0 : i64, scratch_operands = 0 : i64, tpu.core_type = #tpu.core_type<tc>, window_params = [{transform_indices = @transform_0, window_bounds = array<i64: 4, 8, 256>}, {pipeline_mode = #tpu.pipeline_mode<synchronous>, transform_indices = @transform_1, window_bounds = array<i64: 8, 1>}, {pipeline_mode = #tpu.pipeline_mode<synchronous>, transform_indices = @transform_2, window_bounds = array<i64: 8, 1>}, {transform_indices = @transform_3, window_bounds = array<i64: 4, 8, 256>}]} {
    %c0 = arith.constant 0 : index
    %c0_0 = arith.constant 0 : index
    %0 = vector.load %arg2[%c0, %c0_0] : memref<8x1xf32, #tpu.memory_space<vmem>>, vector<8x1xf32>
    %c0_1 = arith.constant 0 : index
    %c0_2 = arith.constant 0 : index
    %1 = vector.load %arg3[%c0_1, %c0_2] : memref<8x1xf32, #tpu.memory_space<vmem>>, vector<8x1xf32>
    %c0_3 = arith.constant 0 : index
    %c0_4 = arith.constant 0 : index
    %c0_5 = arith.constant 0 : index
    %2 = vector.load %arg1[%c0_3, %c0_4, %c0_5] : memref<4x8x256xbf16, #tpu.memory_space<vmem>>, vector<1x8x256xbf16>
    %3 = vector.shape_cast %2 : vector<1x8x256xbf16> to vector<8x256xbf16>
    %4 = arith.extf %3 : vector<8x256xbf16> to vector<8x256xf32>
    %5 = vector.broadcast %0 : vector<8x1xf32> to vector<8x256xf32>
    %6 = arith.mulf %4, %5 : vector<8x256xf32>
    %7 = vector.broadcast %1 : vector<8x1xf32> to vector<8x256xf32>
    %8 = arith.addf %6, %7 : vector<8x256xf32>
    %cst = arith.constant 0.000000e+00 : f32
    %9 = vector.broadcast %cst : f32 to vector<8x256xf32>
    %10 = arith.maximumf %8, %9 : vector<8x256xf32>
    %c0_6 = arith.constant 0 : index
    %c0_7 = arith.constant 0 : index
    %c0_8 = arith.constant 0 : index
    %11 = vector.load %arg4[%c0_6, %c0_7, %c0_8] : memref<4x8x256xf32, #tpu.memory_space<vmem>>, vector<1x8x256xf32>
    %12 = vector.shape_cast %11 : vector<1x8x256xf32> to vector<8x256xf32>
    %13 = vector.shape_cast %10 : vector<8x256xf32> to vector<1x8x256xf32>
    tpu.vector_store %arg4[%c0_6, %c0_7, %c0_8], %13 {strides = array<i32>} : memref<4x8x256xf32, #tpu.memory_space<vmem>>, vector<1x8x256xf32>,
    %c1 = arith.constant 1 : index
    %c0_9 = arith.constant 0 : index
    %c0_10 = arith.constant 0 : index
    %14 = vector.load %arg1[%c1, %c0_9, %c0_10] : memref<4x8x256xbf16, #tpu.memory_space<vmem>>, vector<1x8x256xbf16>
    %15 = vector.shape_cast %14 : vector<1x8x256xbf16> to vector<8x256xbf16>
    %16 = arith.extf %15 : vector<8x256xbf16> to vector<8x256xf32>
    %17 = vector.broadcast %0 : vector<8x1xf32> to vector<8x256xf32>
    %18 = arith.mulf %16, %17 : vector<8x256xf32>
    %19 = vector.broadcast %1 : vector<8x1xf32> to vector<8x256xf32>
    %20 = arith.addf %18, %19 : vector<8x256xf32>
    %cst_11 = arith.constant 0.000000e+00 : f32
    %21 = vector.broadcast %cst_11 : f32 to vector<8x256xf32>
    %22 = arith.maximumf %20, %21 : vector<8x256xf32>
    %c1_12 = arith.constant 1 : index
    %c0_13 = arith.constant 0 : index
    %c0_14 = arith.constant 0 : index
    %23 = vector.load %arg4[%c1_12, %c0_13, %c0_14] : memref<4x8x256xf32, #tpu.memory_space<vmem>>, vector<1x8x256xf32>
    %24 = vector.shape_cast %23 : vector<1x8x256xf32> to vector<8x256xf32>
    %25 = vector.shape_cast %22 : vector<8x256xf32> to vector<1x8x256xf32>
    tpu.vector_store %arg4[%c1_12, %c0_13, %c0_14], %25 {strides = array<i32>} : memref<4x8x256xf32, #tpu.memory_space<vmem>>, vector<1x8x256xf32>,
    %c2 = arith.constant 2 : index
    %c0_15 = arith.constant 0 : index
    %c0_16 = arith.constant 0 : index
    %26 = vector.load %arg1[%c2, %c0_15, %c0_16] : memref<4x8x256xbf16, #tpu.memory_space<vmem>>, vector<1x8x256xbf16>
    %27 = vector.shape_cast %26 : vector<1x8x256xbf16> to vector<8x256xbf16>
    %28 = arith.extf %27 : vector<8x256xbf16> to vector<8x256xf32>
    %29 = vector.broadcast %0 : vector<8x1xf32> to vector<8x256xf32>
    %30 = arith.mulf %28, %29 : vector<8x256xf32>
    %31 = vector.broadcast %1 : vector<8x1xf32> to vector<8x256xf32>
    %32 = arith.addf %30, %31 : vector<8x256xf32>
    %cst_17 = arith.constant 0.000000e+00 : f32
    %33 = vector.broadcast %cst_17 : f32 to vector<8x256xf32>
    %34 = arith.maximumf %32, %33 : vector<8x256xf32>
    %c2_18 = arith.constant 2 : index
    %c0_19 = arith.constant 0 : index
    %c0_20 = arith.constant 0 : index
    %35 = vector.load %arg4[%c2_18, %c0_19, %c0_20] : memref<4x8x256xf32, #tpu.memory_space<vmem>>, vector<1x8x256xf32>
    %36 = vector.shape_cast %35 : vector<1x8x256xf32> to vector<8x256xf32>
    %37 = vector.shape_cast %34 : vector<8x256xf32> to vector<1x8x256xf32>
    tpu.vector_store %arg4[%c2_18, %c0_19, %c0_20], %37 {strides = array<i32>} : memref<4x8x256xf32, #tpu.memory_space<vmem>>, vector<1x8x256xf32>,
    %c3 = arith.constant 3 : index
    %c0_21 = arith.constant 0 : index
    %c0_22 = arith.constant 0 : index
    %38 = vector.load %arg1[%c3, %c0_21, %c0_22] : memref<4x8x256xbf16, #tpu.memory_space<vmem>>, vector<1x8x256xbf16>
    %39 = vector.shape_cast %38 : vector<1x8x256xbf16> to vector<8x256xbf16>
    %40 = arith.extf %39 : vector<8x256xbf16> to vector<8x256xf32>
    %41 = vector.broadcast %0 : vector<8x1xf32> to vector<8x256xf32>
    %42 = arith.mulf %40, %41 : vector<8x256xf32>
    %43 = vector.broadcast %1 : vector<8x1xf32> to vector<8x256xf32>
    %44 = arith.addf %42, %43 : vector<8x256xf32>
    %cst_23 = arith.constant 0.000000e+00 : f32
    %45 = vector.broadcast %cst_23 : f32 to vector<8x256xf32>
    %46 = arith.maximumf %44, %45 : vector<8x256xf32>
    %c3_24 = arith.constant 3 : index
    %c0_25 = arith.constant 0 : index
    %c0_26 = arith.constant 0 : index
    %47 = vector.load %arg4[%c3_24, %c0_25, %c0_26] : memref<4x8x256xf32, #tpu.memory_space<vmem>>, vector<1x8x256xf32>
    %48 = vector.shape_cast %47 : vector<1x8x256xf32> to vector<8x256xf32>
    %49 = vector.shape_cast %46 : vector<8x256xf32> to vector<1x8x256xf32>
    tpu.vector_store %arg4[%c3_24, %c0_25, %c0_26], %49 {strides = array<i32>} : memref<4x8x256xf32, #tpu.memory_space<vmem>>, vector<1x8x256xf32>,
    return
  }
  func.func @transform_0(%arg0: i32) -> (i32, i32, i32) {
    %c0_i32 = arith.constant 0 : i32
    %c0_i32_0 = arith.constant 0 : i32
    %c0_i32_1 = arith.constant 0 : i32
    return %arg0, %c0_i32, %c0_i32_0 : i32, i32, i32
  }
  func.func @transform_1(%arg0: i32) -> (i32, i32) {
    %c0_i32 = arith.constant 0 : i32
    %c0_i32_0 = arith.constant 0 : i32
    %c0_i32_1 = arith.constant 0 : i32
    return %c0_i32, %c0_i32_0 : i32, i32
  }
  func.func @transform_2(%arg0: i32) -> (i32, i32) {
    %c0_i32 = arith.constant 0 : i32
    %c0_i32_0 = arith.constant 0 : i32
    %c0_i32_1 = arith.constant 0 : i32
    return %c0_i32, %c0_i32_0 : i32, i32
  }
  func.func @transform_3(%arg0: i32) -> (i32, i32, i32) {
    %c0_i32 = arith.constant 0 : i32
    %c0_i32_0 = arith.constant 0 : i32
    %c0_i32_1 = arith.constant 0 : i32
    return %arg0, %c0_i32, %c0_i32_0 : i32, i32, i32
  }
}

module attributes {stable_mosaic.version = 11 : i64} {
  func.func @_stage2_kernel(%arg0: i32, %arg1: memref<4x8x256xbf16, #tpu.memory_space<vmem>>, %arg2: memref<9x256xf32, #tpu.memory_space<vmem>>, %arg3: memref<8x1xf32, #tpu.memory_space<vmem>>, %arg4: memref<8x1xf32, #tpu.memory_space<vmem>>, %arg5: memref<8x9xf32, #tpu.memory_space<vmem>>, %arg6: memref<8x8xf32, #tpu.memory_space<vmem>>, %arg7: memref<4x8x256xbf16, #tpu.memory_space<vmem>>, %arg8: memref<1x8x2xf32, #tpu.memory_space<vmem>>) attributes {dimension_semantics = [#tpu.dimension_semantics<parallel>], iteration_bounds = array<i64: 2>, scalar_prefetch = 0 : i64, scratch_operands = 0 : i64, tpu.core_type = #tpu.core_type<tc>, window_params = [{transform_indices = @transform_0, window_bounds = array<i64: 4, 8, 256>}, {pipeline_mode = #tpu.pipeline_mode<synchronous>, transform_indices = @transform_1, window_bounds = array<i64: 9, 256>}, {pipeline_mode = #tpu.pipeline_mode<synchronous>, transform_indices = @transform_2, window_bounds = array<i64: 8, 1>}, {pipeline_mode = #tpu.pipeline_mode<synchronous>, transform_indices = @transform_3, window_bounds = array<i64: 8, 1>}, {pipeline_mode = #tpu.pipeline_mode<synchronous>, transform_indices = @transform_4, window_bounds = array<i64: 8, 9>}, {pipeline_mode = #tpu.pipeline_mode<synchronous>, transform_indices = @transform_5, window_bounds = array<i64: 8, 8>}, {transform_indices = @transform_6, window_bounds = array<i64: 4, 8, 256>}, {transform_indices = @transform_7, window_bounds = array<i64: 1, 8, 2>}]} {
    %c0 = arith.constant 0 : index
    %c0_0 = arith.constant 0 : index
    %0 = vector.load %arg2[%c0, %c0_0] : memref<9x256xf32, #tpu.memory_space<vmem>>, vector<9x256xf32>
    %c0_1 = arith.constant 0 : index
    %c0_2 = arith.constant 0 : index
    %1 = vector.load %arg3[%c0_1, %c0_2] : memref<8x1xf32, #tpu.memory_space<vmem>>, vector<8x1xf32>
    %c0_3 = arith.constant 0 : index
    %c0_4 = arith.constant 0 : index
    %2 = vector.load %arg4[%c0_3, %c0_4] : memref<8x1xf32, #tpu.memory_space<vmem>>, vector<8x1xf32>
    %c0_5 = arith.constant 0 : index
    %c0_6 = arith.constant 0 : index
    %3 = vector.load %arg5[%c0_5, %c0_6] : memref<8x9xf32, #tpu.memory_space<vmem>>, vector<8x9xf32>
    %c0_7 = arith.constant 0 : index
    %c0_8 = arith.constant 0 : index
    %4 = vector.load %arg6[%c0_7, %c0_8] : memref<8x8xf32, #tpu.memory_space<vmem>>, vector<8x8xf32>
    %cst = arith.constant 0.000000e+00 : f32
    %5 = vector.broadcast %cst : f32 to vector<8x1xf32>
    %cst_9 = arith.constant 0.000000e+00 : f32
    %6 = vector.broadcast %cst_9 : f32 to vector<8x1xf32>
    %c0_10 = arith.constant 0 : index
    %c0_11 = arith.constant 0 : index
    %c0_12 = arith.constant 0 : index
    %7 = vector.load %arg1[%c0_10, %c0_11, %c0_12] : memref<4x8x256xbf16, #tpu.memory_space<vmem>>, vector<1x8x256xbf16>
    %8 = vector.shape_cast %7 : vector<1x8x256xbf16> to vector<8x256xbf16>
    %9 = arith.extf %8 : vector<8x256xbf16> to vector<8x256xf32>
    %10 = vector.broadcast %1 : vector<8x1xf32> to vector<8x256xf32>
    %11 = arith.mulf %9, %10 : vector<8x256xf32>
    %12 = vector.broadcast %2 : vector<8x1xf32> to vector<8x256xf32>
    %13 = arith.addf %11, %12 : vector<8x256xf32>
    %cst_13 = arith.constant 0.000000e+00 : f32
    %14 = vector.broadcast %cst_13 : f32 to vector<8x256xf32>
    %15 = arith.maximumf %13, %14 : vector<8x256xf32>
    %16 = vector.extract_strided_slice %3 {offsets = [0, 4], sizes = [8, 1], strides = [1, 1]} : vector<8x9xf32> to vector<8x1xf32>
    %17 = vector.broadcast %16 : vector<8x1xf32> to vector<8x256xf32>
    %18 = arith.mulf %15, %17 : vector<8x256xf32>
    %c17_i32 = arith.constant 17 : i32
    %19 = tpu.dynamic_rotate %15 by %c17_i32 dim 1 : vector<8x256xf32>, i32 -> vector<8x256xf32>
    %20 = vector.extract_strided_slice %0 {offsets = [0, 0], sizes = [1, 256], strides = [1, 1]} : vector<9x256xf32> to vector<1x256xf32>
    %21 = vector.broadcast %20 : vector<1x256xf32> to vector<8x256xf32>
    %22 = arith.mulf %19, %21 : vector<8x256xf32>
    %23 = vector.extract_strided_slice %3 {offsets = [0, 0], sizes = [8, 1], strides = [1, 1]} : vector<8x9xf32> to vector<8x1xf32>
    %24 = vector.broadcast %23 : vector<8x1xf32> to vector<8x256xf32>
    %25 = arith.mulf %22, %24 : vector<8x256xf32>
    %26 = arith.addf %18, %25 : vector<8x256xf32>
    %c16_i32 = arith.constant 16 : i32
    %27 = tpu.dynamic_rotate %15 by %c16_i32 dim 1 : vector<8x256xf32>, i32 -> vector<8x256xf32>
    %28 = vector.extract_strided_slice %0 {offsets = [1, 0], sizes = [1, 256], strides = [1, 1]} : vector<9x256xf32> to vector<1x256xf32>
    %29 = vector.broadcast %28 : vector<1x256xf32> to vector<8x256xf32>
    %30 = arith.mulf %27, %29 : vector<8x256xf32>
    %31 = vector.extract_strided_slice %3 {offsets = [0, 1], sizes = [8, 1], strides = [1, 1]} : vector<8x9xf32> to vector<8x1xf32>
    %32 = vector.broadcast %31 : vector<8x1xf32> to vector<8x256xf32>
    %33 = arith.mulf %30, %32 : vector<8x256xf32>
    %34 = arith.addf %26, %33 : vector<8x256xf32>
    %c15_i32 = arith.constant 15 : i32
    %35 = tpu.dynamic_rotate %15 by %c15_i32 dim 1 : vector<8x256xf32>, i32 -> vector<8x256xf32>
    %36 = vector.extract_strided_slice %0 {offsets = [2, 0], sizes = [1, 256], strides = [1, 1]} : vector<9x256xf32> to vector<1x256xf32>
    %37 = vector.broadcast %36 : vector<1x256xf32> to vector<8x256xf32>
    %38 = arith.mulf %35, %37 : vector<8x256xf32>
    %39 = vector.extract_strided_slice %3 {offsets = [0, 2], sizes = [8, 1], strides = [1, 1]} : vector<8x9xf32> to vector<8x1xf32>
    %40 = vector.broadcast %39 : vector<8x1xf32> to vector<8x256xf32>
    %41 = arith.mulf %38, %40 : vector<8x256xf32>
    %42 = arith.addf %34, %41 : vector<8x256xf32>
    %c1_i32 = arith.constant 1 : i32
    %43 = tpu.dynamic_rotate %15 by %c1_i32 dim 1 : vector<8x256xf32>, i32 -> vector<8x256xf32>
    %44 = vector.extract_strided_slice %0 {offsets = [3, 0], sizes = [1, 256], strides = [1, 1]} : vector<9x256xf32> to vector<1x256xf32>
    %45 = vector.broadcast %44 : vector<1x256xf32> to vector<8x256xf32>
    %46 = arith.mulf %43, %45 : vector<8x256xf32>
    %47 = vector.extract_strided_slice %3 {offsets = [0, 3], sizes = [8, 1], strides = [1, 1]} : vector<8x9xf32> to vector<8x1xf32>
    %48 = vector.broadcast %47 : vector<8x1xf32> to vector<8x256xf32>
    %49 = arith.mulf %46, %48 : vector<8x256xf32>
    %50 = arith.addf %42, %49 : vector<8x256xf32>
    %c255_i32 = arith.constant 255 : i32
    %51 = tpu.dynamic_rotate %15 by %c255_i32 dim 1 : vector<8x256xf32>, i32 -> vector<8x256xf32>
    %52 = vector.extract_strided_slice %0 {offsets = [5, 0], sizes = [1, 256], strides = [1, 1]} : vector<9x256xf32> to vector<1x256xf32>
    %53 = vector.broadcast %52 : vector<1x256xf32> to vector<8x256xf32>
    %54 = arith.mulf %51, %53 : vector<8x256xf32>
    %55 = vector.extract_strided_slice %3 {offsets = [0, 5], sizes = [8, 1], strides = [1, 1]} : vector<8x9xf32> to vector<8x1xf32>
    %56 = vector.broadcast %55 : vector<8x1xf32> to vector<8x256xf32>
    %57 = arith.mulf %54, %56 : vector<8x256xf32>
    %58 = arith.addf %50, %57 : vector<8x256xf32>
    %c241_i32 = arith.constant 241 : i32
    %59 = tpu.dynamic_rotate %15 by %c241_i32 dim 1 : vector<8x256xf32>, i32 -> vector<8x256xf32>
    %60 = vector.extract_strided_slice %0 {offsets = [6, 0], sizes = [1, 256], strides = [1, 1]} : vector<9x256xf32> to vector<1x256xf32>
    %61 = vector.broadcast %60 : vector<1x256xf32> to vector<8x256xf32>
    %62 = arith.mulf %59, %61 : vector<8x256xf32>
    %63 = vector.extract_strided_slice %3 {offsets = [0, 6], sizes = [8, 1], strides = [1, 1]} : vector<8x9xf32> to vector<8x1xf32>
    %64 = vector.broadcast %63 : vector<8x1xf32> to vector<8x256xf32>
    %65 = arith.mulf %62, %64 : vector<8x256xf32>
    %66 = arith.addf %58, %65 : vector<8x256xf32>
    %c240_i32 = arith.constant 240 : i32
    %67 = tpu.dynamic_rotate %15 by %c240_i32 dim 1 : vector<8x256xf32>, i32 -> vector<8x256xf32>
    %68 = vector.extract_strided_slice %0 {offsets = [7, 0], sizes = [1, 256], strides = [1, 1]} : vector<9x256xf32> to vector<1x256xf32>
    %69 = vector.broadcast %68 : vector<1x256xf32> to vector<8x256xf32>
    %70 = arith.mulf %67, %69 : vector<8x256xf32>
    %71 = vector.extract_strided_slice %3 {offsets = [0, 7], sizes = [8, 1], strides = [1, 1]} : vector<8x9xf32> to vector<8x1xf32>
    %72 = vector.broadcast %71 : vector<8x1xf32> to vector<8x256xf32>
    %73 = arith.mulf %70, %72 : vector<8x256xf32>
    %74 = arith.addf %66, %73 : vector<8x256xf32>
    %c239_i32 = arith.constant 239 : i32
    %75 = tpu.dynamic_rotate %15 by %c239_i32 dim 1 : vector<8x256xf32>, i32 -> vector<8x256xf32>
    %76 = vector.extract_strided_slice %0 {offsets = [8, 0], sizes = [1, 256], strides = [1, 1]} : vector<9x256xf32> to vector<1x256xf32>
    %77 = vector.broadcast %76 : vector<1x256xf32> to vector<8x256xf32>
    %78 = arith.mulf %75, %77 : vector<8x256xf32>
    %79 = vector.extract_strided_slice %3 {offsets = [0, 8], sizes = [8, 1], strides = [1, 1]} : vector<8x9xf32> to vector<8x1xf32>
    %80 = vector.broadcast %79 : vector<8x1xf32> to vector<8x256xf32>
    %81 = arith.mulf %78, %80 : vector<8x256xf32>
    %82 = arith.addf %74, %81 : vector<8x256xf32>
    %83 = vector.extract_strided_slice %4 {offsets = [0, 0], sizes = [8, 1], strides = [1, 1]} : vector<8x8xf32> to vector<8x1xf32>
    %84 = vector.extract_strided_slice %82 {offsets = [0, 0], sizes = [1, 256], strides = [1, 1]} : vector<8x256xf32> to vector<1x256xf32>
    %85 = vector.broadcast %83 : vector<8x1xf32> to vector<8x256xf32>
    %86 = vector.broadcast %84 : vector<1x256xf32> to vector<8x256xf32>
    %87 = arith.mulf %85, %86 : vector<8x256xf32>
    %88 = vector.extract_strided_slice %4 {offsets = [0, 1], sizes = [8, 1], strides = [1, 1]} : vector<8x8xf32> to vector<8x1xf32>
    %89 = vector.extract_strided_slice %82 {offsets = [1, 0], sizes = [1, 256], strides = [1, 1]} : vector<8x256xf32> to vector<1x256xf32>
    %90 = vector.broadcast %88 : vector<8x1xf32> to vector<8x256xf32>
    %91 = vector.broadcast %89 : vector<1x256xf32> to vector<8x256xf32>
    %92 = arith.mulf %90, %91 : vector<8x256xf32>
    %93 = arith.addf %87, %92 : vector<8x256xf32>
    %94 = vector.extract_strided_slice %4 {offsets = [0, 2], sizes = [8, 1], strides = [1, 1]} : vector<8x8xf32> to vector<8x1xf32>
    %95 = vector.extract_strided_slice %82 {offsets = [2, 0], sizes = [1, 256], strides = [1, 1]} : vector<8x256xf32> to vector<1x256xf32>
    %96 = vector.broadcast %94 : vector<8x1xf32> to vector<8x256xf32>
    %97 = vector.broadcast %95 : vector<1x256xf32> to vector<8x256xf32>
    %98 = arith.mulf %96, %97 : vector<8x256xf32>
    %99 = arith.addf %93, %98 : vector<8x256xf32>
    %100 = vector.extract_strided_slice %4 {offsets = [0, 3], sizes = [8, 1], strides = [1, 1]} : vector<8x8xf32> to vector<8x1xf32>
    %101 = vector.extract_strided_slice %82 {offsets = [3, 0], sizes = [1, 256], strides = [1, 1]} : vector<8x256xf32> to vector<1x256xf32>
    %102 = vector.broadcast %100 : vector<8x1xf32> to vector<8x256xf32>
    %103 = vector.broadcast %101 : vector<1x256xf32> to vector<8x256xf32>
    %104 = arith.mulf %102, %103 : vector<8x256xf32>
    %105 = arith.addf %99, %104 : vector<8x256xf32>
    %106 = vector.extract_strided_slice %4 {offsets = [0, 4], sizes = [8, 1], strides = [1, 1]} : vector<8x8xf32> to vector<8x1xf32>
    %107 = vector.extract_strided_slice %82 {offsets = [4, 0], sizes = [1, 256], strides = [1, 1]} : vector<8x256xf32> to vector<1x256xf32>
    %108 = vector.broadcast %106 : vector<8x1xf32> to vector<8x256xf32>
    %109 = vector.broadcast %107 : vector<1x256xf32> to vector<8x256xf32>
    %110 = arith.mulf %108, %109 : vector<8x256xf32>
    %111 = arith.addf %105, %110 : vector<8x256xf32>
    %112 = vector.extract_strided_slice %4 {offsets = [0, 5], sizes = [8, 1], strides = [1, 1]} : vector<8x8xf32> to vector<8x1xf32>
    %113 = vector.extract_strided_slice %82 {offsets = [5, 0], sizes = [1, 256], strides = [1, 1]} : vector<8x256xf32> to vector<1x256xf32>
    %114 = vector.broadcast %112 : vector<8x1xf32> to vector<8x256xf32>
    %115 = vector.broadcast %113 : vector<1x256xf32> to vector<8x256xf32>
    %116 = arith.mulf %114, %115 : vector<8x256xf32>
    %117 = arith.addf %111, %116 : vector<8x256xf32>
    %118 = vector.extract_strided_slice %4 {offsets = [0, 6], sizes = [8, 1], strides = [1, 1]} : vector<8x8xf32> to vector<8x1xf32>
    %119 = vector.extract_strided_slice %82 {offsets = [6, 0], sizes = [1, 256], strides = [1, 1]} : vector<8x256xf32> to vector<1x256xf32>
    %120 = vector.broadcast %118 : vector<8x1xf32> to vector<8x256xf32>
    %121 = vector.broadcast %119 : vector<1x256xf32> to vector<8x256xf32>
    %122 = arith.mulf %120, %121 : vector<8x256xf32>
    %123 = arith.addf %117, %122 : vector<8x256xf32>
    %124 = vector.extract_strided_slice %4 {offsets = [0, 7], sizes = [8, 1], strides = [1, 1]} : vector<8x8xf32> to vector<8x1xf32>
    %125 = vector.extract_strided_slice %82 {offsets = [7, 0], sizes = [1, 256], strides = [1, 1]} : vector<8x256xf32> to vector<1x256xf32>
    %126 = vector.broadcast %124 : vector<8x1xf32> to vector<8x256xf32>
    %127 = vector.broadcast %125 : vector<1x256xf32> to vector<8x256xf32>
    %128 = arith.mulf %126, %127 : vector<8x256xf32>
    %129 = arith.addf %123, %128 : vector<8x256xf32>
    %130 = arith.truncf %129 : vector<8x256xf32> to vector<8x256xbf16>
    %c0_14 = arith.constant 0 : index
    %c0_15 = arith.constant 0 : index
    %c0_16 = arith.constant 0 : index
    %131 = vector.load %arg7[%c0_14, %c0_15, %c0_16] : memref<4x8x256xbf16, #tpu.memory_space<vmem>>, vector<1x8x256xbf16>
    %132 = vector.shape_cast %131 : vector<1x8x256xbf16> to vector<8x256xbf16>
    %133 = vector.shape_cast %130 : vector<8x256xbf16> to vector<1x8x256xbf16>
    tpu.vector_store %arg7[%c0_14, %c0_15, %c0_16], %133 {strides = array<i32>} : memref<4x8x256xbf16, #tpu.memory_space<vmem>>, vector<1x8x256xbf16>,
    %cst_17 = arith.constant dense<0.000000e+00> : vector<8xf32>
    %134 = vector.multi_reduction <add>, %129, %cst_17 [1] : vector<8x256xf32> to vector<8xf32>
    %135 = vector.shape_cast %134 : vector<8xf32> to vector<8x1xf32>
    %136 = arith.addf %5, %135 : vector<8x1xf32>
    %137 = arith.mulf %129, %129 : vector<8x256xf32>
    %cst_18 = arith.constant dense<0.000000e+00> : vector<8xf32>
    %138 = vector.multi_reduction <add>, %137, %cst_18 [1] : vector<8x256xf32> to vector<8xf32>
    %139 = vector.shape_cast %138 : vector<8xf32> to vector<8x1xf32>
    %140 = arith.addf %6, %139 : vector<8x1xf32>
    %c1 = arith.constant 1 : index
    %c0_19 = arith.constant 0 : index
    %c0_20 = arith.constant 0 : index
    %141 = vector.load %arg1[%c1, %c0_19, %c0_20] : memref<4x8x256xbf16, #tpu.memory_space<vmem>>, vector<1x8x256xbf16>
    %142 = vector.shape_cast %141 : vector<1x8x256xbf16> to vector<8x256xbf16>
    %143 = arith.extf %142 : vector<8x256xbf16> to vector<8x256xf32>
    %144 = vector.broadcast %1 : vector<8x1xf32> to vector<8x256xf32>
    %145 = arith.mulf %143, %144 : vector<8x256xf32>
    %146 = vector.broadcast %2 : vector<8x1xf32> to vector<8x256xf32>
    %147 = arith.addf %145, %146 : vector<8x256xf32>
    %cst_21 = arith.constant 0.000000e+00 : f32
    %148 = vector.broadcast %cst_21 : f32 to vector<8x256xf32>
    %149 = arith.maximumf %147, %148 : vector<8x256xf32>
    %150 = vector.extract_strided_slice %3 {offsets = [0, 4], sizes = [8, 1], strides = [1, 1]} : vector<8x9xf32> to vector<8x1xf32>
    %151 = vector.broadcast %150 : vector<8x1xf32> to vector<8x256xf32>
    %152 = arith.mulf %149, %151 : vector<8x256xf32>
    %c17_i32_22 = arith.constant 17 : i32
    %153 = tpu.dynamic_rotate %149 by %c17_i32_22 dim 1 : vector<8x256xf32>, i32 -> vector<8x256xf32>
    %154 = vector.extract_strided_slice %0 {offsets = [0, 0], sizes = [1, 256], strides = [1, 1]} : vector<9x256xf32> to vector<1x256xf32>
    %155 = vector.broadcast %154 : vector<1x256xf32> to vector<8x256xf32>
    %156 = arith.mulf %153, %155 : vector<8x256xf32>
    %157 = vector.extract_strided_slice %3 {offsets = [0, 0], sizes = [8, 1], strides = [1, 1]} : vector<8x9xf32> to vector<8x1xf32>
    %158 = vector.broadcast %157 : vector<8x1xf32> to vector<8x256xf32>
    %159 = arith.mulf %156, %158 : vector<8x256xf32>
    %160 = arith.addf %152, %159 : vector<8x256xf32>
    %c16_i32_23 = arith.constant 16 : i32
    %161 = tpu.dynamic_rotate %149 by %c16_i32_23 dim 1 : vector<8x256xf32>, i32 -> vector<8x256xf32>
    %162 = vector.extract_strided_slice %0 {offsets = [1, 0], sizes = [1, 256], strides = [1, 1]} : vector<9x256xf32> to vector<1x256xf32>
    %163 = vector.broadcast %162 : vector<1x256xf32> to vector<8x256xf32>
    %164 = arith.mulf %161, %163 : vector<8x256xf32>
    %165 = vector.extract_strided_slice %3 {offsets = [0, 1], sizes = [8, 1], strides = [1, 1]} : vector<8x9xf32> to vector<8x1xf32>
    %166 = vector.broadcast %165 : vector<8x1xf32> to vector<8x256xf32>
    %167 = arith.mulf %164, %166 : vector<8x256xf32>
    %168 = arith.addf %160, %167 : vector<8x256xf32>
    %c15_i32_24 = arith.constant 15 : i32
    %169 = tpu.dynamic_rotate %149 by %c15_i32_24 dim 1 : vector<8x256xf32>, i32 -> vector<8x256xf32>
    %170 = vector.extract_strided_slice %0 {offsets = [2, 0], sizes = [1, 256], strides = [1, 1]} : vector<9x256xf32> to vector<1x256xf32>
    %171 = vector.broadcast %170 : vector<1x256xf32> to vector<8x256xf32>
    %172 = arith.mulf %169, %171 : vector<8x256xf32>
    %173 = vector.extract_strided_slice %3 {offsets = [0, 2], sizes = [8, 1], strides = [1, 1]} : vector<8x9xf32> to vector<8x1xf32>
    %174 = vector.broadcast %173 : vector<8x1xf32> to vector<8x256xf32>
    %175 = arith.mulf %172, %174 : vector<8x256xf32>
    %176 = arith.addf %168, %175 : vector<8x256xf32>
    %c1_i32_25 = arith.constant 1 : i32
    %177 = tpu.dynamic_rotate %149 by %c1_i32_25 dim 1 : vector<8x256xf32>, i32 -> vector<8x256xf32>
    %178 = vector.extract_strided_slice %0 {offsets = [3, 0], sizes = [1, 256], strides = [1, 1]} : vector<9x256xf32> to vector<1x256xf32>
    %179 = vector.broadcast %178 : vector<1x256xf32> to vector<8x256xf32>
    %180 = arith.mulf %177, %179 : vector<8x256xf32>
    %181 = vector.extract_strided_slice %3 {offsets = [0, 3], sizes = [8, 1], strides = [1, 1]} : vector<8x9xf32> to vector<8x1xf32>
    %182 = vector.broadcast %181 : vector<8x1xf32> to vector<8x256xf32>
    %183 = arith.mulf %180, %182 : vector<8x256xf32>
    %184 = arith.addf %176, %183 : vector<8x256xf32>
    %c255_i32_26 = arith.constant 255 : i32
    %185 = tpu.dynamic_rotate %149 by %c255_i32_26 dim 1 : vector<8x256xf32>, i32 -> vector<8x256xf32>
    %186 = vector.extract_strided_slice %0 {offsets = [5, 0], sizes = [1, 256], strides = [1, 1]} : vector<9x256xf32> to vector<1x256xf32>
    %187 = vector.broadcast %186 : vector<1x256xf32> to vector<8x256xf32>
    %188 = arith.mulf %185, %187 : vector<8x256xf32>
    %189 = vector.extract_strided_slice %3 {offsets = [0, 5], sizes = [8, 1], strides = [1, 1]} : vector<8x9xf32> to vector<8x1xf32>
    %190 = vector.broadcast %189 : vector<8x1xf32> to vector<8x256xf32>
    %191 = arith.mulf %188, %190 : vector<8x256xf32>
    %192 = arith.addf %184, %191 : vector<8x256xf32>
    %c241_i32_27 = arith.constant 241 : i32
    %193 = tpu.dynamic_rotate %149 by %c241_i32_27 dim 1 : vector<8x256xf32>, i32 -> vector<8x256xf32>
    %194 = vector.extract_strided_slice %0 {offsets = [6, 0], sizes = [1, 256], strides = [1, 1]} : vector<9x256xf32> to vector<1x256xf32>
    %195 = vector.broadcast %194 : vector<1x256xf32> to vector<8x256xf32>
    %196 = arith.mulf %193, %195 : vector<8x256xf32>
    %197 = vector.extract_strided_slice %3 {offsets = [0, 6], sizes = [8, 1], strides = [1, 1]} : vector<8x9xf32> to vector<8x1xf32>
    %198 = vector.broadcast %197 : vector<8x1xf32> to vector<8x256xf32>
    %199 = arith.mulf %196, %198 : vector<8x256xf32>
    %200 = arith.addf %192, %199 : vector<8x256xf32>
    %c240_i32_28 = arith.constant 240 : i32
    %201 = tpu.dynamic_rotate %149 by %c240_i32_28 dim 1 : vector<8x256xf32>, i32 -> vector<8x256xf32>
    %202 = vector.extract_strided_slice %0 {offsets = [7, 0], sizes = [1, 256], strides = [1, 1]} : vector<9x256xf32> to vector<1x256xf32>
    %203 = vector.broadcast %202 : vector<1x256xf32> to vector<8x256xf32>
    %204 = arith.mulf %201, %203 : vector<8x256xf32>
    %205 = vector.extract_strided_slice %3 {offsets = [0, 7], sizes = [8, 1], strides = [1, 1]} : vector<8x9xf32> to vector<8x1xf32>
    %206 = vector.broadcast %205 : vector<8x1xf32> to vector<8x256xf32>
    %207 = arith.mulf %204, %206 : vector<8x256xf32>
    %208 = arith.addf %200, %207 : vector<8x256xf32>
    %c239_i32_29 = arith.constant 239 : i32
    %209 = tpu.dynamic_rotate %149 by %c239_i32_29 dim 1 : vector<8x256xf32>, i32 -> vector<8x256xf32>
    %210 = vector.extract_strided_slice %0 {offsets = [8, 0], sizes = [1, 256], strides = [1, 1]} : vector<9x256xf32> to vector<1x256xf32>
    %211 = vector.broadcast %210 : vector<1x256xf32> to vector<8x256xf32>
    %212 = arith.mulf %209, %211 : vector<8x256xf32>
    %213 = vector.extract_strided_slice %3 {offsets = [0, 8], sizes = [8, 1], strides = [1, 1]} : vector<8x9xf32> to vector<8x1xf32>
    %214 = vector.broadcast %213 : vector<8x1xf32> to vector<8x256xf32>
    %215 = arith.mulf %212, %214 : vector<8x256xf32>
    %216 = arith.addf %208, %215 : vector<8x256xf32>
    %217 = vector.extract_strided_slice %4 {offsets = [0, 0], sizes = [8, 1], strides = [1, 1]} : vector<8x8xf32> to vector<8x1xf32>
    %218 = vector.extract_strided_slice %216 {offsets = [0, 0], sizes = [1, 256], strides = [1, 1]} : vector<8x256xf32> to vector<1x256xf32>
    %219 = vector.broadcast %217 : vector<8x1xf32> to vector<8x256xf32>
    %220 = vector.broadcast %218 : vector<1x256xf32> to vector<8x256xf32>
    %221 = arith.mulf %219, %220 : vector<8x256xf32>
    %222 = vector.extract_strided_slice %4 {offsets = [0, 1], sizes = [8, 1], strides = [1, 1]} : vector<8x8xf32> to vector<8x1xf32>
    %223 = vector.extract_strided_slice %216 {offsets = [1, 0], sizes = [1, 256], strides = [1, 1]} : vector<8x256xf32> to vector<1x256xf32>
    %224 = vector.broadcast %222 : vector<8x1xf32> to vector<8x256xf32>
    %225 = vector.broadcast %223 : vector<1x256xf32> to vector<8x256xf32>
    %226 = arith.mulf %224, %225 : vector<8x256xf32>
    %227 = arith.addf %221, %226 : vector<8x256xf32>
    %228 = vector.extract_strided_slice %4 {offsets = [0, 2], sizes = [8, 1], strides = [1, 1]} : vector<8x8xf32> to vector<8x1xf32>
    %229 = vector.extract_strided_slice %216 {offsets = [2, 0], sizes = [1, 256], strides = [1, 1]} : vector<8x256xf32> to vector<1x256xf32>
    %230 = vector.broadcast %228 : vector<8x1xf32> to vector<8x256xf32>
    %231 = vector.broadcast %229 : vector<1x256xf32> to vector<8x256xf32>
    %232 = arith.mulf %230, %231 : vector<8x256xf32>
    %233 = arith.addf %227, %232 : vector<8x256xf32>
    %234 = vector.extract_strided_slice %4 {offsets = [0, 3], sizes = [8, 1], strides = [1, 1]} : vector<8x8xf32> to vector<8x1xf32>
    %235 = vector.extract_strided_slice %216 {offsets = [3, 0], sizes = [1, 256], strides = [1, 1]} : vector<8x256xf32> to vector<1x256xf32>
    %236 = vector.broadcast %234 : vector<8x1xf32> to vector<8x256xf32>
    %237 = vector.broadcast %235 : vector<1x256xf32> to vector<8x256xf32>
    %238 = arith.mulf %236, %237 : vector<8x256xf32>
    %239 = arith.addf %233, %238 : vector<8x256xf32>
    %240 = vector.extract_strided_slice %4 {offsets = [0, 4], sizes = [8, 1], strides = [1, 1]} : vector<8x8xf32> to vector<8x1xf32>
    %241 = vector.extract_strided_slice %216 {offsets = [4, 0], sizes = [1, 256], strides = [1, 1]} : vector<8x256xf32> to vector<1x256xf32>
    %242 = vector.broadcast %240 : vector<8x1xf32> to vector<8x256xf32>
    %243 = vector.broadcast %241 : vector<1x256xf32> to vector<8x256xf32>
    %244 = arith.mulf %242, %243 : vector<8x256xf32>
    %245 = arith.addf %239, %244 : vector<8x256xf32>
    %246 = vector.extract_strided_slice %4 {offsets = [0, 5], sizes = [8, 1], strides = [1, 1]} : vector<8x8xf32> to vector<8x1xf32>
    %247 = vector.extract_strided_slice %216 {offsets = [5, 0], sizes = [1, 256], strides = [1, 1]} : vector<8x256xf32> to vector<1x256xf32>
    %248 = vector.broadcast %246 : vector<8x1xf32> to vector<8x256xf32>
    %249 = vector.broadcast %247 : vector<1x256xf32> to vector<8x256xf32>
    %250 = arith.mulf %248, %249 : vector<8x256xf32>
    %251 = arith.addf %245, %250 : vector<8x256xf32>
    %252 = vector.extract_strided_slice %4 {offsets = [0, 6], sizes = [8, 1], strides = [1, 1]} : vector<8x8xf32> to vector<8x1xf32>
    %253 = vector.extract_strided_slice %216 {offsets = [6, 0], sizes = [1, 256], strides = [1, 1]} : vector<8x256xf32> to vector<1x256xf32>
    %254 = vector.broadcast %252 : vector<8x1xf32> to vector<8x256xf32>
    %255 = vector.broadcast %253 : vector<1x256xf32> to vector<8x256xf32>
    %256 = arith.mulf %254, %255 : vector<8x256xf32>
    %257 = arith.addf %251, %256 : vector<8x256xf32>
    %258 = vector.extract_strided_slice %4 {offsets = [0, 7], sizes = [8, 1], strides = [1, 1]} : vector<8x8xf32> to vector<8x1xf32>
    %259 = vector.extract_strided_slice %216 {offsets = [7, 0], sizes = [1, 256], strides = [1, 1]} : vector<8x256xf32> to vector<1x256xf32>
    %260 = vector.broadcast %258 : vector<8x1xf32> to vector<8x256xf32>
    %261 = vector.broadcast %259 : vector<1x256xf32> to vector<8x256xf32>
    %262 = arith.mulf %260, %261 : vector<8x256xf32>
    %263 = arith.addf %257, %262 : vector<8x256xf32>
    %264 = arith.truncf %263 : vector<8x256xf32> to vector<8x256xbf16>
    %c1_30 = arith.constant 1 : index
    %c0_31 = arith.constant 0 : index
    %c0_32 = arith.constant 0 : index
    %265 = vector.load %arg7[%c1_30, %c0_31, %c0_32] : memref<4x8x256xbf16, #tpu.memory_space<vmem>>, vector<1x8x256xbf16>
    %266 = vector.shape_cast %265 : vector<1x8x256xbf16> to vector<8x256xbf16>
    %267 = vector.shape_cast %264 : vector<8x256xbf16> to vector<1x8x256xbf16>
    tpu.vector_store %arg7[%c1_30, %c0_31, %c0_32], %267 {strides = array<i32>} : memref<4x8x256xbf16, #tpu.memory_space<vmem>>, vector<1x8x256xbf16>,
    %cst_33 = arith.constant dense<0.000000e+00> : vector<8xf32>
    %268 = vector.multi_reduction <add>, %263, %cst_33 [1] : vector<8x256xf32> to vector<8xf32>
    %269 = vector.shape_cast %268 : vector<8xf32> to vector<8x1xf32>
    %270 = arith.addf %136, %269 : vector<8x1xf32>
    %271 = arith.mulf %263, %263 : vector<8x256xf32>
    %cst_34 = arith.constant dense<0.000000e+00> : vector<8xf32>
    %272 = vector.multi_reduction <add>, %271, %cst_34 [1] : vector<8x256xf32> to vector<8xf32>
    %273 = vector.shape_cast %272 : vector<8xf32> to vector<8x1xf32>
    %274 = arith.addf %140, %273 : vector<8x1xf32>
    %c2 = arith.constant 2 : index
    %c0_35 = arith.constant 0 : index
    %c0_36 = arith.constant 0 : index
    %275 = vector.load %arg1[%c2, %c0_35, %c0_36] : memref<4x8x256xbf16, #tpu.memory_space<vmem>>, vector<1x8x256xbf16>
    %276 = vector.shape_cast %275 : vector<1x8x256xbf16> to vector<8x256xbf16>
    %277 = arith.extf %276 : vector<8x256xbf16> to vector<8x256xf32>
    %278 = vector.broadcast %1 : vector<8x1xf32> to vector<8x256xf32>
    %279 = arith.mulf %277, %278 : vector<8x256xf32>
    %280 = vector.broadcast %2 : vector<8x1xf32> to vector<8x256xf32>
    %281 = arith.addf %279, %280 : vector<8x256xf32>
    %cst_37 = arith.constant 0.000000e+00 : f32
    %282 = vector.broadcast %cst_37 : f32 to vector<8x256xf32>
    %283 = arith.maximumf %281, %282 : vector<8x256xf32>
    %284 = vector.extract_strided_slice %3 {offsets = [0, 4], sizes = [8, 1], strides = [1, 1]} : vector<8x9xf32> to vector<8x1xf32>
    %285 = vector.broadcast %284 : vector<8x1xf32> to vector<8x256xf32>
    %286 = arith.mulf %283, %285 : vector<8x256xf32>
    %c17_i32_38 = arith.constant 17 : i32
    %287 = tpu.dynamic_rotate %283 by %c17_i32_38 dim 1 : vector<8x256xf32>, i32 -> vector<8x256xf32>
    %288 = vector.extract_strided_slice %0 {offsets = [0, 0], sizes = [1, 256], strides = [1, 1]} : vector<9x256xf32> to vector<1x256xf32>
    %289 = vector.broadcast %288 : vector<1x256xf32> to vector<8x256xf32>
    %290 = arith.mulf %287, %289 : vector<8x256xf32>
    %291 = vector.extract_strided_slice %3 {offsets = [0, 0], sizes = [8, 1], strides = [1, 1]} : vector<8x9xf32> to vector<8x1xf32>
    %292 = vector.broadcast %291 : vector<8x1xf32> to vector<8x256xf32>
    %293 = arith.mulf %290, %292 : vector<8x256xf32>
    %294 = arith.addf %286, %293 : vector<8x256xf32>
    %c16_i32_39 = arith.constant 16 : i32
    %295 = tpu.dynamic_rotate %283 by %c16_i32_39 dim 1 : vector<8x256xf32>, i32 -> vector<8x256xf32>
    %296 = vector.extract_strided_slice %0 {offsets = [1, 0], sizes = [1, 256], strides = [1, 1]} : vector<9x256xf32> to vector<1x256xf32>
    %297 = vector.broadcast %296 : vector<1x256xf32> to vector<8x256xf32>
    %298 = arith.mulf %295, %297 : vector<8x256xf32>
    %299 = vector.extract_strided_slice %3 {offsets = [0, 1], sizes = [8, 1], strides = [1, 1]} : vector<8x9xf32> to vector<8x1xf32>
    %300 = vector.broadcast %299 : vector<8x1xf32> to vector<8x256xf32>
    %301 = arith.mulf %298, %300 : vector<8x256xf32>
    %302 = arith.addf %294, %301 : vector<8x256xf32>
    %c15_i32_40 = arith.constant 15 : i32
    %303 = tpu.dynamic_rotate %283 by %c15_i32_40 dim 1 : vector<8x256xf32>, i32 -> vector<8x256xf32>
    %304 = vector.extract_strided_slice %0 {offsets = [2, 0], sizes = [1, 256], strides = [1, 1]} : vector<9x256xf32> to vector<1x256xf32>
    %305 = vector.broadcast %304 : vector<1x256xf32> to vector<8x256xf32>
    %306 = arith.mulf %303, %305 : vector<8x256xf32>
    %307 = vector.extract_strided_slice %3 {offsets = [0, 2], sizes = [8, 1], strides = [1, 1]} : vector<8x9xf32> to vector<8x1xf32>
    %308 = vector.broadcast %307 : vector<8x1xf32> to vector<8x256xf32>
    %309 = arith.mulf %306, %308 : vector<8x256xf32>
    %310 = arith.addf %302, %309 : vector<8x256xf32>
    %c1_i32_41 = arith.constant 1 : i32
    %311 = tpu.dynamic_rotate %283 by %c1_i32_41 dim 1 : vector<8x256xf32>, i32 -> vector<8x256xf32>
    %312 = vector.extract_strided_slice %0 {offsets = [3, 0], sizes = [1, 256], strides = [1, 1]} : vector<9x256xf32> to vector<1x256xf32>
    %313 = vector.broadcast %312 : vector<1x256xf32> to vector<8x256xf32>
    %314 = arith.mulf %311, %313 : vector<8x256xf32>
    %315 = vector.extract_strided_slice %3 {offsets = [0, 3], sizes = [8, 1], strides = [1, 1]} : vector<8x9xf32> to vector<8x1xf32>
    %316 = vector.broadcast %315 : vector<8x1xf32> to vector<8x256xf32>
    %317 = arith.mulf %314, %316 : vector<8x256xf32>
    %318 = arith.addf %310, %317 : vector<8x256xf32>
    %c255_i32_42 = arith.constant 255 : i32
    %319 = tpu.dynamic_rotate %283 by %c255_i32_42 dim 1 : vector<8x256xf32>, i32 -> vector<8x256xf32>
    %320 = vector.extract_strided_slice %0 {offsets = [5, 0], sizes = [1, 256], strides = [1, 1]} : vector<9x256xf32> to vector<1x256xf32>
    %321 = vector.broadcast %320 : vector<1x256xf32> to vector<8x256xf32>
    %322 = arith.mulf %319, %321 : vector<8x256xf32>
    %323 = vector.extract_strided_slice %3 {offsets = [0, 5], sizes = [8, 1], strides = [1, 1]} : vector<8x9xf32> to vector<8x1xf32>
    %324 = vector.broadcast %323 : vector<8x1xf32> to vector<8x256xf32>
    %325 = arith.mulf %322, %324 : vector<8x256xf32>
    %326 = arith.addf %318, %325 : vector<8x256xf32>
    %c241_i32_43 = arith.constant 241 : i32
    %327 = tpu.dynamic_rotate %283 by %c241_i32_43 dim 1 : vector<8x256xf32>, i32 -> vector<8x256xf32>
    %328 = vector.extract_strided_slice %0 {offsets = [6, 0], sizes = [1, 256], strides = [1, 1]} : vector<9x256xf32> to vector<1x256xf32>
    %329 = vector.broadcast %328 : vector<1x256xf32> to vector<8x256xf32>
    %330 = arith.mulf %327, %329 : vector<8x256xf32>
    %331 = vector.extract_strided_slice %3 {offsets = [0, 6], sizes = [8, 1], strides = [1, 1]} : vector<8x9xf32> to vector<8x1xf32>
    %332 = vector.broadcast %331 : vector<8x1xf32> to vector<8x256xf32>
    %333 = arith.mulf %330, %332 : vector<8x256xf32>
    %334 = arith.addf %326, %333 : vector<8x256xf32>
    %c240_i32_44 = arith.constant 240 : i32
    %335 = tpu.dynamic_rotate %283 by %c240_i32_44 dim 1 : vector<8x256xf32>, i32 -> vector<8x256xf32>
    %336 = vector.extract_strided_slice %0 {offsets = [7, 0], sizes = [1, 256], strides = [1, 1]} : vector<9x256xf32> to vector<1x256xf32>
    %337 = vector.broadcast %336 : vector<1x256xf32> to vector<8x256xf32>
    %338 = arith.mulf %335, %337 : vector<8x256xf32>
    %339 = vector.extract_strided_slice %3 {offsets = [0, 7], sizes = [8, 1], strides = [1, 1]} : vector<8x9xf32> to vector<8x1xf32>
    %340 = vector.broadcast %339 : vector<8x1xf32> to vector<8x256xf32>
    %341 = arith.mulf %338, %340 : vector<8x256xf32>
    %342 = arith.addf %334, %341 : vector<8x256xf32>
    %c239_i32_45 = arith.constant 239 : i32
    %343 = tpu.dynamic_rotate %283 by %c239_i32_45 dim 1 : vector<8x256xf32>, i32 -> vector<8x256xf32>
    %344 = vector.extract_strided_slice %0 {offsets = [8, 0], sizes = [1, 256], strides = [1, 1]} : vector<9x256xf32> to vector<1x256xf32>
    %345 = vector.broadcast %344 : vector<1x256xf32> to vector<8x256xf32>
    %346 = arith.mulf %343, %345 : vector<8x256xf32>
    %347 = vector.extract_strided_slice %3 {offsets = [0, 8], sizes = [8, 1], strides = [1, 1]} : vector<8x9xf32> to vector<8x1xf32>
    %348 = vector.broadcast %347 : vector<8x1xf32> to vector<8x256xf32>
    %349 = arith.mulf %346, %348 : vector<8x256xf32>
    %350 = arith.addf %342, %349 : vector<8x256xf32>
    %351 = vector.extract_strided_slice %4 {offsets = [0, 0], sizes = [8, 1], strides = [1, 1]} : vector<8x8xf32> to vector<8x1xf32>
    %352 = vector.extract_strided_slice %350 {offsets = [0, 0], sizes = [1, 256], strides = [1, 1]} : vector<8x256xf32> to vector<1x256xf32>
    %353 = vector.broadcast %351 : vector<8x1xf32> to vector<8x256xf32>
    %354 = vector.broadcast %352 : vector<1x256xf32> to vector<8x256xf32>
    %355 = arith.mulf %353, %354 : vector<8x256xf32>
    %356 = vector.extract_strided_slice %4 {offsets = [0, 1], sizes = [8, 1], strides = [1, 1]} : vector<8x8xf32> to vector<8x1xf32>
    %357 = vector.extract_strided_slice %350 {offsets = [1, 0], sizes = [1, 256], strides = [1, 1]} : vector<8x256xf32> to vector<1x256xf32>
    %358 = vector.broadcast %356 : vector<8x1xf32> to vector<8x256xf32>
    %359 = vector.broadcast %357 : vector<1x256xf32> to vector<8x256xf32>
    %360 = arith.mulf %358, %359 : vector<8x256xf32>
    %361 = arith.addf %355, %360 : vector<8x256xf32>
    %362 = vector.extract_strided_slice %4 {offsets = [0, 2], sizes = [8, 1], strides = [1, 1]} : vector<8x8xf32> to vector<8x1xf32>
    %363 = vector.extract_strided_slice %350 {offsets = [2, 0], sizes = [1, 256], strides = [1, 1]} : vector<8x256xf32> to vector<1x256xf32>
    %364 = vector.broadcast %362 : vector<8x1xf32> to vector<8x256xf32>
    %365 = vector.broadcast %363 : vector<1x256xf32> to vector<8x256xf32>
    %366 = arith.mulf %364, %365 : vector<8x256xf32>
    %367 = arith.addf %361, %366 : vector<8x256xf32>
    %368 = vector.extract_strided_slice %4 {offsets = [0, 3], sizes = [8, 1], strides = [1, 1]} : vector<8x8xf32> to vector<8x1xf32>
    %369 = vector.extract_strided_slice %350 {offsets = [3, 0], sizes = [1, 256], strides = [1, 1]} : vector<8x256xf32> to vector<1x256xf32>
    %370 = vector.broadcast %368 : vector<8x1xf32> to vector<8x256xf32>
    %371 = vector.broadcast %369 : vector<1x256xf32> to vector<8x256xf32>
    %372 = arith.mulf %370, %371 : vector<8x256xf32>
    %373 = arith.addf %367, %372 : vector<8x256xf32>
    %374 = vector.extract_strided_slice %4 {offsets = [0, 4], sizes = [8, 1], strides = [1, 1]} : vector<8x8xf32> to vector<8x1xf32>
    %375 = vector.extract_strided_slice %350 {offsets = [4, 0], sizes = [1, 256], strides = [1, 1]} : vector<8x256xf32> to vector<1x256xf32>
    %376 = vector.broadcast %374 : vector<8x1xf32> to vector<8x256xf32>
    %377 = vector.broadcast %375 : vector<1x256xf32> to vector<8x256xf32>
    %378 = arith.mulf %376, %377 : vector<8x256xf32>
    %379 = arith.addf %373, %378 : vector<8x256xf32>
    %380 = vector.extract_strided_slice %4 {offsets = [0, 5], sizes = [8, 1], strides = [1, 1]} : vector<8x8xf32> to vector<8x1xf32>
    %381 = vector.extract_strided_slice %350 {offsets = [5, 0], sizes = [1, 256], strides = [1, 1]} : vector<8x256xf32> to vector<1x256xf32>
    %382 = vector.broadcast %380 : vector<8x1xf32> to vector<8x256xf32>
    %383 = vector.broadcast %381 : vector<1x256xf32> to vector<8x256xf32>
    %384 = arith.mulf %382, %383 : vector<8x256xf32>
    %385 = arith.addf %379, %384 : vector<8x256xf32>
    %386 = vector.extract_strided_slice %4 {offsets = [0, 6], sizes = [8, 1], strides = [1, 1]} : vector<8x8xf32> to vector<8x1xf32>
    %387 = vector.extract_strided_slice %350 {offsets = [6, 0], sizes = [1, 256], strides = [1, 1]} : vector<8x256xf32> to vector<1x256xf32>
    %388 = vector.broadcast %386 : vector<8x1xf32> to vector<8x256xf32>
    %389 = vector.broadcast %387 : vector<1x256xf32> to vector<8x256xf32>
    %390 = arith.mulf %388, %389 : vector<8x256xf32>
    %391 = arith.addf %385, %390 : vector<8x256xf32>
    %392 = vector.extract_strided_slice %4 {offsets = [0, 7], sizes = [8, 1], strides = [1, 1]} : vector<8x8xf32> to vector<8x1xf32>
    %393 = vector.extract_strided_slice %350 {offsets = [7, 0], sizes = [1, 256], strides = [1, 1]} : vector<8x256xf32> to vector<1x256xf32>
    %394 = vector.broadcast %392 : vector<8x1xf32> to vector<8x256xf32>
    %395 = vector.broadcast %393 : vector<1x256xf32> to vector<8x256xf32>
    %396 = arith.mulf %394, %395 : vector<8x256xf32>
    %397 = arith.addf %391, %396 : vector<8x256xf32>
    %398 = arith.truncf %397 : vector<8x256xf32> to vector<8x256xbf16>
    %c2_46 = arith.constant 2 : index
    %c0_47 = arith.constant 0 : index
    %c0_48 = arith.constant 0 : index
    %399 = vector.load %arg7[%c2_46, %c0_47, %c0_48] : memref<4x8x256xbf16, #tpu.memory_space<vmem>>, vector<1x8x256xbf16>
    %400 = vector.shape_cast %399 : vector<1x8x256xbf16> to vector<8x256xbf16>
    %401 = vector.shape_cast %398 : vector<8x256xbf16> to vector<1x8x256xbf16>
    tpu.vector_store %arg7[%c2_46, %c0_47, %c0_48], %401 {strides = array<i32>} : memref<4x8x256xbf16, #tpu.memory_space<vmem>>, vector<1x8x256xbf16>,
    %cst_49 = arith.constant dense<0.000000e+00> : vector<8xf32>
    %402 = vector.multi_reduction <add>, %397, %cst_49 [1] : vector<8x256xf32> to vector<8xf32>
    %403 = vector.shape_cast %402 : vector<8xf32> to vector<8x1xf32>
    %404 = arith.addf %270, %403 : vector<8x1xf32>
    %405 = arith.mulf %397, %397 : vector<8x256xf32>
    %cst_50 = arith.constant dense<0.000000e+00> : vector<8xf32>
    %406 = vector.multi_reduction <add>, %405, %cst_50 [1] : vector<8x256xf32> to vector<8xf32>
    %407 = vector.shape_cast %406 : vector<8xf32> to vector<8x1xf32>
    %408 = arith.addf %274, %407 : vector<8x1xf32>
    %c3 = arith.constant 3 : index
    %c0_51 = arith.constant 0 : index
    %c0_52 = arith.constant 0 : index
    %409 = vector.load %arg1[%c3, %c0_51, %c0_52] : memref<4x8x256xbf16, #tpu.memory_space<vmem>>, vector<1x8x256xbf16>
    %410 = vector.shape_cast %409 : vector<1x8x256xbf16> to vector<8x256xbf16>
    %411 = arith.extf %410 : vector<8x256xbf16> to vector<8x256xf32>
    %412 = vector.broadcast %1 : vector<8x1xf32> to vector<8x256xf32>
    %413 = arith.mulf %411, %412 : vector<8x256xf32>
    %414 = vector.broadcast %2 : vector<8x1xf32> to vector<8x256xf32>
    %415 = arith.addf %413, %414 : vector<8x256xf32>
    %cst_53 = arith.constant 0.000000e+00 : f32
    %416 = vector.broadcast %cst_53 : f32 to vector<8x256xf32>
    %417 = arith.maximumf %415, %416 : vector<8x256xf32>
    %418 = vector.extract_strided_slice %3 {offsets = [0, 4], sizes = [8, 1], strides = [1, 1]} : vector<8x9xf32> to vector<8x1xf32>
    %419 = vector.broadcast %418 : vector<8x1xf32> to vector<8x256xf32>
    %420 = arith.mulf %417, %419 : vector<8x256xf32>
    %c17_i32_54 = arith.constant 17 : i32
    %421 = tpu.dynamic_rotate %417 by %c17_i32_54 dim 1 : vector<8x256xf32>, i32 -> vector<8x256xf32>
    %422 = vector.extract_strided_slice %0 {offsets = [0, 0], sizes = [1, 256], strides = [1, 1]} : vector<9x256xf32> to vector<1x256xf32>
    %423 = vector.broadcast %422 : vector<1x256xf32> to vector<8x256xf32>
    %424 = arith.mulf %421, %423 : vector<8x256xf32>
    %425 = vector.extract_strided_slice %3 {offsets = [0, 0], sizes = [8, 1], strides = [1, 1]} : vector<8x9xf32> to vector<8x1xf32>
    %426 = vector.broadcast %425 : vector<8x1xf32> to vector<8x256xf32>
    %427 = arith.mulf %424, %426 : vector<8x256xf32>
    %428 = arith.addf %420, %427 : vector<8x256xf32>
    %c16_i32_55 = arith.constant 16 : i32
    %429 = tpu.dynamic_rotate %417 by %c16_i32_55 dim 1 : vector<8x256xf32>, i32 -> vector<8x256xf32>
    %430 = vector.extract_strided_slice %0 {offsets = [1, 0], sizes = [1, 256], strides = [1, 1]} : vector<9x256xf32> to vector<1x256xf32>
    %431 = vector.broadcast %430 : vector<1x256xf32> to vector<8x256xf32>
    %432 = arith.mulf %429, %431 : vector<8x256xf32>
    %433 = vector.extract_strided_slice %3 {offsets = [0, 1], sizes = [8, 1], strides = [1, 1]} : vector<8x9xf32> to vector<8x1xf32>
    %434 = vector.broadcast %433 : vector<8x1xf32> to vector<8x256xf32>
    %435 = arith.mulf %432, %434 : vector<8x256xf32>
    %436 = arith.addf %428, %435 : vector<8x256xf32>
    %c15_i32_56 = arith.constant 15 : i32
    %437 = tpu.dynamic_rotate %417 by %c15_i32_56 dim 1 : vector<8x256xf32>, i32 -> vector<8x256xf32>
    %438 = vector.extract_strided_slice %0 {offsets = [2, 0], sizes = [1, 256], strides = [1, 1]} : vector<9x256xf32> to vector<1x256xf32>
    %439 = vector.broadcast %438 : vector<1x256xf32> to vector<8x256xf32>
    %440 = arith.mulf %437, %439 : vector<8x256xf32>
    %441 = vector.extract_strided_slice %3 {offsets = [0, 2], sizes = [8, 1], strides = [1, 1]} : vector<8x9xf32> to vector<8x1xf32>
    %442 = vector.broadcast %441 : vector<8x1xf32> to vector<8x256xf32>
    %443 = arith.mulf %440, %442 : vector<8x256xf32>
    %444 = arith.addf %436, %443 : vector<8x256xf32>
    %c1_i32_57 = arith.constant 1 : i32
    %445 = tpu.dynamic_rotate %417 by %c1_i32_57 dim 1 : vector<8x256xf32>, i32 -> vector<8x256xf32>
    %446 = vector.extract_strided_slice %0 {offsets = [3, 0], sizes = [1, 256], strides = [1, 1]} : vector<9x256xf32> to vector<1x256xf32>
    %447 = vector.broadcast %446 : vector<1x256xf32> to vector<8x256xf32>
    %448 = arith.mulf %445, %447 : vector<8x256xf32>
    %449 = vector.extract_strided_slice %3 {offsets = [0, 3], sizes = [8, 1], strides = [1, 1]} : vector<8x9xf32> to vector<8x1xf32>
    %450 = vector.broadcast %449 : vector<8x1xf32> to vector<8x256xf32>
    %451 = arith.mulf %448, %450 : vector<8x256xf32>
    %452 = arith.addf %444, %451 : vector<8x256xf32>
    %c255_i32_58 = arith.constant 255 : i32
    %453 = tpu.dynamic_rotate %417 by %c255_i32_58 dim 1 : vector<8x256xf32>, i32 -> vector<8x256xf32>
    %454 = vector.extract_strided_slice %0 {offsets = [5, 0], sizes = [1, 256], strides = [1, 1]} : vector<9x256xf32> to vector<1x256xf32>
    %455 = vector.broadcast %454 : vector<1x256xf32> to vector<8x256xf32>
    %456 = arith.mulf %453, %455 : vector<8x256xf32>
    %457 = vector.extract_strided_slice %3 {offsets = [0, 5], sizes = [8, 1], strides = [1, 1]} : vector<8x9xf32> to vector<8x1xf32>
    %458 = vector.broadcast %457 : vector<8x1xf32> to vector<8x256xf32>
    %459 = arith.mulf %456, %458 : vector<8x256xf32>
    %460 = arith.addf %452, %459 : vector<8x256xf32>
    %c241_i32_59 = arith.constant 241 : i32
    %461 = tpu.dynamic_rotate %417 by %c241_i32_59 dim 1 : vector<8x256xf32>, i32 -> vector<8x256xf32>
    %462 = vector.extract_strided_slice %0 {offsets = [6, 0], sizes = [1, 256], strides = [1, 1]} : vector<9x256xf32> to vector<1x256xf32>
    %463 = vector.broadcast %462 : vector<1x256xf32> to vector<8x256xf32>
    %464 = arith.mulf %461, %463 : vector<8x256xf32>
    %465 = vector.extract_strided_slice %3 {offsets = [0, 6], sizes = [8, 1], strides = [1, 1]} : vector<8x9xf32> to vector<8x1xf32>
    %466 = vector.broadcast %465 : vector<8x1xf32> to vector<8x256xf32>
    %467 = arith.mulf %464, %466 : vector<8x256xf32>
    %468 = arith.addf %460, %467 : vector<8x256xf32>
    %c240_i32_60 = arith.constant 240 : i32
    %469 = tpu.dynamic_rotate %417 by %c240_i32_60 dim 1 : vector<8x256xf32>, i32 -> vector<8x256xf32>
    %470 = vector.extract_strided_slice %0 {offsets = [7, 0], sizes = [1, 256], strides = [1, 1]} : vector<9x256xf32> to vector<1x256xf32>
    %471 = vector.broadcast %470 : vector<1x256xf32> to vector<8x256xf32>
    %472 = arith.mulf %469, %471 : vector<8x256xf32>
    %473 = vector.extract_strided_slice %3 {offsets = [0, 7], sizes = [8, 1], strides = [1, 1]} : vector<8x9xf32> to vector<8x1xf32>
    %474 = vector.broadcast %473 : vector<8x1xf32> to vector<8x256xf32>
    %475 = arith.mulf %472, %474 : vector<8x256xf32>
    %476 = arith.addf %468, %475 : vector<8x256xf32>
    %c239_i32_61 = arith.constant 239 : i32
    %477 = tpu.dynamic_rotate %417 by %c239_i32_61 dim 1 : vector<8x256xf32>, i32 -> vector<8x256xf32>
    %478 = vector.extract_strided_slice %0 {offsets = [8, 0], sizes = [1, 256], strides = [1, 1]} : vector<9x256xf32> to vector<1x256xf32>
    %479 = vector.broadcast %478 : vector<1x256xf32> to vector<8x256xf32>
    %480 = arith.mulf %477, %479 : vector<8x256xf32>
    %481 = vector.extract_strided_slice %3 {offsets = [0, 8], sizes = [8, 1], strides = [1, 1]} : vector<8x9xf32> to vector<8x1xf32>
    %482 = vector.broadcast %481 : vector<8x1xf32> to vector<8x256xf32>
    %483 = arith.mulf %480, %482 : vector<8x256xf32>
    %484 = arith.addf %476, %483 : vector<8x256xf32>
    %485 = vector.extract_strided_slice %4 {offsets = [0, 0], sizes = [8, 1], strides = [1, 1]} : vector<8x8xf32> to vector<8x1xf32>
    %486 = vector.extract_strided_slice %484 {offsets = [0, 0], sizes = [1, 256], strides = [1, 1]} : vector<8x256xf32> to vector<1x256xf32>
    %487 = vector.broadcast %485 : vector<8x1xf32> to vector<8x256xf32>
    %488 = vector.broadcast %486 : vector<1x256xf32> to vector<8x256xf32>
    %489 = arith.mulf %487, %488 : vector<8x256xf32>
    %490 = vector.extract_strided_slice %4 {offsets = [0, 1], sizes = [8, 1], strides = [1, 1]} : vector<8x8xf32> to vector<8x1xf32>
    %491 = vector.extract_strided_slice %484 {offsets = [1, 0], sizes = [1, 256], strides = [1, 1]} : vector<8x256xf32> to vector<1x256xf32>
    %492 = vector.broadcast %490 : vector<8x1xf32> to vector<8x256xf32>
    %493 = vector.broadcast %491 : vector<1x256xf32> to vector<8x256xf32>
    %494 = arith.mulf %492, %493 : vector<8x256xf32>
    %495 = arith.addf %489, %494 : vector<8x256xf32>
    %496 = vector.extract_strided_slice %4 {offsets = [0, 2], sizes = [8, 1], strides = [1, 1]} : vector<8x8xf32> to vector<8x1xf32>
    %497 = vector.extract_strided_slice %484 {offsets = [2, 0], sizes = [1, 256], strides = [1, 1]} : vector<8x256xf32> to vector<1x256xf32>
    %498 = vector.broadcast %496 : vector<8x1xf32> to vector<8x256xf32>
    %499 = vector.broadcast %497 : vector<1x256xf32> to vector<8x256xf32>
    %500 = arith.mulf %498, %499 : vector<8x256xf32>
    %501 = arith.addf %495, %500 : vector<8x256xf32>
    %502 = vector.extract_strided_slice %4 {offsets = [0, 3], sizes = [8, 1], strides = [1, 1]} : vector<8x8xf32> to vector<8x1xf32>
    %503 = vector.extract_strided_slice %484 {offsets = [3, 0], sizes = [1, 256], strides = [1, 1]} : vector<8x256xf32> to vector<1x256xf32>
    %504 = vector.broadcast %502 : vector<8x1xf32> to vector<8x256xf32>
    %505 = vector.broadcast %503 : vector<1x256xf32> to vector<8x256xf32>
    %506 = arith.mulf %504, %505 : vector<8x256xf32>
    %507 = arith.addf %501, %506 : vector<8x256xf32>
    %508 = vector.extract_strided_slice %4 {offsets = [0, 4], sizes = [8, 1], strides = [1, 1]} : vector<8x8xf32> to vector<8x1xf32>
    %509 = vector.extract_strided_slice %484 {offsets = [4, 0], sizes = [1, 256], strides = [1, 1]} : vector<8x256xf32> to vector<1x256xf32>
    %510 = vector.broadcast %508 : vector<8x1xf32> to vector<8x256xf32>
    %511 = vector.broadcast %509 : vector<1x256xf32> to vector<8x256xf32>
    %512 = arith.mulf %510, %511 : vector<8x256xf32>
    %513 = arith.addf %507, %512 : vector<8x256xf32>
    %514 = vector.extract_strided_slice %4 {offsets = [0, 5], sizes = [8, 1], strides = [1, 1]} : vector<8x8xf32> to vector<8x1xf32>
    %515 = vector.extract_strided_slice %484 {offsets = [5, 0], sizes = [1, 256], strides = [1, 1]} : vector<8x256xf32> to vector<1x256xf32>
    %516 = vector.broadcast %514 : vector<8x1xf32> to vector<8x256xf32>
    %517 = vector.broadcast %515 : vector<1x256xf32> to vector<8x256xf32>
    %518 = arith.mulf %516, %517 : vector<8x256xf32>
    %519 = arith.addf %513, %518 : vector<8x256xf32>
    %520 = vector.extract_strided_slice %4 {offsets = [0, 6], sizes = [8, 1], strides = [1, 1]} : vector<8x8xf32> to vector<8x1xf32>
    %521 = vector.extract_strided_slice %484 {offsets = [6, 0], sizes = [1, 256], strides = [1, 1]} : vector<8x256xf32> to vector<1x256xf32>
    %522 = vector.broadcast %520 : vector<8x1xf32> to vector<8x256xf32>
    %523 = vector.broadcast %521 : vector<1x256xf32> to vector<8x256xf32>
    %524 = arith.mulf %522, %523 : vector<8x256xf32>
    %525 = arith.addf %519, %524 : vector<8x256xf32>
    %526 = vector.extract_strided_slice %4 {offsets = [0, 7], sizes = [8, 1], strides = [1, 1]} : vector<8x8xf32> to vector<8x1xf32>
    %527 = vector.extract_strided_slice %484 {offsets = [7, 0], sizes = [1, 256], strides = [1, 1]} : vector<8x256xf32> to vector<1x256xf32>
    %528 = vector.broadcast %526 : vector<8x1xf32> to vector<8x256xf32>
    %529 = vector.broadcast %527 : vector<1x256xf32> to vector<8x256xf32>
    %530 = arith.mulf %528, %529 : vector<8x256xf32>
    %531 = arith.addf %525, %530 : vector<8x256xf32>
    %532 = arith.truncf %531 : vector<8x256xf32> to vector<8x256xbf16>
    %c3_62 = arith.constant 3 : index
    %c0_63 = arith.constant 0 : index
    %c0_64 = arith.constant 0 : index
    %533 = vector.load %arg7[%c3_62, %c0_63, %c0_64] : memref<4x8x256xbf16, #tpu.memory_space<vmem>>, vector<1x8x256xbf16>
    %534 = vector.shape_cast %533 : vector<1x8x256xbf16> to vector<8x256xbf16>
    %535 = vector.shape_cast %532 : vector<8x256xbf16> to vector<1x8x256xbf16>
    tpu.vector_store %arg7[%c3_62, %c0_63, %c0_64], %535 {strides = array<i32>} : memref<4x8x256xbf16, #tpu.memory_space<vmem>>, vector<1x8x256xbf16>,
    %cst_65 = arith.constant dense<0.000000e+00> : vector<8xf32>
    %536 = vector.multi_reduction <add>, %531, %cst_65 [1] : vector<8x256xf32> to vector<8xf32>
    %537 = vector.shape_cast %536 : vector<8xf32> to vector<8x1xf32>
    %538 = arith.addf %404, %537 : vector<8x1xf32>
    %539 = arith.mulf %531, %531 : vector<8x256xf32>
    %cst_66 = arith.constant dense<0.000000e+00> : vector<8xf32>
    %540 = vector.multi_reduction <add>, %539, %cst_66 [1] : vector<8x256xf32> to vector<8xf32>
    %541 = vector.shape_cast %540 : vector<8xf32> to vector<8x1xf32>
    %542 = arith.addf %408, %541 : vector<8x1xf32>
    %543 = tpu.concatenate %538, %542 in 1 : vector<8x1xf32>, vector<8x1xf32> -> vector<8x2xf32>
    %c0_67 = arith.constant 0 : index
    %c0_68 = arith.constant 0 : index
    %c0_69 = arith.constant 0 : index
    %544 = vector.load %arg8[%c0_67, %c0_68, %c0_69] : memref<1x8x2xf32, #tpu.memory_space<vmem>>, vector<1x8x2xf32>
    %545 = vector.shape_cast %544 : vector<1x8x2xf32> to vector<8x2xf32>
    %546 = vector.shape_cast %543 : vector<8x2xf32> to vector<1x8x2xf32>
    tpu.vector_store %arg8[%c0_67, %c0_68, %c0_69], %546 {strides = array<i32>} : memref<1x8x2xf32, #tpu.memory_space<vmem>>, vector<1x8x2xf32>,
    return
  }
  func.func @transform_0(%arg0: i32) -> (i32, i32, i32) {
    %c0_i32 = arith.constant 0 : i32
    %c0_i32_0 = arith.constant 0 : i32
    %c0_i32_1 = arith.constant 0 : i32
    return %arg0, %c0_i32, %c0_i32_0 : i32, i32, i32
  }
  func.func @transform_1(%arg0: i32) -> (i32, i32) {
    %c0_i32 = arith.constant 0 : i32
    %c0_i32_0 = arith.constant 0 : i32
    %c0_i32_1 = arith.constant 0 : i32
    return %c0_i32, %c0_i32_0 : i32, i32
  }
  func.func @transform_2(%arg0: i32) -> (i32, i32) {
    %c0_i32 = arith.constant 0 : i32
    %c0_i32_0 = arith.constant 0 : i32
    %c0_i32_1 = arith.constant 0 : i32
    return %c0_i32, %c0_i32_0 : i32, i32
  }
  func.func @transform_3(%arg0: i32) -> (i32, i32) {
    %c0_i32 = arith.constant 0 : i32
    %c0_i32_0 = arith.constant 0 : i32
    %c0_i32_1 = arith.constant 0 : i32
    return %c0_i32, %c0_i32_0 : i32, i32
  }
  func.func @transform_4(%arg0: i32) -> (i32, i32) {
    %c0_i32 = arith.constant 0 : i32
    %c0_i32_0 = arith.constant 0 : i32
    %c0_i32_1 = arith.constant 0 : i32
    return %c0_i32, %c0_i32_0 : i32, i32
  }
  func.func @transform_5(%arg0: i32) -> (i32, i32) {
    %c0_i32 = arith.constant 0 : i32
    %c0_i32_0 = arith.constant 0 : i32
    %c0_i32_1 = arith.constant 0 : i32
    return %c0_i32, %c0_i32_0 : i32, i32
  }
  func.func @transform_6(%arg0: i32) -> (i32, i32, i32) {
    %c0_i32 = arith.constant 0 : i32
    %c0_i32_0 = arith.constant 0 : i32
    %c0_i32_1 = arith.constant 0 : i32
    return %arg0, %c0_i32, %c0_i32_0 : i32, i32, i32
  }
  func.func @transform_7(%arg0: i32) -> (i32, i32, i32) {
    %c0_i32 = arith.constant 0 : i32
    %c0_i32_0 = arith.constant 0 : i32
    %c0_i32_1 = arith.constant 0 : i32
    return %arg0, %c0_i32, %c0_i32_0 : i32, i32, i32
  }
}

</mosaic_0001>

<llo_original>
// kernel: _lambda_.5
$region0: #{_lambda_.5}
  #allocation0 [shape = 'u32[]', space=smem, size = 0x4, offset = 0x4, fixed_abs, tag = 'smem constant byte address 0x4 - core index']
  #allocation1 [shape = 'u32[144,128]{1,0:T(1,128)}', space=vmem, size = 0x12000, scoped, tag = 'internal scratch']
  %s0 = inlined_call_operand.vmem [shape: bf16[8,8,256], index: 0, kind: input, shape index: {}]
  %s1 = inlined_call_operand.vmem [shape: f32[8,1], index: 1, kind: input, shape index: {}]
  %s2 = inlined_call_operand.vmem [shape: f32[8,1], index: 2, kind: input, shape index: {}]
  %s3 = inlined_call_operand.vmem [shape: f32[8,8,256], index: 3, kind: output, shape index: {}]
  %s4 = sld [smem:[#allocation0]]
  $region45: #{_lambda_.5} parent=0
    _
  %s6 = ssub.s32 1, %s4
  %s7 = scalar_select 0, %s6, %s4
  loop: start=0, step=1, limit=4
  $region2: #{_lambda_.5} parent=0 // loop_pre_header
    _
  $region3: #{_lambda_.5} parent=0 // loop_header
    %s9 = sphi 0, %s13
    %p10 = scmp.ge.s32.totalorder %s9, 4
    %s19 = sphi 0, %s21
    %s22 = sphi 0, %s19
    %s23 = sphi 0, %s22
    %s39 = sphi 0, %s23
    %s43 = sphi 0, %s43
    %s45 = sphi 0, %s43
    %s46 = sphi 0, %s45
    %s60 = sphi 0, %s46
    %s64 = sphi 0, %s64
    %s66 = sphi 0, %s64
    %s67 = sphi 0, %s66
    %s81 = sphi 0, %s67
    %s87 = sphi 0, %s89
    %s90 = sphi 0, %s87
    %s91 = sphi 0, %s90
    %s107 = sphi 0, %s91
  $region4: #{_lambda_.5} parent=0 // loop_header_branch
    %12 = sbr.rel (%p10) target = $region8
  $region5: #{_lambda_.5} parent=0 // loop_body
    %s14 = ssub.s32 %s9, 1
    %s15 = ssub.s32 %s9, 2
    %s16 = sadd.s32 %s9, 1
    %s17 = ssub.s32 %s9, %s16
    %p18 = scmp.eq.s32.totalorder %s17, 0
    %s20 = sadd.s32 %s19, 1
    %s21 = scalar_select %p18, %s19, %s20
    %p24 = pneg %p18
    %p25 = scmp.eq.s32.totalorder %s9, 1
    %p26 = por %p24, %p25
    %p27 = scmp.ne.s32.totalorder %s19, %s22
    %p28 = scmp.eq.s32.totalorder %s9, 0
    %p29 = por %p27, %p28
    %p30 = scmp.ne.s32.totalorder %s19, %s22
    %p31 = scmp.eq.s32.totalorder %s14, 1
    %p32 = por %p30, %p31
    %p33 = scmp.ne.s32.totalorder %s22, %s23
    %p34 = scmp.eq.s32.totalorder %s14, 0
    %p35 = por %p33, %p34
    %p36 = scmp.ne.s32.totalorder %s22, %s23
    %p37 = scmp.eq.s32.totalorder %s15, 1
    %p38 = por %p36, %p37
    %p40 = scmp.ne.s32.totalorder %s23, %s39
    %p41 = scmp.eq.s32.totalorder %s15, 0
    %p42 = por %p40, %p41
    %s44 = sadd.s32 %s43, 1
    %p47 = scmp.eq.s32.totalorder %s9, 1
    %p48 = scmp.ne.s32.totalorder %s43, %s45
    %p49 = scmp.eq.s32.totalorder %s9, 0
    %p50 = por %p48, %p49
    %p51 = scmp.ne.s32.totalorder %s43, %s45
    %p52 = scmp.eq.s32.totalorder %s14, 1
    %p53 = por %p51, %p52
    %p54 = scmp.ne.s32.totalorder %s45, %s46
    %p55 = scmp.eq.s32.totalorder %s14, 0
    %p56 = por %p54, %p55
    %p57 = scmp.ne.s32.totalorder %s45, %s46
    %p58 = scmp.eq.s32.totalorder %s15, 1
    %p59 = por %p57, %p58
    %p61 = scmp.ne.s32.totalorder %s46, %s60
    %p62 = scmp.eq.s32.totalorder %s15, 0
    %p63 = por %p61, %p62
    %s65 = sadd.s32 %s64, 1
    %p68 = scmp.eq.s32.totalorder %s9, 1
    %p69 = scmp.ne.s32.totalorder %s64, %s66
    %p70 = scmp.eq.s32.totalorder %s9, 0
    %p71 = por %p69, %p70
    %p72 = scmp.ne.s32.totalorder %s64, %s66
    %p73 = scmp.eq.s32.totalorder %s14, 1
    %p74 = por %p72, %p73
    %p75 = scmp.ne.s32.totalorder %s66, %s67
    %p76 = scmp.eq.s32.totalorder %s14, 0
    %p77 = por %p75, %p76
    %p78 = scmp.ne.s32.totalorder %s66, %s67
    %p79 = scmp.eq.s32.totalorder %s15, 1
    %p80 = por %p78, %p79
    %p82 = scmp.ne.s32.totalorder %s67, %s81
    %p83 = scmp.eq.s32.totalorder %s15, 0
    %p84 = por %p82, %p83
    %s85 = ssub.s32 %s9, %s16
    %p86 = scmp.eq.s32.totalorder %s85, 0
    %s88 = sadd.s32 %s87, 1
    %s89 = scalar_select %p86, %s87, %s88
    %p92 = pneg %p86
    %p93 = scmp.eq.s32.totalorder %s9, 1
    %p94 = por %p92, %p93
    %p95 = scmp.ne.s32.totalorder %s87, %s90
    %p96 = scmp.eq.s32.totalorder %s9, 0
    %p97 = por %p95, %p96
    %p98 = scmp.ne.s32.totalorder %s87, %s90
    %p99 = scmp.eq.s32.totalorder %s14, 1
    %p100 = por %p98, %p99
    %p101 = scmp.ne.s32.totalorder %s90, %s91
    %p102 = scmp.eq.s32.totalorder %s14, 0
    %p103 = por %p101, %p102
    %p104 = scmp.ne.s32.totalorder %s90, %s91
    %p105 = scmp.eq.s32.totalorder %s15, 1
    %p106 = por %p104, %p105
    %p108 = scmp.ne.s32.totalorder %s91, %s107
    %p109 = scmp.eq.s32.totalorder %s15, 0
    %p110 = por %p108, %p109
    %p111 = scmp.le.s32.totalorder 1, %s9
    %p112 = scmp.lt.s32.totalorder %s9, 3
    %p113 = pnand %p111, %p112
    %p114 = pneg %p113
    // Predicated region
    $region9: #{_lambda_.5} parent=5 // pred_check
      _
    $region10: #{_lambda_.5} parent=5 // pred_check_branch
      %116 = sbr.rel (%p113) target = $region12
    $region11: #{_lambda_.5} parent=5 // pred_region
      %s117 = ssub.s32 %s9, 1
      // Predicated region
      $region13: #{_lambda_.5} parent=11 // pred_check
        %p118 = pneg %p56
      $region14: #{_lambda_.5} parent=11 // pred_check_branch
        %120 = sbr.rel (%p118) target = $region16
      $region15: #{_lambda_.5} parent=11 // pred_region
        _
      $region16: #{_lambda_.5} parent=11 // pred_fallthru
        _
      // Predicated region
      $region17: #{_lambda_.5} parent=11 // pred_check
        %p121 = pneg %p77
      $region18: #{_lambda_.5} parent=11 // pred_check_branch
        %123 = sbr.rel (%p121) target = $region20
      $region19: #{_lambda_.5} parent=11 // pred_region
        _
      $region20: #{_lambda_.5} parent=11 // pred_fallthru
        _
    $region12: #{_lambda_.5} parent=5 // pred_fallthru
      _
    %p124 = scmp.lt.s32.totalorder %s9, 2
    // Predicated region
    $region21: #{_lambda_.5} parent=5 // pred_check
      %p125 = pneg %p124
    $region22: #{_lambda_.5} parent=5 // pred_check_branch
      %127 = sbr.rel (%p125) target = $region24
    $region23: #{_lambda_.5} parent=5 // pred_region
      // Predicated region
      $region25: #{_lambda_.5} parent=23 // pred_check
        %p128 = pneg %p29
      $region26: #{_lambda_.5} parent=23 // pred_check_branch
        %130 = sbr.rel (%p128) target = $region28
      $region27: #{_lambda_.5} parent=23 // pred_region
        %s131 = smul.u32 4, %s9
        %p132 = scmp.lt.s32.totalorder %s131, 7
        %s133 = scalar_select %p132, %s131, 7
        %s134 = smul.addr %s133, 2
        %s135 = smul.addr %s134, 4
        %s136 = scalar_lea.vmem %s0, %s135
        %s137 = smul.u32 4, %s9
      $region28: #{_lambda_.5} parent=23 // pred_fallthru
        _
    $region24: #{_lambda_.5} parent=5 // pred_fallthru
      _
    %p138 = scmp.le.s32.totalorder 1, %s9
    %p139 = scmp.lt.s32.totalorder %s9, 3
    %p140 = pnand %p138, %p139
    %p141 = pneg %p140
    // Predicated region
    $region29: #{_lambda_.5} parent=5 // pred_check
      _
    $region30: #{_lambda_.5} parent=5 // pred_check_branch
      %143 = sbr.rel (%p140) target = $region32
    $region31: #{_lambda_.5} parent=5 // pred_region
      %s144 = ssub.s32 %s9, 1
      %s145 = smul.u32 4, %s14
      %p146 = scmp.lt.s32.totalorder %s145, 7
      %s147 = scalar_select %p146, %s145, 7
      %s148 = smul.addr %s147, 2
      %s149 = smul.addr %s148, 4
      %s150 = scalar_lea.vmem %s0, %s149
      %p151 = pneg %p35
      %p152 = pneg %p32
      %p153 = pneg %p56
      %p154 = pneg %p53
      %p155 = pneg %p77
      %p156 = pneg %p74
      %p157 = pneg %p103
      %p158 = pneg %p100
      %s159 = smul.u32 4, %s14
      %p160 = scmp.lt.s32.totalorder %s159, 7
      %s161 = scalar_select %p160, %s159, 7
      %s162 = smul.addr %s161, 2
      %s163 = smul.addr %s162, 8
      %s164 = scalar_lea.vmem %s3, %s163
      %s165 = smul.u32 4, %s14
      %p166 = scmp.lt.s32.totalorder %s165, 7
      %s167 = scalar_select %p166, %s165, 7
      %s168 = smul.addr %s167, 2
      %s169 = smul.addr %s168, 4
      %s170 = scalar_lea.vmem %s0, %s169
      %s171 = smul.u32 4, %s14
      %s172 = smul.u32 4, %s14
      %p173 = scmp.lt.s32.totalorder %s172, 7
      %s174 = scalar_select %p173, %s172, 7
      %s175 = smul.addr %s174, 2
      %s176 = smul.addr %s175, 8
      %s177 = scalar_lea.vmem %s3, %s176
      %s178 = smul.u32 4, %s14
      %v179 = vld [vmem:[%s1] sm:$0xff]
      %v180 = vld [vmem:[%s2] sm:$0xff]
      %v181 = vld [vmem:[%s170] sm:$0xff]
      %v182 = vunpack.c.l.bf16 %v181
      %v183 = vunpack.c.h.bf16 %v181
      %185 = vset.pattern.permute.xlu0 0
      %186 = vperm.xlu0 %185, %v179
      %v187 = vpop.permute.xlu0 %186
      %v189 = vmul.f32 %v182, %v187
      %v190 = vmul.f32 %v183, %v187
      %192 = vset.pattern.permute.xlu0 0
      %193 = vperm.xlu0 %192, %v180
      %v194 = vpop.permute.xlu0 %193
      %v196 = vadd.f32 %v189, %v194
      %v197 = vadd.f32 %v190, %v194
      %v198 = vmax.f32 %v196, 0.0
      %v199 = vmax.f32 %v197, 0.0
      %200 = vst [vmem:[%s177] sm:$0xff] %v198
      %201 = vst [vmem:[%s177 + $0x8] sm:$0xff] %v199
      %s202 = scalar_lea.vmem %s170, 8
      %v203 = vld [vmem:[%s202] sm:$0xff]
      %v204 = vunpack.c.l.bf16 %v203
      %v205 = vunpack.c.h.bf16 %v203
      %v206 = vmul.f32 %v204, %v187
      %v207 = vmul.f32 %v205, %v187
      %v208 = vadd.f32 %v206, %v194
      %v209 = vadd.f32 %v207, %v194
      %v210 = vmax.f32 %v208, 0.0
      %v211 = vmax.f32 %v209, 0.0
      %s212 = scalar_lea.vmem %s177, 16
      %213 = vst [vmem:[%s212] sm:$0xff] %v210
      %214 = vst [vmem:[%s212 + $0x8] sm:$0xff] %v211
      %s215 = scalar_lea.vmem %s170, 16
      %v216 = vld [vmem:[%s215] sm:$0xff]
      %v217 = vunpack.c.l.bf16 %v216
      %v218 = vunpack.c.h.bf16 %v216
      %v219 = vmul.f32 %v217, %v187
      %v220 = vmul.f32 %v218, %v187
      %v221 = vadd.f32 %v219, %v194
      %v222 = vadd.f32 %v220, %v194
      %v223 = vmax.f32 %v221, 0.0
      %v224 = vmax.f32 %v222, 0.0
      %s225 = scalar_lea.vmem %s177, 32
      %226 = vst [vmem:[%s225] sm:$0xff] %v223
      %227 = vst [vmem:[%s225 + $0x8] sm:$0xff] %v224
      %s228 = scalar_lea.vmem %s170, 24
      %v229 = vld [vmem:[%s228] sm:$0xff]
      %v230 = vunpack.c.l.bf16 %v229
      %v231 = vunpack.c.h.bf16 %v229
      %v232 = vmul.f32 %v230, %v187
      %v233 = vmul.f32 %v231, %v187
      %v234 = vadd.f32 %v232, %v194
      %v235 = vadd.f32 %v233, %v194
      %v236 = vmax.f32 %v234, 0.0
      %v237 = vmax.f32 %v235, 0.0
      %s238 = scalar_lea.vmem %s177, 48
      %239 = vst [vmem:[%s238] sm:$0xff] %v236
      %240 = vst [vmem:[%s238 + $0x8] sm:$0xff] %v237
      %s241 = smul.u32 4, %s14
      %p242 = scmp.lt.s32.totalorder %s241, 7
      %s243 = scalar_select %p242, %s241, 7
      %s244 = smul.addr %s243, 2
      %s245 = smul.addr %s244, 8
      %s246 = scalar_lea.vmem %s3, %s245
      // Predicated region
      $region33: #{_lambda_.5} parent=31 // pred_check
        %p247 = pneg %p100
      $region34: #{_lambda_.5} parent=31 // pred_check_branch
        %249 = sbr.rel (%p247) target = $region36
      $region35: #{_lambda_.5} parent=31 // pred_region
        %s250 = smul.u32 4, %s14
      $region36: #{_lambda_.5} parent=31 // pred_fallthru
        _
    $region32: #{_lambda_.5} parent=5 // pred_fallthru
      _
    %p251 = scmp.le.s32.totalorder 2, %s9
    // Predicated region
    $region37: #{_lambda_.5} parent=5 // pred_check
      %p252 = pneg %p251
    $region38: #{_lambda_.5} parent=5 // pred_check_branch
      %254 = sbr.rel (%p252) target = $region40
    $region39: #{_lambda_.5} parent=5 // pred_region
      %s255 = ssub.s32 %s9, 2
      // Predicated region
      $region41: #{_lambda_.5} parent=39 // pred_check
        %p256 = pneg %p106
      $region42: #{_lambda_.5} parent=39 // pred_check_branch
        %258 = sbr.rel (%p256) target = $region44
      $region43: #{_lambda_.5} parent=39 // pred_region
        %s259 = smul.u32 4, %s15
        %p260 = scmp.lt.s32.totalorder %s259, 7
        %s261 = scalar_select %p260, %s259, 7
        %s262 = smul.addr %s261, 2
        %s263 = smul.addr %s262, 8
        %s264 = scalar_lea.vmem %s3, %s263
      $region44: #{_lambda_.5} parent=39 // pred_fallthru
        _
    $region40: #{_lambda_.5} parent=5 // pred_fallthru
      _
  $region6: #{_lambda_.5} parent=0 // loop_footer
    %s13 = sadd.s32 1, %s9
  $region7: #{_lambda_.5} parent=0 // loop_footer_branch
    %8 = sbr.rel target = $region3
  $region8: #{_lambda_.5} parent=0 // loop_exit
    _

// kernel: _lambda_.3
$region0: #{_lambda_.3}
  #allocation0 [shape = 'u32[]', space=smem, size = 0x4, offset = 0x4, fixed_abs, tag = 'smem constant byte address 0x4 - core index']
  #allocation1 [shape = 'u32[144,128]{1,0:T(1,128)}', space=vmem, size = 0x12000, scoped, tag = 'internal scratch']
  %s0 = inlined_call_operand.vmem [shape: f32[8,4,256], index: 0, kind: input, shape index: {}]
  %s1 = inlined_call_operand.vmem [shape: f32[9,256], index: 1, kind: input, shape index: {}]
  %s2 = inlined_call_operand.vmem [shape: f32[4,9], index: 2, kind: input, shape index: {}]
  %s3 = inlined_call_operand.vmem [shape: f32[8,4], index: 3, kind: input, shape index: {}]
  %s4 = inlined_call_operand.vmem [shape: bf16[8,8,256], index: 4, kind: output, shape index: {0}]
  %s5 = inlined_call_operand.vmem [shape: f32[2,8,2], index: 5, kind: output, shape index: {1}]
  %6 = xla_tuple %s4, %s5
  %s7 = sld [smem:[#allocation0]]
  $region57: #{_lambda_.3} parent=0
    _
  %s9 = ssub.s32 1, %s7
  %s10 = scalar_select 0, %s9, %s7
  loop: start=0, step=1, limit=4
  $region2: #{_lambda_.3} parent=0 // loop_pre_header
    _
  $region3: #{_lambda_.3} parent=0 // loop_header
    %s12 = sphi 0, %s16
    %p13 = scmp.ge.s32.totalorder %s12, 4
    %s22 = sphi 0, %s24
    %s25 = sphi 0, %s22
    %s26 = sphi 0, %s25
    %s42 = sphi 0, %s26
    %s46 = sphi 0, %s46
    %s48 = sphi 0, %s46
    %s49 = sphi 0, %s48
    %s63 = sphi 0, %s49
    %s67 = sphi 0, %s67
    %s69 = sphi 0, %s67
    %s70 = sphi 0, %s69
    %s84 = sphi 0, %s70
    %s88 = sphi 0, %s88
    %s90 = sphi 0, %s88
    %s91 = sphi 0, %s90
    %s105 = sphi 0, %s91
    %s111 = sphi 0, %s113
    %s114 = sphi 0, %s111
    %s115 = sphi 0, %s114
    %s131 = sphi 0, %s115
    %s137 = sphi 0, %s139
    %s140 = sphi 0, %s137
    %s141 = sphi 0, %s140
    %s157 = sphi 0, %s141
  $region4: #{_lambda_.3} parent=0 // loop_header_branch
    %15 = sbr.rel (%p13) target = $region8
  $region5: #{_lambda_.3} parent=0 // loop_body
    %s17 = ssub.s32 %s12, 1
    %s18 = ssub.s32 %s12, 2
    %s19 = sadd.s32 %s12, 1
    %s20 = ssub.s32 %s12, %s19
    %p21 = scmp.eq.s32.totalorder %s20, 0
    %s23 = sadd.s32 %s22, 1
    %s24 = scalar_select %p21, %s22, %s23
    %p27 = pneg %p21
    %p28 = scmp.eq.s32.totalorder %s12, 1
    %p29 = por %p27, %p28
    %p30 = scmp.ne.s32.totalorder %s22, %s25
    %p31 = scmp.eq.s32.totalorder %s12, 0
    %p32 = por %p30, %p31
    %p33 = scmp.ne.s32.totalorder %s22, %s25
    %p34 = scmp.eq.s32.totalorder %s17, 1
    %p35 = por %p33, %p34
    %p36 = scmp.ne.s32.totalorder %s25, %s26
    %p37 = scmp.eq.s32.totalorder %s17, 0
    %p38 = por %p36, %p37
    %p39 = scmp.ne.s32.totalorder %s25, %s26
    %p40 = scmp.eq.s32.totalorder %s18, 1
    %p41 = por %p39, %p40
    %p43 = scmp.ne.s32.totalorder %s26, %s42
    %p44 = scmp.eq.s32.totalorder %s18, 0
    %p45 = por %p43, %p44
    %s47 = sadd.s32 %s46, 1
    %p50 = scmp.eq.s32.totalorder %s12, 1
    %p51 = scmp.ne.s32.totalorder %s46, %s48
    %p52 = scmp.eq.s32.totalorder %s12, 0
    %p53 = por %p51, %p52
    %p54 = scmp.ne.s32.totalorder %s46, %s48
    %p55 = scmp.eq.s32.totalorder %s17, 1
    %p56 = por %p54, %p55
    %p57 = scmp.ne.s32.totalorder %s48, %s49
    %p58 = scmp.eq.s32.totalorder %s17, 0
    %p59 = por %p57, %p58
    %p60 = scmp.ne.s32.totalorder %s48, %s49
    %p61 = scmp.eq.s32.totalorder %s18, 1
    %p62 = por %p60, %p61
    %p64 = scmp.ne.s32.totalorder %s49, %s63
    %p65 = scmp.eq.s32.totalorder %s18, 0
    %p66 = por %p64, %p65
    %s68 = sadd.s32 %s67, 1
    %p71 = scmp.eq.s32.totalorder %s12, 1
    %p72 = scmp.ne.s32.totalorder %s67, %s69
    %p73 = scmp.eq.s32.totalorder %s12, 0
    %p74 = por %p72, %p73
    %p75 = scmp.ne.s32.totalorder %s67, %s69
    %p76 = scmp.eq.s32.totalorder %s17, 1
    %p77 = por %p75, %p76
    %p78 = scmp.ne.s32.totalorder %s69, %s70
    %p79 = scmp.eq.s32.totalorder %s17, 0
    %p80 = por %p78, %p79
    %p81 = scmp.ne.s32.totalorder %s69, %s70
    %p82 = scmp.eq.s32.totalorder %s18, 1
    %p83 = por %p81, %p82
    %p85 = scmp.ne.s32.totalorder %s70, %s84
    %p86 = scmp.eq.s32.totalorder %s18, 0
    %p87 = por %p85, %p86
    %s89 = sadd.s32 %s88, 1
    %p92 = scmp.eq.s32.totalorder %s12, 1
    %p93 = scmp.ne.s32.totalorder %s88, %s90
    %p94 = scmp.eq.s32.totalorder %s12, 0
    %p95 = por %p93, %p94
    %p96 = scmp.ne.s32.totalorder %s88, %s90
    %p97 = scmp.eq.s32.totalorder %s17, 1
    %p98 = por %p96, %p97
    %p99 = scmp.ne.s32.totalorder %s90, %s91
    %p100 = scmp.eq.s32.totalorder %s17, 0
    %p101 = por %p99, %p100
    %p102 = scmp.ne.s32.totalorder %s90, %s91
    %p103 = scmp.eq.s32.totalorder %s18, 1
    %p104 = por %p102, %p103
    %p106 = scmp.ne.s32.totalorder %s91, %s105
    %p107 = scmp.eq.s32.totalorder %s18, 0
    %p108 = por %p106, %p107
    %s109 = ssub.s32 %s12, %s19
    %p110 = scmp.eq.s32.totalorder %s109, 0
    %s112 = sadd.s32 %s111, 1
    %s113 = scalar_select %p110, %s111, %s112
    %p116 = pneg %p110
    %p117 = scmp.eq.s32.totalorder %s12, 1
    %p118 = por %p116, %p117
    %p119 = scmp.ne.s32.totalorder %s111, %s114
    %p120 = scmp.eq.s32.totalorder %s12, 0
    %p121 = por %p119, %p120
    %p122 = scmp.ne.s32.totalorder %s111, %s114
    %p123 = scmp.eq.s32.totalorder %s17, 1
    %p124 = por %p122, %p123
    %p125 = scmp.ne.s32.totalorder %s114, %s115
    %p126 = scmp.eq.s32.totalorder %s17, 0
    %p127 = por %p125, %p126
    %p128 = scmp.ne.s32.totalorder %s114, %s115
    %p129 = scmp.eq.s32.totalorder %s18, 1
    %p130 = por %p128, %p129
    %p132 = scmp.ne.s32.totalorder %s115, %s131
    %p133 = scmp.eq.s32.totalorder %s18, 0
    %p134 = por %p132, %p133
    %s135 = ssub.s32 %s12, %s19
    %p136 = scmp.eq.s32.totalorder %s135, 0
    %s138 = sadd.s32 %s137, 1
    %s139 = scalar_select %p136, %s137, %s138
    %p142 = pneg %p136
    %p143 = scmp.eq.s32.totalorder %s12, 1
    %p144 = por %p142, %p143
    %p145 = scmp.ne.s32.totalorder %s137, %s140
    %p146 = scmp.eq.s32.totalorder %s12, 0
    %p147 = por %p145, %p146
    %p148 = scmp.ne.s32.totalorder %s137, %s140
    %p149 = scmp.eq.s32.totalorder %s17, 1
    %p150 = por %p148, %p149
    %p151 = scmp.ne.s32.totalorder %s140, %s141
    %p152 = scmp.eq.s32.totalorder %s17, 0
    %p153 = por %p151, %p152
    %p154 = scmp.ne.s32.totalorder %s140, %s141
    %p155 = scmp.eq.s32.totalorder %s18, 1
    %p156 = por %p154, %p155
    %p158 = scmp.ne.s32.totalorder %s141, %s157
    %p159 = scmp.eq.s32.totalorder %s18, 0
    %p160 = por %p158, %p159
    %p161 = scmp.le.s32.totalorder 1, %s12
    %p162 = scmp.lt.s32.totalorder %s12, 3
    %p163 = pnand %p161, %p162
    %p164 = pneg %p163
    // Predicated region
    $region9: #{_lambda_.3} parent=5 // pred_check
      _
    $region10: #{_lambda_.3} parent=5 // pred_check_branch
      %166 = sbr.rel (%p163) target = $region12
    $region11: #{_lambda_.3} parent=5 // pred_region
      %s167 = ssub.s32 %s12, 1
      // Predicated region
      $region13: #{_lambda_.3} parent=11 // pred_check
        %p168 = pneg %p59
      $region14: #{_lambda_.3} parent=11 // pred_check_branch
        %170 = sbr.rel (%p168) target = $region16
      $region15: #{_lambda_.3} parent=11 // pred_region
        _
      $region16: #{_lambda_.3} parent=11 // pred_fallthru
        _
      // Predicated region
      $region17: #{_lambda_.3} parent=11 // pred_check
        %p171 = pneg %p80
      $region18: #{_lambda_.3} parent=11 // pred_check_branch
        %173 = sbr.rel (%p171) target = $region20
      $region19: #{_lambda_.3} parent=11 // pred_region
        _
      $region20: #{_lambda_.3} parent=11 // pred_fallthru
        _
      // Predicated region
      $region21: #{_lambda_.3} parent=11 // pred_check
        %p174 = pneg %p101
      $region22: #{_lambda_.3} parent=11 // pred_check_branch
        %176 = sbr.rel (%p174) target = $region24
      $region23: #{_lambda_.3} parent=11 // pred_region
        _
      $region24: #{_lambda_.3} parent=11 // pred_fallthru
        _
    $region12: #{_lambda_.3} parent=5 // pred_fallthru
      _
    %p177 = scmp.lt.s32.totalorder %s12, 2
    // Predicated region
    $region25: #{_lambda_.3} parent=5 // pred_check
      %p178 = pneg %p177
    $region26: #{_lambda_.3} parent=5 // pred_check_branch
      %180 = sbr.rel (%p178) target = $region28
    $region27: #{_lambda_.3} parent=5 // pred_region
      // Predicated region
      $region29: #{_lambda_.3} parent=27 // pred_check
        %p181 = pneg %p32
      $region30: #{_lambda_.3} parent=27 // pred_check_branch
        %183 = sbr.rel (%p181) target = $region32
      $region31: #{_lambda_.3} parent=27 // pred_region
        %s184 = smul.u32 4, %s12
        %p185 = scmp.lt.s32.totalorder %s184, 7
        %s186 = scalar_select %p185, %s184, 7
        %s187 = smul.addr %s186, 2
        %s188 = smul.addr %s187, 4
        %s189 = scalar_lea.vmem %s0, %s188
        %s190 = smul.u32 4, %s12
      $region32: #{_lambda_.3} parent=27 // pred_fallthru
        _
    $region28: #{_lambda_.3} parent=5 // pred_fallthru
      _
    %p191 = scmp.le.s32.totalorder 1, %s12
    %p192 = scmp.lt.s32.totalorder %s12, 3
    %p193 = pnand %p191, %p192
    %p194 = pneg %p193
    // Predicated region
    $region33: #{_lambda_.3} parent=5 // pred_check
      _
    $region34: #{_lambda_.3} parent=5 // pred_check_branch
      %196 = sbr.rel (%p193) target = $region36
    $region35: #{_lambda_.3} parent=5 // pred_region
      %s197 = ssub.s32 %s12, 1
      %s198 = smul.u32 4, %s17
      %p199 = scmp.lt.s32.totalorder %s198, 7
      %s200 = scalar_select %p199, %s198, 7
      %s201 = smul.addr %s200, 2
      %s202 = smul.addr %s201, 4
      %s203 = scalar_lea.vmem %s0, %s202
      %p204 = pneg %p38
      %p205 = pneg %p35
      %p206 = pneg %p59
      %p207 = pneg %p56
      %p208 = pneg %p80
      %p209 = pneg %p77
      %p210 = pneg %p101
      %p211 = pneg %p98
      %p212 = pneg %p127
      %p213 = pneg %p124
      %s214 = smul.u32 4, %s17
      %p215 = scmp.lt.s32.totalorder %s214, 7
      %s216 = scalar_select %p215, %s214, 7
      %s217 = smul.addr %s216, 2
      %s218 = smul.addr %s217, 4
      %s219 = scalar_lea.vmem %s4, %s218
      %p220 = pneg %p153
      %p221 = pneg %p150
      %p222 = scmp.lt.s32.totalorder %s17, 1
      %s223 = scalar_select %p222, %s17, 1
      %s224 = smul.addr %s223, 8
      %s225 = scalar_lea.vmem %s5, %s224
      %s226 = smul.u32 4, %s17
      %p227 = scmp.lt.s32.totalorder %s226, 7
      %s228 = scalar_select %p227, %s226, 7
      %s229 = smul.addr %s228, 2
      %s230 = smul.addr %s229, 4
      %s231 = scalar_lea.vmem %s0, %s230
      %s232 = smul.u32 4, %s17
      %s233 = smul.u32 4, %s17
      %p234 = scmp.lt.s32.totalorder %s233, 7
      %s235 = scalar_select %p234, %s233, 7
      %s236 = smul.addr %s235, 2
      %s237 = smul.addr %s236, 4
      %s238 = scalar_lea.vmem %s4, %s237
      %s239 = smul.u32 4, %s17
      %p240 = scmp.lt.s32.totalorder %s17, 1
      %s241 = scalar_select %p240, %s17, 1
      %s242 = smul.addr %s241, 8
      %s243 = scalar_lea.vmem %s5, %s242
      %v244 = vld [vmem:[%s1] sm:$0xff]
      %v245 = vld [vmem:[%s1 + $0x8] sm:$0xff]
      %v246 = vld [vmem:[%s1 + $0x10] sm:$0x1]
      %v247 = vld [vmem:[%s1 + $0x18] sm:$0x1]
      %v248 = vld [vmem:[%s2] sm:$0xf]
      %v249 = vld [vmem:[%s3] sm:$0xff]
      %v250 = vld [vmem:[%s231] sm:$0xff]
      %252 = vset.pattern.permute.xlu0 4
      %253 = vperm.xlu0 %252, %v248
      %v254 = vpop.permute.xlu0 %253
      %v256 = vunpack.c.l.s4 839922192
      %v257 = vunpack.c.0.s8 %v256
      %v258 = vlaneseq
      %v259 = vshrl.u32 %v258, 7
      %v260 = vsub.s32 %v257, %v259
      %v261 = vrot.slane %v254, %v260
      %v263 = vmul.f32 %v250, %v261
      %v265 = vcombine.high %v250, %v250
      %267 = vrot.lane.b32.xlu0 %v250, 17
      %v268 = vpop.permute.xlu0 %267
      %269 = vrot.lane.b32.xlu0 %v265, 17
      %v270 = vpop.permute.xlu0 %269
      %v271 = vlaneseq
      %v272 = vand.u32 %v271, 127
      %vm273 = vcmp.lt.s32.totalorder %v272, 17
      %v274 = vsel %vm273, %v268, %v270
      %v275 = vsel %vm273, %v270, %v268
      %v276 = vlaneseq
      %v277 = vshrl.u32 %v276, 7
      %v278 = vsub.s32 0, %v277
      %v279 = vrot.slane %v244, %v278
      %v280 = vlaneseq
      %v281 = vshrl.u32 %v280, 7
      %v282 = vsub.s32 0, %v281
      %v283 = vrot.slane %v245, %v282
      %v284 = vmul.f32 %v275, %v279
      %v285 = vmul.f32 %v274, %v283
      %286 = vset.pattern.permute.xlu0 0
      %287 = vperm.xlu0 %286, %v248
      %v288 = vpop.permute.xlu0 %287
      %v290 = vmul.f32 %v284, %v288
      %v291 = vmul.f32 %v285, %v288
      %v294 = vcombine.low %v290, %v291
      %v296 = vadd.f32 %v263, %v294
      %297 = vrot.lane.b32.xlu0 %v250, 16
      %v298 = vpop.permute.xlu0 %297
      %299 = vrot.lane.b32.xlu0 %v265, 16
      %v300 = vpop.permute.xlu0 %299
      %vm301 = vcmp.lt.s32.totalorder %v272, 16
      %v302 = vsel %vm301, %v298, %v300
      %v303 = vsel %vm301, %v300, %v298
      %v304 = vlaneseq
      %v305 = vshrl.u32 %v304, 7
      %v306 = vsub.s32 1, %v305
      %v307 = vrot.slane %v244, %v306
      %v308 = vlaneseq
      %v309 = vshrl.u32 %v308, 7
      %v310 = vsub.s32 1, %v309
      %v311 = vrot.slane %v245, %v310
      %v312 = vmul.f32 %v303, %v307
      %v313 = vmul.f32 %v302, %v311
      %314 = vset.pattern.permute.xlu0 1
      %315 = vperm.xlu0 %314, %v248
      %v316 = vpop.permute.xlu0 %315
      %v318 = vmul.f32 %v312, %v316
      %v319 = vmul.f32 %v313, %v316
      %v322 = vcombine.low %v318, %v319
      %v324 = vadd.f32 %v296, %v322
      %325 = vrot.lane.b32.xlu0 %v250, 15
      %v326 = vpop.permute.xlu0 %325
      %327 = vrot.lane.b32.xlu0 %v265, 15
      %v328 = vpop.permute.xlu0 %327
      %vm329 = vcmp.lt.s32.totalorder %v272, 15
      %v330 = vsel %vm329, %v326, %v328
      %v331 = vsel %vm329, %v328, %v326
      %v332 = vlaneseq
      %v333 = vshrl.u32 %v332, 7
      %v334 = vsub.s32 2, %v333
      %v335 = vrot.slane %v244, %v334
      %v336 = vlaneseq
      %v337 = vshrl.u32 %v336, 7
      %v338 = vsub.s32 2, %v337
      %v339 = vrot.slane %v245, %v338
      %v340 = vmul.f32 %v331, %v335
      %v341 = vmul.f32 %v330, %v339
      %342 = vset.pattern.permute.xlu0 2
      %343 = vperm.xlu0 %342, %v248
      %v344 = vpop.permute.xlu0 %343
      %v346 = vmul.f32 %v340, %v344
      %v347 = vmul.f32 %v341, %v344
      %v350 = vcombine.low %v346, %v347
      %v352 = vadd.f32 %v324, %v350
      %353 = vrot.lane.b32.xlu0 %v250, 1
      %v354 = vpop.permute.xlu0 %353
      %355 = vrot.lane.b32.xlu0 %v265, 1
      %v356 = vpop.permute.xlu0 %355
      %vm357 = vcmp.lt.s32.totalorder %v272, 1
      %v358 = vsel %vm357, %v354, %v356
      %v359 = vsel %vm357, %v356, %v354
      %v360 = vlaneseq
      %v361 = vshrl.u32 %v360, 7
      %v362 = vsub.s32 3, %v361
      %v363 = vrot.slane %v244, %v362
      %v364 = vlaneseq
      %v365 = vshrl.u32 %v364, 7
      %v366 = vsub.s32 3, %v365
      %v367 = vrot.slane %v245, %v366
      %v368 = vmul.f32 %v359, %v363
      %v369 = vmul.f32 %v358, %v367
      %370 = vset.pattern.permute.xlu0 3
      %371 = vperm.xlu0 %370, %v248
      %v372 = vpop.permute.xlu0 %371
      %v374 = vmul.f32 %v368, %v372
      %v375 = vmul.f32 %v369, %v372
      %v378 = vcombine.low %v374, %v375
      %v380 = vadd.f32 %v352, %v378
      %381 = vrot.lane.b32.xlu0 %v250, 127
      %v382 = vpop.permute.xlu0 %381
      %383 = vrot.lane.b32.xlu0 %v265, 127
      %v384 = vpop.permute.xlu0 %383
      %vm385 = vcmp.lt.s32.totalorder %v272, 127
      %v386 = vsel %vm385, %v382, %v384
      %v387 = vsel %vm385, %v384, %v382
      %v388 = vlaneseq
      %v389 = vshrl.u32 %v388, 7
      %v390 = vsub.s32 5, %v389
      %v391 = vrot.slane %v244, %v390
      %v392 = vlaneseq
      %v393 = vshrl.u32 %v392, 7
      %v394 = vsub.s32 5, %v393
      %v395 = vrot.slane %v245, %v394
      %v396 = vmul.f32 %v386, %v391
      %v397 = vmul.f32 %v387, %v395
      %398 = vset.pattern.permute.xlu0 5
      %399 = vperm.xlu0 %398, %v248
      %v400 = vpop.permute.xlu0 %399
      %v402 = vmul.f32 %v396, %v400
      %v403 = vmul.f32 %v397, %v400
      %v406 = vcombine.low %v402, %v403
      %v408 = vadd.f32 %v380, %v406
      %409 = vrot.lane.b32.xlu0 %v250, 113
      %v410 = vpop.permute.xlu0 %409
      %411 = vrot.lane.b32.xlu0 %v265, 113
      %v412 = vpop.permute.xlu0 %411
      %vm413 = vcmp.lt.s32.totalorder %v272, 113
      %v414 = vsel %vm413, %v410, %v412
      %v415 = vsel %vm413, %v412, %v410
      %v416 = vlaneseq
      %v417 = vshrl.u32 %v416, 7
      %v418 = vsub.s32 6, %v417
      %v419 = vrot.slane %v244, %v418
      %v420 = vlaneseq
      %v421 = vshrl.u32 %v420, 7
      %v422 = vsub.s32 6, %v421
      %v423 = vrot.slane %v245, %v422
      %v424 = vmul.f32 %v414, %v419
      %v425 = vmul.f32 %v415, %v423
      %426 = vset.pattern.permute.xlu0 6
      %427 = vperm.xlu0 %426, %v248
      %v428 = vpop.permute.xlu0 %427
      %v430 = vmul.f32 %v424, %v428
      %v431 = vmul.f32 %v425, %v428
      %v434 = vcombine.low %v430, %v431
      %v436 = vadd.f32 %v408, %v434
      %437 = vrot.lane.b32.xlu0 %v250, 112
      %v438 = vpop.permute.xlu0 %437
      %439 = vrot.lane.b32.xlu0 %v265, 112
      %v440 = vpop.permute.xlu0 %439
      %vm441 = vcmp.lt.s32.totalorder %v272, 112
      %v442 = vsel %vm441, %v438, %v440
      %v443 = vsel %vm441, %v440, %v438
      %v444 = vlaneseq
      %v445 = vshrl.u32 %v444, 7
      %v446 = vsub.s32 7, %v445
      %v447 = vrot.slane %v244, %v446
      %v448 = vlaneseq
      %v449 = vshrl.u32 %v448, 7
      %v450 = vsub.s32 7, %v449
      %v451 = vrot.slane %v245, %v450
      %v452 = vmul.f32 %v442, %v447
      %v453 = vmul.f32 %v443, %v451
      %454 = vset.pattern.permute.xlu0 7
      %455 = vperm.xlu0 %454, %v248
      %v456 = vpop.permute.xlu0 %455
      %v458 = vmul.f32 %v452, %v456
      %v459 = vmul.f32 %v453, %v456
      %v462 = vcombine.low %v458, %v459
      %v464 = vadd.f32 %v436, %v462
      %465 = vrot.lane.b32.xlu0 %v250, 111
      %v466 = vpop.permute.xlu0 %465
      %467 = vrot.lane.b32.xlu0 %v265, 111
      %v468 = vpop.permute.xlu0 %467
      %vm469 = vcmp.lt.s32.totalorder %v272, 111
      %v470 = vsel %vm469, %v466, %v468
      %v471 = vsel %vm469, %v468, %v466
      %v472 = vlaneseq
      %v473 = vshrl.u32 %v472, 7
      %v474 = vsub.s32 0, %v473
      %v475 = vrot.slane %v246, %v474
      %v476 = vlaneseq
      %v477 = vshrl.u32 %v476, 7
      %v478 = vsub.s32 0, %v477
      %v479 = vrot.slane %v247, %v478
      %v480 = vmul.f32 %v470, %v475
      %v481 = vmul.f32 %v471, %v479
      %482 = vset.pattern.permute.xlu0 8
      %483 = vperm.xlu0 %482, %v248
      %v484 = vpop.permute.xlu0 %483
      %v486 = vmul.f32 %v480, %v484
      %v487 = vmul.f32 %v481, %v484
      %v490 = vcombine.low %v486, %v487
      %v492 = vadd.f32 %v464, %v490
      %494 = vset.pattern.permute.xlu0 0
      %495 = vperm.xlu0 %494, %v249
      %v496 = vpop.permute.xlu0 %495
      %v499 = vlaneseq
      %v500 = vshrl.u32 %v499, 7
      %v501 = vsub.s32 0, %v500
      %v502 = vrot.slane %v492, %v501
      %v503 = vlaneseq
      %v504 = vshrl.u32 %v503, 7
      %v505 = vsub.s32 4, %v504
      %v506 = vrot.slane %v492, %v505
      %v509 = vlaneseq
      %v510 = vshrl.u32 %v509, 7
      %v511 = vsub.s32 0, %v510
      %v512 = vrot.slane %v502, %v511
      %v513 = vlaneseq
      %v514 = vshrl.u32 %v513, 7
      %v515 = vsub.s32 0, %v514
      %v516 = vrot.slane %v506, %v515
      %v517 = vmul.f32 %v496, %v512
      %v518 = vmul.f32 %v496, %v516
      %519 = vset.pattern.permute.xlu0 1
      %520 = vperm.xlu0 %519, %v249
      %v521 = vpop.permute.xlu0 %520
      %v523 = vlaneseq
      %v524 = vshrl.u32 %v523, 7
      %v525 = vsub.s32 1, %v524
      %v526 = vrot.slane %v492, %v525
      %v527 = vlaneseq
      %v528 = vshrl.u32 %v527, 7
      %v529 = vsub.s32 5, %v528
      %v530 = vrot.slane %v492, %v529
      %v533 = vlaneseq
      %v534 = vshrl.u32 %v533, 7
      %v535 = vsub.s32 1, %v534
      %v536 = vrot.slane %v526, %v535
      %v537 = vlaneseq
      %v538 = vshrl.u32 %v537, 7
      %v539 = vsub.s32 1, %v538
      %v540 = vrot.slane %v530, %v539
      %v541 = vmul.f32 %v521, %v536
      %v542 = vmul.f32 %v521, %v540
      %v543 = vadd.f32 %v517, %v541
      %v544 = vadd.f32 %v518, %v542
      %545 = vset.pattern.permute.xlu0 2
      %546 = vperm.xlu0 %545, %v249
      %v547 = vpop.permute.xlu0 %546
      %v549 = vlaneseq
      %v550 = vshrl.u32 %v549, 7
      %v551 = vsub.s32 2, %v550
      %v552 = vrot.slane %v492, %v551
      %v553 = vlaneseq
      %v554 = vshrl.u32 %v553, 7
      %v555 = vsub.s32 6, %v554
      %v556 = vrot.slane %v492, %v555
      %v559 = vlaneseq
      %v560 = vshrl.u32 %v559, 7
      %v561 = vsub.s32 2, %v560
      %v562 = vrot.slane %v552, %v561
      %v563 = vlaneseq
      %v564 = vshrl.u32 %v563, 7
      %v565 = vsub.s32 2, %v564
      %v566 = vrot.slane %v556, %v565
      %v567 = vmul.f32 %v547, %v562
      %v568 = vmul.f32 %v547, %v566
      %v569 = vadd.f32 %v543, %v567
      %v570 = vadd.f32 %v544, %v568
      %571 = vset.pattern.permute.xlu0 3
      %572 = vperm.xlu0 %571, %v249
      %v573 = vpop.permute.xlu0 %572
      %v575 = vlaneseq
      %v576 = vshrl.u32 %v575, 7
      %v577 = vsub.s32 3, %v576
      %v578 = vrot.slane %v492, %v577
      %v579 = vlaneseq
      %v580 = vshrl.u32 %v579, 7
      %v581 = vsub.s32 7, %v580
      %v582 = vrot.slane %v492, %v581
      %v585 = vlaneseq
      %v586 = vshrl.u32 %v585, 7
      %v587 = vsub.s32 3, %v586
      %v588 = vrot.slane %v578, %v587
      %v589 = vlaneseq
      %v590 = vshrl.u32 %v589, 7
      %v591 = vsub.s32 3, %v590
      %v592 = vrot.slane %v582, %v591
      %v593 = vmul.f32 %v573, %v588
      %v594 = vmul.f32 %v573, %v592
      %v595 = vadd.f32 %v569, %v593
      %v596 = vadd.f32 %v570, %v594
      %v597 = vpack.c.bf16 %v595, %v595
      %v598 = vpack.c.bf16 %v596, %v596
      %v601 = vunpack.c.l.b16 %v597
      %v602 = vunpack.c.l.b16 %v598
      %v603 = vpack.c.b16 %v602, %v601
      %605 = vst [vmem:[%s238] sm:$0xff] %v603
      %v606 = vadd.f32 %v595, %v596
      %607 = vadd.xlane.f32.xlu0 %v606
      %v608 = vpop.xlane.xlu0 %607
      %v609 = vadd.f32 %v608, 0.0
      %v610 = vmul.f32 %v595, %v595
      %v611 = vmul.f32 %v596, %v596
      %v612 = vadd.f32 %v610, %v611
      %613 = vadd.xlane.f32.xlu0 %v612
      %v614 = vpop.xlane.xlu0 %613
      %v615 = vadd.f32 %v614, 0.0
      %s616 = scalar_lea.vmem %s231, 8
      %v617 = vld [vmem:[%s616] sm:$0xff]
      %v618 = vmul.f32 %v617, %v261
      %v620 = vcombine.high %v617, %v617
      %622 = vrot.lane.b32.xlu0 %v617, 17
      %v623 = vpop.permute.xlu0 %622
      %624 = vrot.lane.b32.xlu0 %v620, 17
      %v625 = vpop.permute.xlu0 %624
      %v626 = vsel %vm273, %v623, %v625
      %v627 = vsel %vm273, %v625, %v623
      %v628 = vmul.f32 %v627, %v279
      %v629 = vmul.f32 %v626, %v283
      %v630 = vmul.f32 %v628, %v288
      %v631 = vmul.f32 %v629, %v288
      %v634 = vcombine.low %v630, %v631
      %v636 = vadd.f32 %v618, %v634
      %637 = vrot.lane.b32.xlu0 %v617, 16
      %v638 = vpop.permute.xlu0 %637
      %639 = vrot.lane.b32.xlu0 %v620, 16
      %v640 = vpop.permute.xlu0 %639
      %v641 = vsel %vm301, %v638, %v640
      %v642 = vsel %vm301, %v640, %v638
      %v643 = vmul.f32 %v642, %v307
      %v644 = vmul.f32 %v641, %v311
      %v645 = vmul.f32 %v643, %v316
      %v646 = vmul.f32 %v644, %v316
      %v649 = vcombine.low %v645, %v646
      %v651 = vadd.f32 %v636, %v649
      %652 = vrot.lane.b32.xlu0 %v617, 15
      %v653 = vpop.permute.xlu0 %652
      %654 = vrot.lane.b32.xlu0 %v620, 15
      %v655 = vpop.permute.xlu0 %654
      %v656 = vsel %vm329, %v653, %v655
      %v657 = vsel %vm329, %v655, %v653
      %v658 = vmul.f32 %v657, %v335
      %v659 = vmul.f32 %v656, %v339
      %v660 = vmul.f32 %v658, %v344
      %v661 = vmul.f32 %v659, %v344
      %v664 = vcombine.low %v660, %v661
      %v666 = vadd.f32 %v651, %v664
      %667 = vrot.lane.b32.xlu0 %v617, 1
      %v668 = vpop.permute.xlu0 %667
      %669 = vrot.lane.b32.xlu0 %v620, 1
      %v670 = vpop.permute.xlu0 %669
      %v671 = vsel %vm357, %v668, %v670
      %v672 = vsel %vm357, %v670, %v668
      %v673 = vmul.f32 %v672, %v363
      %v674 = vmul.f32 %v671, %v367
      %v675 = vmul.f32 %v673, %v372
      %v676 = vmul.f32 %v674, %v372
      %v679 = vcombine.low %v675, %v676
      %v681 = vadd.f32 %v666, %v679
      %682 = vrot.lane.b32.xlu0 %v617, 127
      %v683 = vpop.permute.xlu0 %682
      %684 = vrot.lane.b32.xlu0 %v620, 127
      %v685 = vpop.permute.xlu0 %684
      %v686 = vsel %vm385, %v683, %v685
      %v687 = vsel %vm385, %v685, %v683
      %v688 = vmul.f32 %v686, %v391
      %v689 = vmul.f32 %v687, %v395
      %v690 = vmul.f32 %v688, %v400
      %v691 = vmul.f32 %v689, %v400
      %v694 = vcombine.low %v690, %v691
      %v696 = vadd.f32 %v681, %v694
      %697 = vrot.lane.b32.xlu0 %v617, 113
      %v698 = vpop.permute.xlu0 %697
      %699 = vrot.lane.b32.xlu0 %v620, 113
      %v700 = vpop.permute.xlu0 %699
      %v701 = vsel %vm413, %v698, %v700
      %v702 = vsel %vm413, %v700, %v698
      %v703 = vmul.f32 %v701, %v419
      %v704 = vmul.f32 %v702, %v423
      %v705 = vmul.f32 %v703, %v428
      %v706 = vmul.f32 %v704, %v428
      %v709 = vcombine.low %v705, %v706
      %v711 = vadd.f32 %v696, %v709
      %712 = vrot.lane.b32.xlu0 %v617, 112
      %v713 = vpop.permute.xlu0 %712
      %714 = vrot.lane.b32.xlu0 %v620, 112
      %v715 = vpop.permute.xlu0 %714
      %v716 = vsel %vm441, %v713, %v715
      %v717 = vsel %vm441, %v715, %v713
      %v718 = vmul.f32 %v716, %v447
      %v719 = vmul.f32 %v717, %v451
      %v720 = vmul.f32 %v718, %v456
      %v721 = vmul.f32 %v719, %v456
      %v724 = vcombine.low %v720, %v721
      %v726 = vadd.f32 %v711, %v724
      %727 = vrot.lane.b32.xlu0 %v617, 111
      %v728 = vpop.permute.xlu0 %727
      %729 = vrot.lane.b32.xlu0 %v620, 111
      %v730 = vpop.permute.xlu0 %729
      %v731 = vsel %vm469, %v728, %v730
      %v732 = vsel %vm469, %v730, %v728
      %v733 = vmul.f32 %v731, %v475
      %v734 = vmul.f32 %v732, %v479
      %v735 = vmul.f32 %v733, %v484
      %v736 = vmul.f32 %v734, %v484
      %v739 = vcombine.low %v735, %v736
      %v741 = vadd.f32 %v726, %v739
      %v743 = vlaneseq
      %v744 = vshrl.u32 %v743, 7
      %v745 = vsub.s32 0, %v744
      %v746 = vrot.slane %v741, %v745
      %v747 = vlaneseq
      %v748 = vshrl.u32 %v747, 7
      %v749 = vsub.s32 4, %v748
      %v750 = vrot.slane %v741, %v749
      %v753 = vlaneseq
      %v754 = vshrl.u32 %v753, 7
      %v755 = vsub.s32 0, %v754
      %v756 = vrot.slane %v746, %v755
      %v757 = vlaneseq
      %v758 = vshrl.u32 %v757, 7
      %v759 = vsub.s32 0, %v758
      %v760 = vrot.slane %v750, %v759
      %v761 = vmul.f32 %v496, %v756
      %v762 = vmul.f32 %v496, %v760
      %v763 = vlaneseq
      %v764 = vshrl.u32 %v763, 7
      %v765 = vsub.s32 1, %v764
      %v766 = vrot.slane %v741, %v765
      %v767 = vlaneseq
      %v768 = vshrl.u32 %v767, 7
      %v769 = vsub.s32 5, %v768
      %v770 = vrot.slane %v741, %v769
      %v773 = vlaneseq
      %v774 = vshrl.u32 %v773, 7
      %v775 = vsub.s32 1, %v774
      %v776 = vrot.slane %v766, %v775
      %v777 = vlaneseq
      %v778 = vshrl.u32 %v777, 7
      %v779 = vsub.s32 1, %v778
      %v780 = vrot.slane %v770, %v779
      %v781 = vmul.f32 %v521, %v776
      %v782 = vmul.f32 %v521, %v780
      %v783 = vadd.f32 %v761, %v781
      %v784 = vadd.f32 %v762, %v782
      %v785 = vlaneseq
      %v786 = vshrl.u32 %v785, 7
      %v787 = vsub.s32 2, %v786
      %v788 = vrot.slane %v741, %v787
      %v789 = vlaneseq
      %v790 = vshrl.u32 %v789, 7
      %v791 = vsub.s32 6, %v790
      %v792 = vrot.slane %v741, %v791
      %v795 = vlaneseq
      %v796 = vshrl.u32 %v795, 7
      %v797 = vsub.s32 2, %v796
      %v798 = vrot.slane %v788, %v797
      %v799 = vlaneseq
      %v800 = vshrl.u32 %v799, 7
      %v801 = vsub.s32 2, %v800
      %v802 = vrot.slane %v792, %v801
      %v803 = vmul.f32 %v547, %v798
      %v804 = vmul.f32 %v547, %v802
      %v805 = vadd.f32 %v783, %v803
      %v806 = vadd.f32 %v784, %v804
      %v807 = vlaneseq
      %v808 = vshrl.u32 %v807, 7
      %v809 = vsub.s32 3, %v808
      %v810 = vrot.slane %v741, %v809
      %v811 = vlaneseq
      %v812 = vshrl.u32 %v811, 7
      %v813 = vsub.s32 7, %v812
      %v814 = vrot.slane %v741, %v813
      %v817 = vlaneseq
      %v818 = vshrl.u32 %v817, 7
      %v819 = vsub.s32 3, %v818
      %v820 = vrot.slane %v810, %v819
      %v821 = vlaneseq
      %v822 = vshrl.u32 %v821, 7
      %v823 = vsub.s32 3, %v822
      %v824 = vrot.slane %v814, %v823
      %v825 = vmul.f32 %v573, %v820
      %v826 = vmul.f32 %v573, %v824
      %v827 = vadd.f32 %v805, %v825
      %v828 = vadd.f32 %v806, %v826
      %v829 = vpack.c.bf16 %v827, %v827
      %v830 = vpack.c.bf16 %v828, %v828
      %v833 = vunpack.c.l.b16 %v829
      %v834 = vunpack.c.l.b16 %v830
      %v835 = vpack.c.b16 %v834, %v833
      %s837 = scalar_lea.vmem %s238, 8
      %838 = vst [vmem:[%s837] sm:$0xff] %v835
      %v839 = vadd.f32 %v827, %v828
      %840 = vadd.xlane.f32.xlu0 %v839
      %v841 = vpop.xlane.xlu0 %840
      %v842 = vadd.f32 %v609, %v841
      %v843 = vmul.f32 %v827, %v827
      %v844 = vmul.f32 %v828, %v828
      %v845 = vadd.f32 %v843, %v844
      %846 = vadd.xlane.f32.xlu0 %v845
      %v847 = vpop.xlane.xlu0 %846
      %v848 = vadd.f32 %v615, %v847
      %s849 = scalar_lea.vmem %s231, 16
      %v850 = vld [vmem:[%s849] sm:$0xff]
      %v851 = vmul.f32 %v850, %v261
      %v853 = vcombine.high %v850, %v850
      %855 = vrot.lane.b32.xlu0 %v850, 17
      %v856 = vpop.permute.xlu0 %855
      %857 = vrot.lane.b32.xlu0 %v853, 17
      %v858 = vpop.permute.xlu0 %857
      %v859 = vsel %vm273, %v856, %v858
      %v860 = vsel %vm273, %v858, %v856
      %v861 = vmul.f32 %v860, %v279
      %v862 = vmul.f32 %v859, %v283
      %v863 = vmul.f32 %v861, %v288
      %v864 = vmul.f32 %v862, %v288
      %v867 = vcombine.low %v863, %v864
      %v869 = vadd.f32 %v851, %v867
      %870 = vrot.lane.b32.xlu0 %v850, 16
      %v871 = vpop.permute.xlu0 %870
      %872 = vrot.lane.b32.xlu0 %v853, 16
      %v873 = vpop.permute.xlu0 %872
      %v874 = vsel %vm301, %v871, %v873
      %v875 = vsel %vm301, %v873, %v871
      %v876 = vmul.f32 %v875, %v307
      %v877 = vmul.f32 %v874, %v311
      %v878 = vmul.f32 %v876, %v316
      %v879 = vmul.f32 %v877, %v316
      %v882 = vcombine.low %v878, %v879
      %v884 = vadd.f32 %v869, %v882
      %885 = vrot.lane.b32.xlu0 %v850, 15
      %v886 = vpop.permute.xlu0 %885
      %887 = vrot.lane.b32.xlu0 %v853, 15
      %v888 = vpop.permute.xlu0 %887
      %v889 = vsel %vm329, %v886, %v888
      %v890 = vsel %vm329, %v888, %v886
      %v891 = vmul.f32 %v890, %v335
      %v892 = vmul.f32 %v889, %v339
      %v893 = vmul.f32 %v891, %v344
      %v894 = vmul.f32 %v892, %v344
      %v897 = vcombine.low %v893, %v894
      %v899 = vadd.f32 %v884, %v897
      %900 = vrot.lane.b32.xlu0 %v850, 1
      %v901 = vpop.permute.xlu0 %900
      %902 = vrot.lane.b32.xlu0 %v853, 1
      %v903 = vpop.permute.xlu0 %902
      %v904 = vsel %vm357, %v901, %v903
      %v905 = vsel %vm357, %v903, %v901
      %v906 = vmul.f32 %v905, %v363
      %v907 = vmul.f32 %v904, %v367
      %v908 = vmul.f32 %v906, %v372
      %v909 = vmul.f32 %v907, %v372
      %v912 = vcombine.low %v908, %v909
      %v914 = vadd.f32 %v899, %v912
      %915 = vrot.lane.b32.xlu0 %v850, 127
      %v916 = vpop.permute.xlu0 %915
      %917 = vrot.lane.b32.xlu0 %v853, 127
      %v918 = vpop.permute.xlu0 %917
      %v919 = vsel %vm385, %v916, %v918
      %v920 = vsel %vm385, %v918, %v916
      %v921 = vmul.f32 %v919, %v391
      %v922 = vmul.f32 %v920, %v395
      %v923 = vmul.f32 %v921, %v400
      %v924 = vmul.f32 %v922, %v400
      %v927 = vcombine.low %v923, %v924
      %v929 = vadd.f32 %v914, %v927
      %930 = vrot.lane.b32.xlu0 %v850, 113
      %v931 = vpop.permute.xlu0 %930
      %932 = vrot.lane.b32.xlu0 %v853, 113
      %v933 = vpop.permute.xlu0 %932
      %v934 = vsel %vm413, %v931, %v933
      %v935 = vsel %vm413, %v933, %v931
      %v936 = vmul.f32 %v934, %v419
      %v937 = vmul.f32 %v935, %v423
      %v938 = vmul.f32 %v936, %v428
      %v939 = vmul.f32 %v937, %v428
      %v942 = vcombine.low %v938, %v939
      %v944 = vadd.f32 %v929, %v942
      %945 = vrot.lane.b32.xlu0 %v850, 112
      %v946 = vpop.permute.xlu0 %945
      %947 = vrot.lane.b32.xlu0 %v853, 112
      %v948 = vpop.permute.xlu0 %947
      %v949 = vsel %vm441, %v946, %v948
      %v950 = vsel %vm441, %v948, %v946
      %v951 = vmul.f32 %v949, %v447
      %v952 = vmul.f32 %v950, %v451
      %v953 = vmul.f32 %v951, %v456
      %v954 = vmul.f32 %v952, %v456
      %v957 = vcombine.low %v953, %v954
      %v959 = vadd.f32 %v944, %v957
      %960 = vrot.lane.b32.xlu0 %v850, 111
      %v961 = vpop.permute.xlu0 %960
      %962 = vrot.lane.b32.xlu0 %v853, 111
      %v963 = vpop.permute.xlu0 %962
      %v964 = vsel %vm469, %v961, %v963
      %v965 = vsel %vm469, %v963, %v961
      %v966 = vmul.f32 %v964, %v475
      %v967 = vmul.f32 %v965, %v479
      %v968 = vmul.f32 %v966, %v484
      %v969 = vmul.f32 %v967, %v484
      %v972 = vcombine.low %v968, %v969
      %v974 = vadd.f32 %v959, %v972
      %v976 = vlaneseq
      %v977 = vshrl.u32 %v976, 7
      %v978 = vsub.s32 0, %v977
      %v979 = vrot.slane %v974, %v978
      %v980 = vlaneseq
      %v981 = vshrl.u32 %v980, 7
      %v982 = vsub.s32 4, %v981
      %v983 = vrot.slane %v974, %v982
      %v986 = vlaneseq
      %v987 = vshrl.u32 %v986, 7
      %v988 = vsub.s32 0, %v987
      %v989 = vrot.slane %v979, %v988
      %v990 = vlaneseq
      %v991 = vshrl.u32 %v990, 7
      %v992 = vsub.s32 0, %v991
      %v993 = vrot.slane %v983, %v992
      %v994 = vmul.f32 %v496, %v989
      %v995 = vmul.f32 %v496, %v993
      %v996 = vlaneseq
      %v997 = vshrl.u32 %v996, 7
      %v998 = vsub.s32 1, %v997
      %v999 = vrot.slane %v974, %v998
      %v1000 = vlaneseq
      %v1001 = vshrl.u32 %v1000, 7
      %v1002 = vsub.s32 5, %v1001
      %v1003 = vrot.slane %v974, %v1002
      %v1006 = vlaneseq
      %v1007 = vshrl.u32 %v1006, 7
      %v1008 = vsub.s32 1, %v1007
      %v1009 = vrot.slane %v999, %v1008
      %v1010 = vlaneseq
      %v1011 = vshrl.u32 %v1010, 7
      %v1012 = vsub.s32 1, %v1011
      %v1013 = vrot.slane %v1003, %v1012
      %v1014 = vmul.f32 %v521, %v1009
      %v1015 = vmul.f32 %v521, %v1013
      %v1016 = vadd.f32 %v994, %v1014
      %v1017 = vadd.f32 %v995, %v1015
      %v1018 = vlaneseq
      %v1019 = vshrl.u32 %v1018, 7
      %v1020 = vsub.s32 2, %v1019
      %v1021 = vrot.slane %v974, %v1020
      %v1022 = vlaneseq
      %v1023 = vshrl.u32 %v1022, 7
      %v1024 = vsub.s32 6, %v1023
      %v1025 = vrot.slane %v974, %v1024
      %v1028 = vlaneseq
      %v1029 = vshrl.u32 %v1028, 7
      %v1030 = vsub.s32 2, %v1029
      %v1031 = vrot.slane %v1021, %v1030
      %v1032 = vlaneseq
      %v1033 = vshrl.u32 %v1032, 7
      %v1034 = vsub.s32 2, %v1033
      %v1035 = vrot.slane %v1025, %v1034
      %v1036 = vmul.f32 %v547, %v1031
      %v1037 = vmul.f32 %v547, %v1035
      %v1038 = vadd.f32 %v1016, %v1036
      %v1039 = vadd.f32 %v1017, %v1037
      %v1040 = vlaneseq
      %v1041 = vshrl.u32 %v1040, 7
      %v1042 = vsub.s32 3, %v1041
      %v1043 = vrot.slane %v974, %v1042
      %v1044 = vlaneseq
      %v1045 = vshrl.u32 %v1044, 7
      %v1046 = vsub.s32 7, %v1045
      %v1047 = vrot.slane %v974, %v1046
      %v1050 = vlaneseq
      %v1051 = vshrl.u32 %v1050, 7
      %v1052 = vsub.s32 3, %v1051
      %v1053 = vrot.slane %v1043, %v1052
      %v1054 = vlaneseq
      %v1055 = vshrl.u32 %v1054, 7
      %v1056 = vsub.s32 3, %v1055
      %v1057 = vrot.slane %v1047, %v1056
      %v1058 = vmul.f32 %v573, %v1053
      %v1059 = vmul.f32 %v573, %v1057
      %v1060 = vadd.f32 %v1038, %v1058
      %v1061 = vadd.f32 %v1039, %v1059
      %v1062 = vpack.c.bf16 %v1060, %v1060
      %v1063 = vpack.c.bf16 %v1061, %v1061
      %v1066 = vunpack.c.l.b16 %v1062
      %v1067 = vunpack.c.l.b16 %v1063
      %v1068 = vpack.c.b16 %v1067, %v1066
      %s1070 = scalar_lea.vmem %s238, 16
      %1071 = vst [vmem:[%s1070] sm:$0xff] %v1068
      %v1072 = vadd.f32 %v1060, %v1061
      %1073 = vadd.xlane.f32.xlu0 %v1072
      %v1074 = vpop.xlane.xlu0 %1073
      %v1075 = vadd.f32 %v842, %v1074
      %v1076 = vmul.f32 %v1060, %v1060
      %v1077 = vmul.f32 %v1061, %v1061
      %v1078 = vadd.f32 %v1076, %v1077
      %1079 = vadd.xlane.f32.xlu0 %v1078
      %v1080 = vpop.xlane.xlu0 %1079
      %v1081 = vadd.f32 %v848, %v1080
      %s1082 = scalar_lea.vmem %s231, 24
      %v1083 = vld [vmem:[%s1082] sm:$0xff]
      %v1084 = vmul.f32 %v1083, %v261
      %v1086 = vcombine.high %v1083, %v1083
      %1088 = vrot.lane.b32.xlu0 %v1083, 17
      %v1089 = vpop.permute.xlu0 %1088
      %1090 = vrot.lane.b32.xlu0 %v1086, 17
      %v1091 = vpop.permute.xlu0 %1090
      %v1092 = vsel %vm273, %v1089, %v1091
      %v1093 = vsel %vm273, %v1091, %v1089
      %v1094 = vmul.f32 %v1093, %v279
      %v1095 = vmul.f32 %v1092, %v283
      %v1096 = vmul.f32 %v1094, %v288
      %v1097 = vmul.f32 %v1095, %v288
      %v1100 = vcombine.low %v1096, %v1097
      %v1102 = vadd.f32 %v1084, %v1100
      %1103 = vrot.lane.b32.xlu0 %v1083, 16
      %v1104 = vpop.permute.xlu0 %1103
      %1105 = vrot.lane.b32.xlu0 %v1086, 16
      %v1106 = vpop.permute.xlu0 %1105
      %v1107 = vsel %vm301, %v1104, %v1106
      %v1108 = vsel %vm301, %v1106, %v1104
      %v1109 = vmul.f32 %v1108, %v307
      %v1110 = vmul.f32 %v1107, %v311
      %v1111 = vmul.f32 %v1109, %v316
      %v1112 = vmul.f32 %v1110, %v316
      %v1115 = vcombine.low %v1111, %v1112
      %v1117 = vadd.f32 %v1102, %v1115
      %1118 = vrot.lane.b32.xlu0 %v1083, 15
      %v1119 = vpop.permute.xlu0 %1118
      %1120 = vrot.lane.b32.xlu0 %v1086, 15
      %v1121 = vpop.permute.xlu0 %1120
      %v1122 = vsel %vm329, %v1119, %v1121
      %v1123 = vsel %vm329, %v1121, %v1119
      %v1124 = vmul.f32 %v1123, %v335
      %v1125 = vmul.f32 %v1122, %v339
      %v1126 = vmul.f32 %v1124, %v344
      %v1127 = vmul.f32 %v1125, %v344
      %v1130 = vcombine.low %v1126, %v1127
      %v1132 = vadd.f32 %v1117, %v1130
      %1133 = vrot.lane.b32.xlu0 %v1083, 1
      %v1134 = vpop.permute.xlu0 %1133
      %1135 = vrot.lane.b32.xlu0 %v1086, 1
      %v1136 = vpop.permute.xlu0 %1135
      %v1137 = vsel %vm357, %v1134, %v1136
      %v1138 = vsel %vm357, %v1136, %v1134
      %v1139 = vmul.f32 %v1138, %v363
      %v1140 = vmul.f32 %v1137, %v367
      %v1141 = vmul.f32 %v1139, %v372
      %v1142 = vmul.f32 %v1140, %v372
      %v1145 = vcombine.low %v1141, %v1142
      %v1147 = vadd.f32 %v1132, %v1145
      %1148 = vrot.lane.b32.xlu0 %v1083, 127
      %v1149 = vpop.permute.xlu0 %1148
      %1150 = vrot.lane.b32.xlu0 %v1086, 127
      %v1151 = vpop.permute.xlu0 %1150
      %v1152 = vsel %vm385, %v1149, %v1151
      %v1153 = vsel %vm385, %v1151, %v1149
      %v1154 = vmul.f32 %v1152, %v391
      %v1155 = vmul.f32 %v1153, %v395
      %v1156 = vmul.f32 %v1154, %v400
      %v1157 = vmul.f32 %v1155, %v400
      %v1160 = vcombine.low %v1156, %v1157
      %v1162 = vadd.f32 %v1147, %v1160
      %1163 = vrot.lane.b32.xlu0 %v1083, 113
      %v1164 = vpop.permute.xlu0 %1163
      %1165 = vrot.lane.b32.xlu0 %v1086, 113
      %v1166 = vpop.permute.xlu0 %1165
      %v1167 = vsel %vm413, %v1164, %v1166
      %v1168 = vsel %vm413, %v1166, %v1164
      %v1169 = vmul.f32 %v1167, %v419
      %v1170 = vmul.f32 %v1168, %v423
      %v1171 = vmul.f32 %v1169, %v428
      %v1172 = vmul.f32 %v1170, %v428
      %v1175 = vcombine.low %v1171, %v1172
      %v1177 = vadd.f32 %v1162, %v1175
      %1178 = vrot.lane.b32.xlu0 %v1083, 112
      %v1179 = vpop.permute.xlu0 %1178
      %1180 = vrot.lane.b32.xlu0 %v1086, 112
      %v1181 = vpop.permute.xlu0 %1180
      %v1182 = vsel %vm441, %v1179, %v1181
      %v1183 = vsel %vm441, %v1181, %v1179
      %v1184 = vmul.f32 %v1182, %v447
      %v1185 = vmul.f32 %v1183, %v451
      %v1186 = vmul.f32 %v1184, %v456
      %v1187 = vmul.f32 %v1185, %v456
      %v1190 = vcombine.low %v1186, %v1187
      %v1192 = vadd.f32 %v1177, %v1190
      %1193 = vrot.lane.b32.xlu0 %v1083, 111
      %v1194 = vpop.permute.xlu0 %1193
      %1195 = vrot.lane.b32.xlu0 %v1086, 111
      %v1196 = vpop.permute.xlu0 %1195
      %v1197 = vsel %vm469, %v1194, %v1196
      %v1198 = vsel %vm469, %v1196, %v1194
      %v1199 = vmul.f32 %v1197, %v475
      %v1200 = vmul.f32 %v1198, %v479
      %v1201 = vmul.f32 %v1199, %v484
      %v1202 = vmul.f32 %v1200, %v484
      %v1205 = vcombine.low %v1201, %v1202
      %v1207 = vadd.f32 %v1192, %v1205
      %v1209 = vlaneseq
      %v1210 = vshrl.u32 %v1209, 7
      %v1211 = vsub.s32 0, %v1210
      %v1212 = vrot.slane %v1207, %v1211
      %v1213 = vlaneseq
      %v1214 = vshrl.u32 %v1213, 7
      %v1215 = vsub.s32 4, %v1214
      %v1216 = vrot.slane %v1207, %v1215
      %v1219 = vlaneseq
      %v1220 = vshrl.u32 %v1219, 7
      %v1221 = vsub.s32 0, %v1220
      %v1222 = vrot.slane %v1212, %v1221
      %v1223 = vlaneseq
      %v1224 = vshrl.u32 %v1223, 7
      %v1225 = vsub.s32 0, %v1224
      %v1226 = vrot.slane %v1216, %v1225
      %v1227 = vmul.f32 %v496, %v1222
      %v1228 = vmul.f32 %v496, %v1226
      %v1229 = vlaneseq
      %v1230 = vshrl.u32 %v1229, 7
      %v1231 = vsub.s32 1, %v1230
      %v1232 = vrot.slane %v1207, %v1231
      %v1233 = vlaneseq
      %v1234 = vshrl.u32 %v1233, 7
      %v1235 = vsub.s32 5, %v1234
      %v1236 = vrot.slane %v1207, %v1235
      %v1239 = vlaneseq
      %v1240 = vshrl.u32 %v1239, 7
      %v1241 = vsub.s32 1, %v1240
      %v1242 = vrot.slane %v1232, %v1241
      %v1243 = vlaneseq
      %v1244 = vshrl.u32 %v1243, 7
      %v1245 = vsub.s32 1, %v1244
      %v1246 = vrot.slane %v1236, %v1245
      %v1247 = vmul.f32 %v521, %v1242
      %v1248 = vmul.f32 %v521, %v1246
      %v1249 = vadd.f32 %v1227, %v1247
      %v1250 = vadd.f32 %v1228, %v1248
      %v1251 = vlaneseq
      %v1252 = vshrl.u32 %v1251, 7
      %v1253 = vsub.s32 2, %v1252
      %v1254 = vrot.slane %v1207, %v1253
      %v1255 = vlaneseq
      %v1256 = vshrl.u32 %v1255, 7
      %v1257 = vsub.s32 6, %v1256
      %v1258 = vrot.slane %v1207, %v1257
      %v1261 = vlaneseq
      %v1262 = vshrl.u32 %v1261, 7
      %v1263 = vsub.s32 2, %v1262
      %v1264 = vrot.slane %v1254, %v1263
      %v1265 = vlaneseq
      %v1266 = vshrl.u32 %v1265, 7
      %v1267 = vsub.s32 2, %v1266
      %v1268 = vrot.slane %v1258, %v1267
      %v1269 = vmul.f32 %v547, %v1264
      %v1270 = vmul.f32 %v547, %v1268
      %v1271 = vadd.f32 %v1249, %v1269
      %v1272 = vadd.f32 %v1250, %v1270
      %v1273 = vlaneseq
      %v1274 = vshrl.u32 %v1273, 7
      %v1275 = vsub.s32 3, %v1274
      %v1276 = vrot.slane %v1207, %v1275
      %v1277 = vlaneseq
      %v1278 = vshrl.u32 %v1277, 7
      %v1279 = vsub.s32 7, %v1278
      %v1280 = vrot.slane %v1207, %v1279
      %v1283 = vlaneseq
      %v1284 = vshrl.u32 %v1283, 7
      %v1285 = vsub.s32 3, %v1284
      %v1286 = vrot.slane %v1276, %v1285
      %v1287 = vlaneseq
      %v1288 = vshrl.u32 %v1287, 7
      %v1289 = vsub.s32 3, %v1288
      %v1290 = vrot.slane %v1280, %v1289
      %v1291 = vmul.f32 %v573, %v1286
      %v1292 = vmul.f32 %v573, %v1290
      %v1293 = vadd.f32 %v1271, %v1291
      %v1294 = vadd.f32 %v1272, %v1292
      %v1295 = vpack.c.bf16 %v1293, %v1293
      %v1296 = vpack.c.bf16 %v1294, %v1294
      %v1299 = vunpack.c.l.b16 %v1295
      %v1300 = vunpack.c.l.b16 %v1296
      %v1301 = vpack.c.b16 %v1300, %v1299
      %s1303 = scalar_lea.vmem %s238, 24
      %1304 = vst [vmem:[%s1303] sm:$0xff] %v1301
      %v1305 = vadd.f32 %v1293, %v1294
      %1306 = vadd.xlane.f32.xlu0 %v1305
      %v1307 = vpop.xlane.xlu0 %1306
      %v1308 = vadd.f32 %v1075, %v1307
      %v1309 = vmul.f32 %v1293, %v1293
      %v1310 = vmul.f32 %v1294, %v1294
      %v1311 = vadd.f32 %v1309, %v1310
      %1312 = vadd.xlane.f32.xlu0 %v1311
      %v1313 = vpop.xlane.xlu0 %1312
      %v1314 = vadd.f32 %v1081, %v1313
      %vm1315 = vcmask 7168
      %v1316 = vsel %vm1315, %v1308, %v1314
      %vm1317 = vcmask 15360
      %1318 = vst.msk [vmem:[%s243] sm:$0xff] %vm1317, %v1316
      %s1319 = smul.u32 4, %s17
      %p1320 = scmp.lt.s32.totalorder %s1319, 7
      %s1321 = scalar_select %p1320, %s1319, 7
      %s1322 = smul.addr %s1321, 2
      %s1323 = smul.addr %s1322, 4
      %s1324 = scalar_lea.vmem %s4, %s1323
      %p1325 = scmp.lt.s32.totalorder %s17, 1
      %s1326 = scalar_select %p1325, %s17, 1
      %s1327 = smul.addr %s1326, 8
      %s1328 = scalar_lea.vmem %s5, %s1327
      // Predicated region
      $region37: #{_lambda_.3} parent=35 // pred_check
        %p1329 = pneg %p124
      $region38: #{_lambda_.3} parent=35 // pred_check_branch
        %1331 = sbr.rel (%p1329) target = $region40
      $region39: #{_lambda_.3} parent=35 // pred_region
        %s1332 = smul.u32 4, %s17
      $region40: #{_lambda_.3} parent=35 // pred_fallthru
        _
      // Predicated region
      $region41: #{_lambda_.3} parent=35 // pred_check
        %p1333 = pneg %p150
      $region42: #{_lambda_.3} parent=35 // pred_check_branch
        %1335 = sbr.rel (%p1333) target = $region44
      $region43: #{_lambda_.3} parent=35 // pred_region
        _
      $region44: #{_lambda_.3} parent=35 // pred_fallthru
        _
    $region36: #{_lambda_.3} parent=5 // pred_fallthru
      _
    %p1336 = scmp.le.s32.totalorder 2, %s12
    // Predicated region
    $region45: #{_lambda_.3} parent=5 // pred_check
      %p1337 = pneg %p1336
    $region46: #{_lambda_.3} parent=5 // pred_check_branch
      %1339 = sbr.rel (%p1337) target = $region48
    $region47: #{_lambda_.3} parent=5 // pred_region
      %s1340 = ssub.s32 %s12, 2
      // Predicated region
      $region49: #{_lambda_.3} parent=47 // pred_check
        %p1341 = pneg %p130
      $region50: #{_lambda_.3} parent=47 // pred_check_branch
        %1343 = sbr.rel (%p1341) target = $region52
      $region51: #{_lambda_.3} parent=47 // pred_region
        %s1344 = smul.u32 4, %s18
        %p1345 = scmp.lt.s32.totalorder %s1344, 7
        %s1346 = scalar_select %p1345, %s1344, 7
        %s1347 = smul.addr %s1346, 2
        %s1348 = smul.addr %s1347, 4
        %s1349 = scalar_lea.vmem %s4, %s1348
      $region52: #{_lambda_.3} parent=47 // pred_fallthru
        _
      // Predicated region
      $region53: #{_lambda_.3} parent=47 // pred_check
        %p1350 = pneg %p156
      $region54: #{_lambda_.3} parent=47 // pred_check_branch
        %1352 = sbr.rel (%p1350) target = $region56
      $region55: #{_lambda_.3} parent=47 // pred_region
        %p1353 = scmp.lt.s32.totalorder %s18, 1
        %s1354 = scalar_select %p1353, %s18, 1
        %s1355 = smul.addr %s1354, 8
        %s1356 = scalar_lea.vmem %s5, %s1355
      $region56: #{_lambda_.3} parent=47 // pred_fallthru
        _
    $region48: #{_lambda_.3} parent=5 // pred_fallthru
      _
  $region6: #{_lambda_.3} parent=0 // loop_footer
    %s16 = sadd.s32 1, %s12
  $region7: #{_lambda_.3} parent=0 // loop_footer_branch
    %11 = sbr.rel target = $region3
  $region8: #{_lambda_.3} parent=0 // loop_exit
    _

// kernel: _lambda_.4
$region0: #{_lambda_.4}
  #allocation0 [shape = 'u32[]', space=smem, size = 0x4, offset = 0x4, fixed_abs, tag = 'smem constant byte address 0x4 - core index']
  #allocation1 [shape = 'u32[144,128]{1,0:T(1,128)}', space=vmem, size = 0x12000, scoped, tag = 'internal scratch']
  %s0 = inlined_call_operand.vmem [shape: bf16[8,8,256], index: 0, kind: input, shape index: {}]
  %s1 = inlined_call_operand.vmem [shape: f32[9,256], index: 1, kind: input, shape index: {}]
  %s2 = inlined_call_operand.vmem [shape: f32[8,1], index: 2, kind: input, shape index: {}]
  %s3 = inlined_call_operand.vmem [shape: f32[8,1], index: 3, kind: input, shape index: {}]
  %s4 = inlined_call_operand.vmem [shape: f32[8,9], index: 4, kind: input, shape index: {}]
  %s5 = inlined_call_operand.vmem [shape: f32[8,8], index: 5, kind: input, shape index: {}]
  %s6 = inlined_call_operand.vmem [shape: bf16[8,8,256], index: 6, kind: output, shape index: {0}]
  %s7 = inlined_call_operand.vmem [shape: f32[2,8,2], index: 7, kind: output, shape index: {1}]
  %8 = xla_tuple %s6, %s7
  %s9 = sld [smem:[#allocation0]]
  $region65: #{_lambda_.4} parent=0
    _
  %s11 = ssub.s32 1, %s9
  %s12 = scalar_select 0, %s11, %s9
  loop: start=0, step=1, limit=4
  $region2: #{_lambda_.4} parent=0 // loop_pre_header
    _
  $region3: #{_lambda_.4} parent=0 // loop_header
    %s14 = sphi 0, %s18
    %p15 = scmp.ge.s32.totalorder %s14, 4
    %s24 = sphi 0, %s26
    %s27 = sphi 0, %s24
    %s28 = sphi 0, %s27
    %s44 = sphi 0, %s28
    %s48 = sphi 0, %s48
    %s50 = sphi 0, %s48
    %s51 = sphi 0, %s50
    %s65 = sphi 0, %s51
    %s69 = sphi 0, %s69
    %s71 = sphi 0, %s69
    %s72 = sphi 0, %s71
    %s86 = sphi 0, %s72
    %s90 = sphi 0, %s90
    %s92 = sphi 0, %s90
    %s93 = sphi 0, %s92
    %s107 = sphi 0, %s93
    %s111 = sphi 0, %s111
    %s113 = sphi 0, %s111
    %s114 = sphi 0, %s113
    %s128 = sphi 0, %s114
    %s132 = sphi 0, %s132
    %s134 = sphi 0, %s132
    %s135 = sphi 0, %s134
    %s149 = sphi 0, %s135
    %s155 = sphi 0, %s157
    %s158 = sphi 0, %s155
    %s159 = sphi 0, %s158
    %s175 = sphi 0, %s159
    %s181 = sphi 0, %s183
    %s184 = sphi 0, %s181
    %s185 = sphi 0, %s184
    %s201 = sphi 0, %s185
  $region4: #{_lambda_.4} parent=0 // loop_header_branch
    %17 = sbr.rel (%p15) target = $region8
  $region5: #{_lambda_.4} parent=0 // loop_body
    %s19 = ssub.s32 %s14, 1
    %s20 = ssub.s32 %s14, 2
    %s21 = sadd.s32 %s14, 1
    %s22 = ssub.s32 %s14, %s21
    %p23 = scmp.eq.s32.totalorder %s22, 0
    %s25 = sadd.s32 %s24, 1
    %s26 = scalar_select %p23, %s24, %s25
    %p29 = pneg %p23
    %p30 = scmp.eq.s32.totalorder %s14, 1
    %p31 = por %p29, %p30
    %p32 = scmp.ne.s32.totalorder %s24, %s27
    %p33 = scmp.eq.s32.totalorder %s14, 0
    %p34 = por %p32, %p33
    %p35 = scmp.ne.s32.totalorder %s24, %s27
    %p36 = scmp.eq.s32.totalorder %s19, 1
    %p37 = por %p35, %p36
    %p38 = scmp.ne.s32.totalorder %s27, %s28
    %p39 = scmp.eq.s32.totalorder %s19, 0
    %p40 = por %p38, %p39
    %p41 = scmp.ne.s32.totalorder %s27, %s28
    %p42 = scmp.eq.s32.totalorder %s20, 1
    %p43 = por %p41, %p42
    %p45 = scmp.ne.s32.totalorder %s28, %s44
    %p46 = scmp.eq.s32.totalorder %s20, 0
    %p47 = por %p45, %p46
    %s49 = sadd.s32 %s48, 1
    %p52 = scmp.eq.s32.totalorder %s14, 1
    %p53 = scmp.ne.s32.totalorder %s48, %s50
    %p54 = scmp.eq.s32.totalorder %s14, 0
    %p55 = por %p53, %p54
    %p56 = scmp.ne.s32.totalorder %s48, %s50
    %p57 = scmp.eq.s32.totalorder %s19, 1
    %p58 = por %p56, %p57
    %p59 = scmp.ne.s32.totalorder %s50, %s51
    %p60 = scmp.eq.s32.totalorder %s19, 0
    %p61 = por %p59, %p60
    %p62 = scmp.ne.s32.totalorder %s50, %s51
    %p63 = scmp.eq.s32.totalorder %s20, 1
    %p64 = por %p62, %p63
    %p66 = scmp.ne.s32.totalorder %s51, %s65
    %p67 = scmp.eq.s32.totalorder %s20, 0
    %p68 = por %p66, %p67
    %s70 = sadd.s32 %s69, 1
    %p73 = scmp.eq.s32.totalorder %s14, 1
    %p74 = scmp.ne.s32.totalorder %s69, %s71
    %p75 = scmp.eq.s32.totalorder %s14, 0
    %p76 = por %p74, %p75
    %p77 = scmp.ne.s32.totalorder %s69, %s71
    %p78 = scmp.eq.s32.totalorder %s19, 1
    %p79 = por %p77, %p78
    %p80 = scmp.ne.s32.totalorder %s71, %s72
    %p81 = scmp.eq.s32.totalorder %s19, 0
    %p82 = por %p80, %p81
    %p83 = scmp.ne.s32.totalorder %s71, %s72
    %p84 = scmp.eq.s32.totalorder %s20, 1
    %p85 = por %p83, %p84
    %p87 = scmp.ne.s32.totalorder %s72, %s86
    %p88 = scmp.eq.s32.totalorder %s20, 0
    %p89 = por %p87, %p88
    %s91 = sadd.s32 %s90, 1
    %p94 = scmp.eq.s32.totalorder %s14, 1
    %p95 = scmp.ne.s32.totalorder %s90, %s92
    %p96 = scmp.eq.s32.totalorder %s14, 0
    %p97 = por %p95, %p96
    %p98 = scmp.ne.s32.totalorder %s90, %s92
    %p99 = scmp.eq.s32.totalorder %s19, 1
    %p100 = por %p98, %p99
    %p101 = scmp.ne.s32.totalorder %s92, %s93
    %p102 = scmp.eq.s32.totalorder %s19, 0
    %p103 = por %p101, %p102
    %p104 = scmp.ne.s32.totalorder %s92, %s93
    %p105 = scmp.eq.s32.totalorder %s20, 1
    %p106 = por %p104, %p105
    %p108 = scmp.ne.s32.totalorder %s93, %s107
    %p109 = scmp.eq.s32.totalorder %s20, 0
    %p110 = por %p108, %p109
    %s112 = sadd.s32 %s111, 1
    %p115 = scmp.eq.s32.totalorder %s14, 1
    %p116 = scmp.ne.s32.totalorder %s111, %s113
    %p117 = scmp.eq.s32.totalorder %s14, 0
    %p118 = por %p116, %p117
    %p119 = scmp.ne.s32.totalorder %s111, %s113
    %p120 = scmp.eq.s32.totalorder %s19, 1
    %p121 = por %p119, %p120
    %p122 = scmp.ne.s32.totalorder %s113, %s114
    %p123 = scmp.eq.s32.totalorder %s19, 0
    %p124 = por %p122, %p123
    %p125 = scmp.ne.s32.totalorder %s113, %s114
    %p126 = scmp.eq.s32.totalorder %s20, 1
    %p127 = por %p125, %p126
    %p129 = scmp.ne.s32.totalorder %s114, %s128
    %p130 = scmp.eq.s32.totalorder %s20, 0
    %p131 = por %p129, %p130
    %s133 = sadd.s32 %s132, 1
    %p136 = scmp.eq.s32.totalorder %s14, 1
    %p137 = scmp.ne.s32.totalorder %s132, %s134
    %p138 = scmp.eq.s32.totalorder %s14, 0
    %p139 = por %p137, %p138
    %p140 = scmp.ne.s32.totalorder %s132, %s134
    %p141 = scmp.eq.s32.totalorder %s19, 1
    %p142 = por %p140, %p141
    %p143 = scmp.ne.s32.totalorder %s134, %s135
    %p144 = scmp.eq.s32.totalorder %s19, 0
    %p145 = por %p143, %p144
    %p146 = scmp.ne.s32.totalorder %s134, %s135
    %p147 = scmp.eq.s32.totalorder %s20, 1
    %p148 = por %p146, %p147
    %p150 = scmp.ne.s32.totalorder %s135, %s149
    %p151 = scmp.eq.s32.totalorder %s20, 0
    %p152 = por %p150, %p151
    %s153 = ssub.s32 %s14, %s21
    %p154 = scmp.eq.s32.totalorder %s153, 0
    %s156 = sadd.s32 %s155, 1
    %s157 = scalar_select %p154, %s155, %s156
    %p160 = pneg %p154
    %p161 = scmp.eq.s32.totalorder %s14, 1
    %p162 = por %p160, %p161
    %p163 = scmp.ne.s32.totalorder %s155, %s158
    %p164 = scmp.eq.s32.totalorder %s14, 0
    %p165 = por %p163, %p164
    %p166 = scmp.ne.s32.totalorder %s155, %s158
    %p167 = scmp.eq.s32.totalorder %s19, 1
    %p168 = por %p166, %p167
    %p169 = scmp.ne.s32.totalorder %s158, %s159
    %p170 = scmp.eq.s32.totalorder %s19, 0
    %p171 = por %p169, %p170
    %p172 = scmp.ne.s32.totalorder %s158, %s159
    %p173 = scmp.eq.s32.totalorder %s20, 1
    %p174 = por %p172, %p173
    %p176 = scmp.ne.s32.totalorder %s159, %s175
    %p177 = scmp.eq.s32.totalorder %s20, 0
    %p178 = por %p176, %p177
    %s179 = ssub.s32 %s14, %s21
    %p180 = scmp.eq.s32.totalorder %s179, 0
    %s182 = sadd.s32 %s181, 1
    %s183 = scalar_select %p180, %s181, %s182
    %p186 = pneg %p180
    %p187 = scmp.eq.s32.totalorder %s14, 1
    %p188 = por %p186, %p187
    %p189 = scmp.ne.s32.totalorder %s181, %s184
    %p190 = scmp.eq.s32.totalorder %s14, 0
    %p191 = por %p189, %p190
    %p192 = scmp.ne.s32.totalorder %s181, %s184
    %p193 = scmp.eq.s32.totalorder %s19, 1
    %p194 = por %p192, %p193
    %p195 = scmp.ne.s32.totalorder %s184, %s185
    %p196 = scmp.eq.s32.totalorder %s19, 0
    %p197 = por %p195, %p196
    %p198 = scmp.ne.s32.totalorder %s184, %s185
    %p199 = scmp.eq.s32.totalorder %s20, 1
    %p200 = por %p198, %p199
    %p202 = scmp.ne.s32.totalorder %s185, %s201
    %p203 = scmp.eq.s32.totalorder %s20, 0
    %p204 = por %p202, %p203
    %p205 = scmp.le.s32.totalorder 1, %s14
    %p206 = scmp.lt.s32.totalorder %s14, 3
    %p207 = pnand %p205, %p206
    %p208 = pneg %p207
    // Predicated region
    $region9: #{_lambda_.4} parent=5 // pred_check
      _
    $region10: #{_lambda_.4} parent=5 // pred_check_branch
      %210 = sbr.rel (%p207) target = $region12
    $region11: #{_lambda_.4} parent=5 // pred_region
      %s211 = ssub.s32 %s14, 1
      // Predicated region
      $region13: #{_lambda_.4} parent=11 // pred_check
        %p212 = pneg %p61
      $region14: #{_lambda_.4} parent=11 // pred_check_branch
        %214 = sbr.rel (%p212) target = $region16
      $region15: #{_lambda_.4} parent=11 // pred_region
        _
      $region16: #{_lambda_.4} parent=11 // pred_fallthru
        _
      // Predicated region
      $region17: #{_lambda_.4} parent=11 // pred_check
        %p215 = pneg %p82
      $region18: #{_lambda_.4} parent=11 // pred_check_branch
        %217 = sbr.rel (%p215) target = $region20
      $region19: #{_lambda_.4} parent=11 // pred_region
        _
      $region20: #{_lambda_.4} parent=11 // pred_fallthru
        _
      // Predicated region
      $region21: #{_lambda_.4} parent=11 // pred_check
        %p218 = pneg %p103
      $region22: #{_lambda_.4} parent=11 // pred_check_branch
        %220 = sbr.rel (%p218) target = $region24
      $region23: #{_lambda_.4} parent=11 // pred_region
        _
      $region24: #{_lambda_.4} parent=11 // pred_fallthru
        _
      // Predicated region
      $region25: #{_lambda_.4} parent=11 // pred_check
        %p221 = pneg %p124
      $region26: #{_lambda_.4} parent=11 // pred_check_branch
        %223 = sbr.rel (%p221) target = $region28
      $region27: #{_lambda_.4} parent=11 // pred_region
        _
      $region28: #{_lambda_.4} parent=11 // pred_fallthru
        _
      // Predicated region
      $region29: #{_lambda_.4} parent=11 // pred_check
        %p224 = pneg %p145
      $region30: #{_lambda_.4} parent=11 // pred_check_branch
        %226 = sbr.rel (%p224) target = $region32
      $region31: #{_lambda_.4} parent=11 // pred_region
        _
      $region32: #{_lambda_.4} parent=11 // pred_fallthru
        _
    $region12: #{_lambda_.4} parent=5 // pred_fallthru
      _
    %p227 = scmp.lt.s32.totalorder %s14, 2
    // Predicated region
    $region33: #{_lambda_.4} parent=5 // pred_check
      %p228 = pneg %p227
    $region34: #{_lambda_.4} parent=5 // pred_check_branch
      %230 = sbr.rel (%p228) target = $region36
    $region35: #{_lambda_.4} parent=5 // pred_region
      // Predicated region
      $region37: #{_lambda_.4} parent=35 // pred_check
        %p231 = pneg %p34
      $region38: #{_lambda_.4} parent=35 // pred_check_branch
        %233 = sbr.rel (%p231) target = $region40
      $region39: #{_lambda_.4} parent=35 // pred_region
        %s234 = smul.u32 4, %s14
        %p235 = scmp.lt.s32.totalorder %s234, 7
        %s236 = scalar_select %p235, %s234, 7
        %s237 = smul.addr %s236, 2
        %s238 = smul.addr %s237, 4
        %s239 = scalar_lea.vmem %s0, %s238
        %s240 = smul.u32 4, %s14
      $region40: #{_lambda_.4} parent=35 // pred_fallthru
        _
    $region36: #{_lambda_.4} parent=5 // pred_fallthru
      _
    %p241 = scmp.le.s32.totalorder 1, %s14
    %p242 = scmp.lt.s32.totalorder %s14, 3
    %p243 = pnand %p241, %p242
    %p244 = pneg %p243
    // Predicated region
    $region41: #{_lambda_.4} parent=5 // pred_check
      _
    $region42: #{_lambda_.4} parent=5 // pred_check_branch
      %246 = sbr.rel (%p243) target = $region44
    $region43: #{_lambda_.4} parent=5 // pred_region
      %s247 = ssub.s32 %s14, 1
      %s248 = smul.u32 4, %s19
      %p249 = scmp.lt.s32.totalorder %s248, 7
      %s250 = scalar_select %p249, %s248, 7
      %s251 = smul.addr %s250, 2
      %s252 = smul.addr %s251, 4
      %s253 = scalar_lea.vmem %s0, %s252
      %p254 = pneg %p40
      %p255 = pneg %p37
      %p256 = pneg %p61
      %p257 = pneg %p58
      %p258 = pneg %p82
      %p259 = pneg %p79
      %p260 = pneg %p103
      %p261 = pneg %p100
      %p262 = pneg %p124
      %p263 = pneg %p121
      %p264 = pneg %p145
      %p265 = pneg %p142
      %p266 = pneg %p171
      %p267 = pneg %p168
      %s268 = smul.u32 4, %s19
      %p269 = scmp.lt.s32.totalorder %s268, 7
      %s270 = scalar_select %p269, %s268, 7
      %s271 = smul.addr %s270, 2
      %s272 = smul.addr %s271, 4
      %s273 = scalar_lea.vmem %s6, %s272
      %p274 = pneg %p197
      %p275 = pneg %p194
      %p276 = scmp.lt.s32.totalorder %s19, 1
      %s277 = scalar_select %p276, %s19, 1
      %s278 = smul.addr %s277, 8
      %s279 = scalar_lea.vmem %s7, %s278
      %s280 = smul.u32 4, %s19
      %p281 = scmp.lt.s32.totalorder %s280, 7
      %s282 = scalar_select %p281, %s280, 7
      %s283 = smul.addr %s282, 2
      %s284 = smul.addr %s283, 4
      %s285 = scalar_lea.vmem %s0, %s284
      %s286 = smul.u32 4, %s19
      %s287 = smul.u32 4, %s19
      %p288 = scmp.lt.s32.totalorder %s287, 7
      %s289 = scalar_select %p288, %s287, 7
      %s290 = smul.addr %s289, 2
      %s291 = smul.addr %s290, 4
      %s292 = scalar_lea.vmem %s6, %s291
      %s293 = smul.u32 4, %s19
      %p294 = scmp.lt.s32.totalorder %s19, 1
      %s295 = scalar_select %p294, %s19, 1
      %s296 = smul.addr %s295, 8
      %s297 = scalar_lea.vmem %s7, %s296
      %v298 = vld [vmem:[%s1] sm:$0xff]
      %v299 = vld [vmem:[%s1 + $0x8] sm:$0xff]
      %v300 = vld [vmem:[%s1 + $0x10] sm:$0x1]
      %v301 = vld [vmem:[%s1 + $0x18] sm:$0x1]
      %v302 = vld [vmem:[%s2] sm:$0xff]
      %v303 = vld [vmem:[%s3] sm:$0xff]
      %v304 = vld [vmem:[%s4] sm:$0xff]
      %v305 = vld [vmem:[%s5] sm:$0xff]
      %v306 = vld [vmem:[%s285] sm:$0xff]
      %v307 = vunpack.c.l.bf16 %v306
      %v308 = vunpack.c.h.bf16 %v306
      %310 = vset.pattern.permute.xlu0 0
      %311 = vperm.xlu0 %310, %v302
      %v312 = vpop.permute.xlu0 %311
      %v314 = vmul.f32 %v307, %v312
      %v315 = vmul.f32 %v308, %v312
      %317 = vset.pattern.permute.xlu0 0
      %318 = vperm.xlu0 %317, %v303
      %v319 = vpop.permute.xlu0 %318
      %v321 = vadd.f32 %v314, %v319
      %v322 = vadd.f32 %v315, %v319
      %v323 = vmax.f32 %v321, 0.0
      %v324 = vmax.f32 %v322, 0.0
      %326 = vset.pattern.permute.xlu0 4
      %327 = vperm.xlu0 %326, %v304
      %v328 = vpop.permute.xlu0 %327
      %v330 = vmul.f32 %v323, %v328
      %v331 = vmul.f32 %v324, %v328
      %332 = vrot.lane.b32.xlu0 %v323, 17
      %v333 = vpop.permute.xlu0 %332
      %334 = vrot.lane.b32.xlu0 %v324, 17
      %v335 = vpop.permute.xlu0 %334
      %v336 = vlaneseq
      %v337 = vand.u32 %v336, 127
      %vm338 = vcmp.lt.s32.totalorder %v337, 17
      %v339 = vsel %vm338, %v333, %v335
      %v340 = vsel %vm338, %v335, %v333
      %v341 = vlaneseq
      %v342 = vshrl.u32 %v341, 7
      %v343 = vsub.s32 0, %v342
      %v344 = vrot.slane %v298, %v343
      %v345 = vlaneseq
      %v346 = vshrl.u32 %v345, 7
      %v347 = vsub.s32 0, %v346
      %v348 = vrot.slane %v299, %v347
      %v349 = vmul.f32 %v340, %v344
      %v350 = vmul.f32 %v339, %v348
      %351 = vset.pattern.permute.xlu0 0
      %352 = vperm.xlu0 %351, %v304
      %v353 = vpop.permute.xlu0 %352
      %v355 = vmul.f32 %v349, %v353
      %v356 = vmul.f32 %v350, %v353
      %v357 = vadd.f32 %v330, %v355
      %v358 = vadd.f32 %v331, %v356
      %359 = vrot.lane.b32.xlu0 %v323, 16
      %v360 = vpop.permute.xlu0 %359
      %361 = vrot.lane.b32.xlu0 %v324, 16
      %v362 = vpop.permute.xlu0 %361
      %vm363 = vcmp.lt.s32.totalorder %v337, 16
      %v364 = vsel %vm363, %v360, %v362
      %v365 = vsel %vm363, %v362, %v360
      %v366 = vlaneseq
      %v367 = vshrl.u32 %v366, 7
      %v368 = vsub.s32 1, %v367
      %v369 = vrot.slane %v298, %v368
      %v370 = vlaneseq
      %v371 = vshrl.u32 %v370, 7
      %v372 = vsub.s32 1, %v371
      %v373 = vrot.slane %v299, %v372
      %v374 = vmul.f32 %v365, %v369
      %v375 = vmul.f32 %v364, %v373
      %376 = vset.pattern.permute.xlu0 1
      %377 = vperm.xlu0 %376, %v304
      %v378 = vpop.permute.xlu0 %377
      %v380 = vmul.f32 %v374, %v378
      %v381 = vmul.f32 %v375, %v378
      %v382 = vadd.f32 %v357, %v380
      %v383 = vadd.f32 %v358, %v381
      %384 = vrot.lane.b32.xlu0 %v323, 15
      %v385 = vpop.permute.xlu0 %384
      %386 = vrot.lane.b32.xlu0 %v324, 15
      %v387 = vpop.permute.xlu0 %386
      %vm388 = vcmp.lt.s32.totalorder %v337, 15
      %v389 = vsel %vm388, %v385, %v387
      %v390 = vsel %vm388, %v387, %v385
      %v391 = vlaneseq
      %v392 = vshrl.u32 %v391, 7
      %v393 = vsub.s32 2, %v392
      %v394 = vrot.slane %v298, %v393
      %v395 = vlaneseq
      %v396 = vshrl.u32 %v395, 7
      %v397 = vsub.s32 2, %v396
      %v398 = vrot.slane %v299, %v397
      %v399 = vmul.f32 %v390, %v394
      %v400 = vmul.f32 %v389, %v398
      %401 = vset.pattern.permute.xlu0 2
      %402 = vperm.xlu0 %401, %v304
      %v403 = vpop.permute.xlu0 %402
      %v405 = vmul.f32 %v399, %v403
      %v406 = vmul.f32 %v400, %v403
      %v407 = vadd.f32 %v382, %v405
      %v408 = vadd.f32 %v383, %v406
      %409 = vrot.lane.b32.xlu0 %v323, 1
      %v410 = vpop.permute.xlu0 %409
      %411 = vrot.lane.b32.xlu0 %v324, 1
      %v412 = vpop.permute.xlu0 %411
      %vm413 = vcmp.lt.s32.totalorder %v337, 1
      %v414 = vsel %vm413, %v410, %v412
      %v415 = vsel %vm413, %v412, %v410
      %v416 = vlaneseq
      %v417 = vshrl.u32 %v416, 7
      %v418 = vsub.s32 3, %v417
      %v419 = vrot.slane %v298, %v418
      %v420 = vlaneseq
      %v421 = vshrl.u32 %v420, 7
      %v422 = vsub.s32 3, %v421
      %v423 = vrot.slane %v299, %v422
      %v424 = vmul.f32 %v415, %v419
      %v425 = vmul.f32 %v414, %v423
      %426 = vset.pattern.permute.xlu0 3
      %427 = vperm.xlu0 %426, %v304
      %v428 = vpop.permute.xlu0 %427
      %v430 = vmul.f32 %v424, %v428
      %v431 = vmul.f32 %v425, %v428
      %v432 = vadd.f32 %v407, %v430
      %v433 = vadd.f32 %v408, %v431
      %434 = vrot.lane.b32.xlu0 %v323, 127
      %v435 = vpop.permute.xlu0 %434
      %436 = vrot.lane.b32.xlu0 %v324, 127
      %v437 = vpop.permute.xlu0 %436
      %vm438 = vcmp.lt.s32.totalorder %v337, 127
      %v439 = vsel %vm438, %v435, %v437
      %v440 = vsel %vm438, %v437, %v435
      %v441 = vlaneseq
      %v442 = vshrl.u32 %v441, 7
      %v443 = vsub.s32 5, %v442
      %v444 = vrot.slane %v298, %v443
      %v445 = vlaneseq
      %v446 = vshrl.u32 %v445, 7
      %v447 = vsub.s32 5, %v446
      %v448 = vrot.slane %v299, %v447
      %v449 = vmul.f32 %v439, %v444
      %v450 = vmul.f32 %v440, %v448
      %451 = vset.pattern.permute.xlu0 5
      %452 = vperm.xlu0 %451, %v304
      %v453 = vpop.permute.xlu0 %452
      %v455 = vmul.f32 %v449, %v453
      %v456 = vmul.f32 %v450, %v453
      %v457 = vadd.f32 %v432, %v455
      %v458 = vadd.f32 %v433, %v456
      %459 = vrot.lane.b32.xlu0 %v323, 113
      %v460 = vpop.permute.xlu0 %459
      %461 = vrot.lane.b32.xlu0 %v324, 113
      %v462 = vpop.permute.xlu0 %461
      %vm463 = vcmp.lt.s32.totalorder %v337, 113
      %v464 = vsel %vm463, %v460, %v462
      %v465 = vsel %vm463, %v462, %v460
      %v466 = vlaneseq
      %v467 = vshrl.u32 %v466, 7
      %v468 = vsub.s32 6, %v467
      %v469 = vrot.slane %v298, %v468
      %v470 = vlaneseq
      %v471 = vshrl.u32 %v470, 7
      %v472 = vsub.s32 6, %v471
      %v473 = vrot.slane %v299, %v472
      %v474 = vmul.f32 %v464, %v469
      %v475 = vmul.f32 %v465, %v473
      %476 = vset.pattern.permute.xlu0 6
      %477 = vperm.xlu0 %476, %v304
      %v478 = vpop.permute.xlu0 %477
      %v480 = vmul.f32 %v474, %v478
      %v481 = vmul.f32 %v475, %v478
      %v482 = vadd.f32 %v457, %v480
      %v483 = vadd.f32 %v458, %v481
      %484 = vrot.lane.b32.xlu0 %v323, 112
      %v485 = vpop.permute.xlu0 %484
      %486 = vrot.lane.b32.xlu0 %v324, 112
      %v487 = vpop.permute.xlu0 %486
      %vm488 = vcmp.lt.s32.totalorder %v337, 112
      %v489 = vsel %vm488, %v485, %v487
      %v490 = vsel %vm488, %v487, %v485
      %v491 = vlaneseq
      %v492 = vshrl.u32 %v491, 7
      %v493 = vsub.s32 7, %v492
      %v494 = vrot.slane %v298, %v493
      %v495 = vlaneseq
      %v496 = vshrl.u32 %v495, 7
      %v497 = vsub.s32 7, %v496
      %v498 = vrot.slane %v299, %v497
      %v499 = vmul.f32 %v489, %v494
      %v500 = vmul.f32 %v490, %v498
      %501 = vset.pattern.permute.xlu0 7
      %502 = vperm.xlu0 %501, %v304
      %v503 = vpop.permute.xlu0 %502
      %v505 = vmul.f32 %v499, %v503
      %v506 = vmul.f32 %v500, %v503
      %v507 = vadd.f32 %v482, %v505
      %v508 = vadd.f32 %v483, %v506
      %509 = vrot.lane.b32.xlu0 %v323, 111
      %v510 = vpop.permute.xlu0 %509
      %511 = vrot.lane.b32.xlu0 %v324, 111
      %v512 = vpop.permute.xlu0 %511
      %vm513 = vcmp.lt.s32.totalorder %v337, 111
      %v514 = vsel %vm513, %v510, %v512
      %v515 = vsel %vm513, %v512, %v510
      %v516 = vlaneseq
      %v517 = vshrl.u32 %v516, 7
      %v518 = vsub.s32 0, %v517
      %v519 = vrot.slane %v300, %v518
      %v520 = vlaneseq
      %v521 = vshrl.u32 %v520, 7
      %v522 = vsub.s32 0, %v521
      %v523 = vrot.slane %v301, %v522
      %v524 = vmul.f32 %v514, %v519
      %v525 = vmul.f32 %v515, %v523
      %526 = vset.pattern.permute.xlu0 8
      %527 = vperm.xlu0 %526, %v304
      %v528 = vpop.permute.xlu0 %527
      %v530 = vmul.f32 %v524, %v528
      %v531 = vmul.f32 %v525, %v528
      %v532 = vadd.f32 %v507, %v530
      %v533 = vadd.f32 %v508, %v531
      %535 = vset.pattern.permute.xlu0 0
      %536 = vperm.xlu0 %535, %v305
      %v537 = vpop.permute.xlu0 %536
      %v539 = vlaneseq
      %v540 = vshrl.u32 %v539, 7
      %v541 = vsub.s32 0, %v540
      %v542 = vrot.slane %v532, %v541
      %v543 = vlaneseq
      %v544 = vshrl.u32 %v543, 7
      %v545 = vsub.s32 0, %v544
      %v546 = vrot.slane %v533, %v545
      %v547 = vmul.f32 %v537, %v542
      %v548 = vmul.f32 %v537, %v546
      %549 = vset.pattern.permute.xlu0 1
      %550 = vperm.xlu0 %549, %v305
      %v551 = vpop.permute.xlu0 %550
      %v553 = vlaneseq
      %v554 = vshrl.u32 %v553, 7
      %v555 = vsub.s32 1, %v554
      %v556 = vrot.slane %v532, %v555
      %v557 = vlaneseq
      %v558 = vshrl.u32 %v557, 7
      %v559 = vsub.s32 1, %v558
      %v560 = vrot.slane %v533, %v559
      %v561 = vmul.f32 %v551, %v556
      %v562 = vmul.f32 %v551, %v560
      %v563 = vadd.f32 %v547, %v561
      %v564 = vadd.f32 %v548, %v562
      %565 = vset.pattern.permute.xlu0 2
      %566 = vperm.xlu0 %565, %v305
      %v567 = vpop.permute.xlu0 %566
      %v569 = vlaneseq
      %v570 = vshrl.u32 %v569, 7
      %v571 = vsub.s32 2, %v570
      %v572 = vrot.slane %v532, %v571
      %v573 = vlaneseq
      %v574 = vshrl.u32 %v573, 7
      %v575 = vsub.s32 2, %v574
      %v576 = vrot.slane %v533, %v575
      %v577 = vmul.f32 %v567, %v572
      %v578 = vmul.f32 %v567, %v576
      %v579 = vadd.f32 %v563, %v577
      %v580 = vadd.f32 %v564, %v578
      %581 = vset.pattern.permute.xlu0 3
      %582 = vperm.xlu0 %581, %v305
      %v583 = vpop.permute.xlu0 %582
      %v585 = vlaneseq
      %v586 = vshrl.u32 %v585, 7
      %v587 = vsub.s32 3, %v586
      %v588 = vrot.slane %v532, %v587
      %v589 = vlaneseq
      %v590 = vshrl.u32 %v589, 7
      %v591 = vsub.s32 3, %v590
      %v592 = vrot.slane %v533, %v591
      %v593 = vmul.f32 %v583, %v588
      %v594 = vmul.f32 %v583, %v592
      %v595 = vadd.f32 %v579, %v593
      %v596 = vadd.f32 %v580, %v594
      %597 = vset.pattern.permute.xlu0 4
      %598 = vperm.xlu0 %597, %v305
      %v599 = vpop.permute.xlu0 %598
      %v601 = vlaneseq
      %v602 = vshrl.u32 %v601, 7
      %v603 = vsub.s32 4, %v602
      %v604 = vrot.slane %v532, %v603
      %v605 = vlaneseq
      %v606 = vshrl.u32 %v605, 7
      %v607 = vsub.s32 4, %v606
      %v608 = vrot.slane %v533, %v607
      %v609 = vmul.f32 %v599, %v604
      %v610 = vmul.f32 %v599, %v608
      %v611 = vadd.f32 %v595, %v609
      %v612 = vadd.f32 %v596, %v610
      %613 = vset.pattern.permute.xlu0 5
      %614 = vperm.xlu0 %613, %v305
      %v615 = vpop.permute.xlu0 %614
      %v617 = vlaneseq
      %v618 = vshrl.u32 %v617, 7
      %v619 = vsub.s32 5, %v618
      %v620 = vrot.slane %v532, %v619
      %v621 = vlaneseq
      %v622 = vshrl.u32 %v621, 7
      %v623 = vsub.s32 5, %v622
      %v624 = vrot.slane %v533, %v623
      %v625 = vmul.f32 %v615, %v620
      %v626 = vmul.f32 %v615, %v624
      %v627 = vadd.f32 %v611, %v625
      %v628 = vadd.f32 %v612, %v626
      %629 = vset.pattern.permute.xlu0 6
      %630 = vperm.xlu0 %629, %v305
      %v631 = vpop.permute.xlu0 %630
      %v633 = vlaneseq
      %v634 = vshrl.u32 %v633, 7
      %v635 = vsub.s32 6, %v634
      %v636 = vrot.slane %v532, %v635
      %v637 = vlaneseq
      %v638 = vshrl.u32 %v637, 7
      %v639 = vsub.s32 6, %v638
      %v640 = vrot.slane %v533, %v639
      %v641 = vmul.f32 %v631, %v636
      %v642 = vmul.f32 %v631, %v640
      %v643 = vadd.f32 %v627, %v641
      %v644 = vadd.f32 %v628, %v642
      %645 = vset.pattern.permute.xlu0 7
      %646 = vperm.xlu0 %645, %v305
      %v647 = vpop.permute.xlu0 %646
      %v649 = vlaneseq
      %v650 = vshrl.u32 %v649, 7
      %v651 = vsub.s32 7, %v650
      %v652 = vrot.slane %v532, %v651
      %v653 = vlaneseq
      %v654 = vshrl.u32 %v653, 7
      %v655 = vsub.s32 7, %v654
      %v656 = vrot.slane %v533, %v655
      %v657 = vmul.f32 %v647, %v652
      %v658 = vmul.f32 %v647, %v656
      %v659 = vadd.f32 %v643, %v657
      %v660 = vadd.f32 %v644, %v658
      %v661 = vpack.c.bf16 %v659, %v659
      %v662 = vpack.c.bf16 %v660, %v660
      %v665 = vunpack.c.l.b16 %v661
      %v666 = vunpack.c.l.b16 %v662
      %v667 = vpack.c.b16 %v666, %v665
      %669 = vst [vmem:[%s292] sm:$0xff] %v667
      %v670 = vadd.f32 %v659, %v660
      %671 = vadd.xlane.f32.xlu0 %v670
      %v672 = vpop.xlane.xlu0 %671
      %v673 = vadd.f32 %v672, 0.0
      %v674 = vmul.f32 %v659, %v659
      %v675 = vmul.f32 %v660, %v660
      %v676 = vadd.f32 %v674, %v675
      %677 = vadd.xlane.f32.xlu0 %v676
      %v678 = vpop.xlane.xlu0 %677
      %v679 = vadd.f32 %v678, 0.0
      %s680 = scalar_lea.vmem %s285, 8
      %v681 = vld [vmem:[%s680] sm:$0xff]
      %v682 = vunpack.c.l.bf16 %v681
      %v683 = vunpack.c.h.bf16 %v681
      %v684 = vmul.f32 %v682, %v312
      %v685 = vmul.f32 %v683, %v312
      %v686 = vadd.f32 %v684, %v319
      %v687 = vadd.f32 %v685, %v319
      %v688 = vmax.f32 %v686, 0.0
      %v689 = vmax.f32 %v687, 0.0
      %v690 = vmul.f32 %v688, %v328
      %v691 = vmul.f32 %v689, %v328
      %692 = vrot.lane.b32.xlu0 %v688, 17
      %v693 = vpop.permute.xlu0 %692
      %694 = vrot.lane.b32.xlu0 %v689, 17
      %v695 = vpop.permute.xlu0 %694
      %v696 = vsel %vm338, %v693, %v695
      %v697 = vsel %vm338, %v695, %v693
      %v698 = vmul.f32 %v697, %v344
      %v699 = vmul.f32 %v696, %v348
      %v700 = vmul.f32 %v698, %v353
      %v701 = vmul.f32 %v699, %v353
      %v702 = vadd.f32 %v690, %v700
      %v703 = vadd.f32 %v691, %v701
      %704 = vrot.lane.b32.xlu0 %v688, 16
      %v705 = vpop.permute.xlu0 %704
      %706 = vrot.lane.b32.xlu0 %v689, 16
      %v707 = vpop.permute.xlu0 %706
      %v708 = vsel %vm363, %v705, %v707
      %v709 = vsel %vm363, %v707, %v705
      %v710 = vmul.f32 %v709, %v369
      %v711 = vmul.f32 %v708, %v373
      %v712 = vmul.f32 %v710, %v378
      %v713 = vmul.f32 %v711, %v378
      %v714 = vadd.f32 %v702, %v712
      %v715 = vadd.f32 %v703, %v713
      %716 = vrot.lane.b32.xlu0 %v688, 15
      %v717 = vpop.permute.xlu0 %716
      %718 = vrot.lane.b32.xlu0 %v689, 15
      %v719 = vpop.permute.xlu0 %718
      %v720 = vsel %vm388, %v717, %v719
      %v721 = vsel %vm388, %v719, %v717
      %v722 = vmul.f32 %v721, %v394
      %v723 = vmul.f32 %v720, %v398
      %v724 = vmul.f32 %v722, %v403
      %v725 = vmul.f32 %v723, %v403
      %v726 = vadd.f32 %v714, %v724
      %v727 = vadd.f32 %v715, %v725
      %728 = vrot.lane.b32.xlu0 %v688, 1
      %v729 = vpop.permute.xlu0 %728
      %730 = vrot.lane.b32.xlu0 %v689, 1
      %v731 = vpop.permute.xlu0 %730
      %v732 = vsel %vm413, %v729, %v731
      %v733 = vsel %vm413, %v731, %v729
      %v734 = vmul.f32 %v733, %v419
      %v735 = vmul.f32 %v732, %v423
      %v736 = vmul.f32 %v734, %v428
      %v737 = vmul.f32 %v735, %v428
      %v738 = vadd.f32 %v726, %v736
      %v739 = vadd.f32 %v727, %v737
      %740 = vrot.lane.b32.xlu0 %v688, 127
      %v741 = vpop.permute.xlu0 %740
      %742 = vrot.lane.b32.xlu0 %v689, 127
      %v743 = vpop.permute.xlu0 %742
      %v744 = vsel %vm438, %v741, %v743
      %v745 = vsel %vm438, %v743, %v741
      %v746 = vmul.f32 %v744, %v444
      %v747 = vmul.f32 %v745, %v448
      %v748 = vmul.f32 %v746, %v453
      %v749 = vmul.f32 %v747, %v453
      %v750 = vadd.f32 %v738, %v748
      %v751 = vadd.f32 %v739, %v749
      %752 = vrot.lane.b32.xlu0 %v688, 113
      %v753 = vpop.permute.xlu0 %752
      %754 = vrot.lane.b32.xlu0 %v689, 113
      %v755 = vpop.permute.xlu0 %754
      %v756 = vsel %vm463, %v753, %v755
      %v757 = vsel %vm463, %v755, %v753
      %v758 = vmul.f32 %v756, %v469
      %v759 = vmul.f32 %v757, %v473
      %v760 = vmul.f32 %v758, %v478
      %v761 = vmul.f32 %v759, %v478
      %v762 = vadd.f32 %v750, %v760
      %v763 = vadd.f32 %v751, %v761
      %764 = vrot.lane.b32.xlu0 %v688, 112
      %v765 = vpop.permute.xlu0 %764
      %766 = vrot.lane.b32.xlu0 %v689, 112
      %v767 = vpop.permute.xlu0 %766
      %v768 = vsel %vm488, %v765, %v767
      %v769 = vsel %vm488, %v767, %v765
      %v770 = vmul.f32 %v768, %v494
      %v771 = vmul.f32 %v769, %v498
      %v772 = vmul.f32 %v770, %v503
      %v773 = vmul.f32 %v771, %v503
      %v774 = vadd.f32 %v762, %v772
      %v775 = vadd.f32 %v763, %v773
      %776 = vrot.lane.b32.xlu0 %v688, 111
      %v777 = vpop.permute.xlu0 %776
      %778 = vrot.lane.b32.xlu0 %v689, 111
      %v779 = vpop.permute.xlu0 %778
      %v780 = vsel %vm513, %v777, %v779
      %v781 = vsel %vm513, %v779, %v777
      %v782 = vmul.f32 %v780, %v519
      %v783 = vmul.f32 %v781, %v523
      %v784 = vmul.f32 %v782, %v528
      %v785 = vmul.f32 %v783, %v528
      %v786 = vadd.f32 %v774, %v784
      %v787 = vadd.f32 %v775, %v785
      %v788 = vlaneseq
      %v789 = vshrl.u32 %v788, 7
      %v790 = vsub.s32 0, %v789
      %v791 = vrot.slane %v786, %v790
      %v792 = vlaneseq
      %v793 = vshrl.u32 %v792, 7
      %v794 = vsub.s32 0, %v793
      %v795 = vrot.slane %v787, %v794
      %v796 = vmul.f32 %v537, %v791
      %v797 = vmul.f32 %v537, %v795
      %v798 = vlaneseq
      %v799 = vshrl.u32 %v798, 7
      %v800 = vsub.s32 1, %v799
      %v801 = vrot.slane %v786, %v800
      %v802 = vlaneseq
      %v803 = vshrl.u32 %v802, 7
      %v804 = vsub.s32 1, %v803
      %v805 = vrot.slane %v787, %v804
      %v806 = vmul.f32 %v551, %v801
      %v807 = vmul.f32 %v551, %v805
      %v808 = vadd.f32 %v796, %v806
      %v809 = vadd.f32 %v797, %v807
      %v810 = vlaneseq
      %v811 = vshrl.u32 %v810, 7
      %v812 = vsub.s32 2, %v811
      %v813 = vrot.slane %v786, %v812
      %v814 = vlaneseq
      %v815 = vshrl.u32 %v814, 7
      %v816 = vsub.s32 2, %v815
      %v817 = vrot.slane %v787, %v816
      %v818 = vmul.f32 %v567, %v813
      %v819 = vmul.f32 %v567, %v817
      %v820 = vadd.f32 %v808, %v818
      %v821 = vadd.f32 %v809, %v819
      %v822 = vlaneseq
      %v823 = vshrl.u32 %v822, 7
      %v824 = vsub.s32 3, %v823
      %v825 = vrot.slane %v786, %v824
      %v826 = vlaneseq
      %v827 = vshrl.u32 %v826, 7
      %v828 = vsub.s32 3, %v827
      %v829 = vrot.slane %v787, %v828
      %v830 = vmul.f32 %v583, %v825
      %v831 = vmul.f32 %v583, %v829
      %v832 = vadd.f32 %v820, %v830
      %v833 = vadd.f32 %v821, %v831
      %v834 = vlaneseq
      %v835 = vshrl.u32 %v834, 7
      %v836 = vsub.s32 4, %v835
      %v837 = vrot.slane %v786, %v836
      %v838 = vlaneseq
      %v839 = vshrl.u32 %v838, 7
      %v840 = vsub.s32 4, %v839
      %v841 = vrot.slane %v787, %v840
      %v842 = vmul.f32 %v599, %v837
      %v843 = vmul.f32 %v599, %v841
      %v844 = vadd.f32 %v832, %v842
      %v845 = vadd.f32 %v833, %v843
      %v846 = vlaneseq
      %v847 = vshrl.u32 %v846, 7
      %v848 = vsub.s32 5, %v847
      %v849 = vrot.slane %v786, %v848
      %v850 = vlaneseq
      %v851 = vshrl.u32 %v850, 7
      %v852 = vsub.s32 5, %v851
      %v853 = vrot.slane %v787, %v852
      %v854 = vmul.f32 %v615, %v849
      %v855 = vmul.f32 %v615, %v853
      %v856 = vadd.f32 %v844, %v854
      %v857 = vadd.f32 %v845, %v855
      %v858 = vlaneseq
      %v859 = vshrl.u32 %v858, 7
      %v860 = vsub.s32 6, %v859
      %v861 = vrot.slane %v786, %v860
      %v862 = vlaneseq
      %v863 = vshrl.u32 %v862, 7
      %v864 = vsub.s32 6, %v863
      %v865 = vrot.slane %v787, %v864
      %v866 = vmul.f32 %v631, %v861
      %v867 = vmul.f32 %v631, %v865
      %v868 = vadd.f32 %v856, %v866
      %v869 = vadd.f32 %v857, %v867
      %v870 = vlaneseq
      %v871 = vshrl.u32 %v870, 7
      %v872 = vsub.s32 7, %v871
      %v873 = vrot.slane %v786, %v872
      %v874 = vlaneseq
      %v875 = vshrl.u32 %v874, 7
      %v876 = vsub.s32 7, %v875
      %v877 = vrot.slane %v787, %v876
      %v878 = vmul.f32 %v647, %v873
      %v879 = vmul.f32 %v647, %v877
      %v880 = vadd.f32 %v868, %v878
      %v881 = vadd.f32 %v869, %v879
      %v882 = vpack.c.bf16 %v880, %v880
      %v883 = vpack.c.bf16 %v881, %v881
      %v886 = vunpack.c.l.b16 %v882
      %v887 = vunpack.c.l.b16 %v883
      %v888 = vpack.c.b16 %v887, %v886
      %s890 = scalar_lea.vmem %s292, 8
      %891 = vst [vmem:[%s890] sm:$0xff] %v888
      %v892 = vadd.f32 %v880, %v881
      %893 = vadd.xlane.f32.xlu0 %v892
      %v894 = vpop.xlane.xlu0 %893
      %v895 = vadd.f32 %v673, %v894
      %v896 = vmul.f32 %v880, %v880
      %v897 = vmul.f32 %v881, %v881
      %v898 = vadd.f32 %v896, %v897
      %899 = vadd.xlane.f32.xlu0 %v898
      %v900 = vpop.xlane.xlu0 %899
      %v901 = vadd.f32 %v679, %v900
      %s902 = scalar_lea.vmem %s285, 16
      %v903 = vld [vmem:[%s902] sm:$0xff]
      %v904 = vunpack.c.l.bf16 %v903
      %v905 = vunpack.c.h.bf16 %v903
      %v906 = vmul.f32 %v904, %v312
      %v907 = vmul.f32 %v905, %v312
      %v908 = vadd.f32 %v906, %v319
      %v909 = vadd.f32 %v907, %v319
      %v910 = vmax.f32 %v908, 0.0
      %v911 = vmax.f32 %v909, 0.0
      %v912 = vmul.f32 %v910, %v328
      %v913 = vmul.f32 %v911, %v328
      %914 = vrot.lane.b32.xlu0 %v910, 17
      %v915 = vpop.permute.xlu0 %914
      %916 = vrot.lane.b32.xlu0 %v911, 17
      %v917 = vpop.permute.xlu0 %916
      %v918 = vsel %vm338, %v915, %v917
      %v919 = vsel %vm338, %v917, %v915
      %v920 = vmul.f32 %v919, %v344
      %v921 = vmul.f32 %v918, %v348
      %v922 = vmul.f32 %v920, %v353
      %v923 = vmul.f32 %v921, %v353
      %v924 = vadd.f32 %v912, %v922
      %v925 = vadd.f32 %v913, %v923
      %926 = vrot.lane.b32.xlu0 %v910, 16
      %v927 = vpop.permute.xlu0 %926
      %928 = vrot.lane.b32.xlu0 %v911, 16
      %v929 = vpop.permute.xlu0 %928
      %v930 = vsel %vm363, %v927, %v929
      %v931 = vsel %vm363, %v929, %v927
      %v932 = vmul.f32 %v931, %v369
      %v933 = vmul.f32 %v930, %v373
      %v934 = vmul.f32 %v932, %v378
      %v935 = vmul.f32 %v933, %v378
      %v936 = vadd.f32 %v924, %v934
      %v937 = vadd.f32 %v925, %v935
      %938 = vrot.lane.b32.xlu0 %v910, 15
      %v939 = vpop.permute.xlu0 %938
      %940 = vrot.lane.b32.xlu0 %v911, 15
      %v941 = vpop.permute.xlu0 %940
      %v942 = vsel %vm388, %v939, %v941
      %v943 = vsel %vm388, %v941, %v939
      %v944 = vmul.f32 %v943, %v394
      %v945 = vmul.f32 %v942, %v398
      %v946 = vmul.f32 %v944, %v403
      %v947 = vmul.f32 %v945, %v403
      %v948 = vadd.f32 %v936, %v946
      %v949 = vadd.f32 %v937, %v947
      %950 = vrot.lane.b32.xlu0 %v910, 1
      %v951 = vpop.permute.xlu0 %950
      %952 = vrot.lane.b32.xlu0 %v911, 1
      %v953 = vpop.permute.xlu0 %952
      %v954 = vsel %vm413, %v951, %v953
      %v955 = vsel %vm413, %v953, %v951
      %v956 = vmul.f32 %v955, %v419
      %v957 = vmul.f32 %v954, %v423
      %v958 = vmul.f32 %v956, %v428
      %v959 = vmul.f32 %v957, %v428
      %v960 = vadd.f32 %v948, %v958
      %v961 = vadd.f32 %v949, %v959
      %962 = vrot.lane.b32.xlu0 %v910, 127
      %v963 = vpop.permute.xlu0 %962
      %964 = vrot.lane.b32.xlu0 %v911, 127
      %v965 = vpop.permute.xlu0 %964
      %v966 = vsel %vm438, %v963, %v965
      %v967 = vsel %vm438, %v965, %v963
      %v968 = vmul.f32 %v966, %v444
      %v969 = vmul.f32 %v967, %v448
      %v970 = vmul.f32 %v968, %v453
      %v971 = vmul.f32 %v969, %v453
      %v972 = vadd.f32 %v960, %v970
      %v973 = vadd.f32 %v961, %v971
      %974 = vrot.lane.b32.xlu0 %v910, 113
      %v975 = vpop.permute.xlu0 %974
      %976 = vrot.lane.b32.xlu0 %v911, 113
      %v977 = vpop.permute.xlu0 %976
      %v978 = vsel %vm463, %v975, %v977
      %v979 = vsel %vm463, %v977, %v975
      %v980 = vmul.f32 %v978, %v469
      %v981 = vmul.f32 %v979, %v473
      %v982 = vmul.f32 %v980, %v478
      %v983 = vmul.f32 %v981, %v478
      %v984 = vadd.f32 %v972, %v982
      %v985 = vadd.f32 %v973, %v983
      %986 = vrot.lane.b32.xlu0 %v910, 112
      %v987 = vpop.permute.xlu0 %986
      %988 = vrot.lane.b32.xlu0 %v911, 112
      %v989 = vpop.permute.xlu0 %988
      %v990 = vsel %vm488, %v987, %v989
      %v991 = vsel %vm488, %v989, %v987
      %v992 = vmul.f32 %v990, %v494
      %v993 = vmul.f32 %v991, %v498
      %v994 = vmul.f32 %v992, %v503
      %v995 = vmul.f32 %v993, %v503
      %v996 = vadd.f32 %v984, %v994
      %v997 = vadd.f32 %v985, %v995
      %998 = vrot.lane.b32.xlu0 %v910, 111
      %v999 = vpop.permute.xlu0 %998
      %1000 = vrot.lane.b32.xlu0 %v911, 111
      %v1001 = vpop.permute.xlu0 %1000
      %v1002 = vsel %vm513, %v999, %v1001
      %v1003 = vsel %vm513, %v1001, %v999
      %v1004 = vmul.f32 %v1002, %v519
      %v1005 = vmul.f32 %v1003, %v523
      %v1006 = vmul.f32 %v1004, %v528
      %v1007 = vmul.f32 %v1005, %v528
      %v1008 = vadd.f32 %v996, %v1006
      %v1009 = vadd.f32 %v997, %v1007
      %v1010 = vlaneseq
      %v1011 = vshrl.u32 %v1010, 7
      %v1012 = vsub.s32 0, %v1011
      %v1013 = vrot.slane %v1008, %v1012
      %v1014 = vlaneseq
      %v1015 = vshrl.u32 %v1014, 7
      %v1016 = vsub.s32 0, %v1015
      %v1017 = vrot.slane %v1009, %v1016
      %v1018 = vmul.f32 %v537, %v1013
      %v1019 = vmul.f32 %v537, %v1017
      %v1020 = vlaneseq
      %v1021 = vshrl.u32 %v1020, 7
      %v1022 = vsub.s32 1, %v1021
      %v1023 = vrot.slane %v1008, %v1022
      %v1024 = vlaneseq
      %v1025 = vshrl.u32 %v1024, 7
      %v1026 = vsub.s32 1, %v1025
      %v1027 = vrot.slane %v1009, %v1026
      %v1028 = vmul.f32 %v551, %v1023
      %v1029 = vmul.f32 %v551, %v1027
      %v1030 = vadd.f32 %v1018, %v1028
      %v1031 = vadd.f32 %v1019, %v1029
      %v1032 = vlaneseq
      %v1033 = vshrl.u32 %v1032, 7
      %v1034 = vsub.s32 2, %v1033
      %v1035 = vrot.slane %v1008, %v1034
      %v1036 = vlaneseq
      %v1037 = vshrl.u32 %v1036, 7
      %v1038 = vsub.s32 2, %v1037
      %v1039 = vrot.slane %v1009, %v1038
      %v1040 = vmul.f32 %v567, %v1035
      %v1041 = vmul.f32 %v567, %v1039
      %v1042 = vadd.f32 %v1030, %v1040
      %v1043 = vadd.f32 %v1031, %v1041
      %v1044 = vlaneseq
      %v1045 = vshrl.u32 %v1044, 7
      %v1046 = vsub.s32 3, %v1045
      %v1047 = vrot.slane %v1008, %v1046
      %v1048 = vlaneseq
      %v1049 = vshrl.u32 %v1048, 7
      %v1050 = vsub.s32 3, %v1049
      %v1051 = vrot.slane %v1009, %v1050
      %v1052 = vmul.f32 %v583, %v1047
      %v1053 = vmul.f32 %v583, %v1051
      %v1054 = vadd.f32 %v1042, %v1052
      %v1055 = vadd.f32 %v1043, %v1053
      %v1056 = vlaneseq
      %v1057 = vshrl.u32 %v1056, 7
      %v1058 = vsub.s32 4, %v1057
      %v1059 = vrot.slane %v1008, %v1058
      %v1060 = vlaneseq
      %v1061 = vshrl.u32 %v1060, 7
      %v1062 = vsub.s32 4, %v1061
      %v1063 = vrot.slane %v1009, %v1062
      %v1064 = vmul.f32 %v599, %v1059
      %v1065 = vmul.f32 %v599, %v1063
      %v1066 = vadd.f32 %v1054, %v1064
      %v1067 = vadd.f32 %v1055, %v1065
      %v1068 = vlaneseq
      %v1069 = vshrl.u32 %v1068, 7
      %v1070 = vsub.s32 5, %v1069
      %v1071 = vrot.slane %v1008, %v1070
      %v1072 = vlaneseq
      %v1073 = vshrl.u32 %v1072, 7
      %v1074 = vsub.s32 5, %v1073
      %v1075 = vrot.slane %v1009, %v1074
      %v1076 = vmul.f32 %v615, %v1071
      %v1077 = vmul.f32 %v615, %v1075
      %v1078 = vadd.f32 %v1066, %v1076
      %v1079 = vadd.f32 %v1067, %v1077
      %v1080 = vlaneseq
      %v1081 = vshrl.u32 %v1080, 7
      %v1082 = vsub.s32 6, %v1081
      %v1083 = vrot.slane %v1008, %v1082
      %v1084 = vlaneseq
      %v1085 = vshrl.u32 %v1084, 7
      %v1086 = vsub.s32 6, %v1085
      %v1087 = vrot.slane %v1009, %v1086
      %v1088 = vmul.f32 %v631, %v1083
      %v1089 = vmul.f32 %v631, %v1087
      %v1090 = vadd.f32 %v1078, %v1088
      %v1091 = vadd.f32 %v1079, %v1089
      %v1092 = vlaneseq
      %v1093 = vshrl.u32 %v1092, 7
      %v1094 = vsub.s32 7, %v1093
      %v1095 = vrot.slane %v1008, %v1094
      %v1096 = vlaneseq
      %v1097 = vshrl.u32 %v1096, 7
      %v1098 = vsub.s32 7, %v1097
      %v1099 = vrot.slane %v1009, %v1098
      %v1100 = vmul.f32 %v647, %v1095
      %v1101 = vmul.f32 %v647, %v1099
      %v1102 = vadd.f32 %v1090, %v1100
      %v1103 = vadd.f32 %v1091, %v1101
      %v1104 = vpack.c.bf16 %v1102, %v1102
      %v1105 = vpack.c.bf16 %v1103, %v1103
      %v1108 = vunpack.c.l.b16 %v1104
      %v1109 = vunpack.c.l.b16 %v1105
      %v1110 = vpack.c.b16 %v1109, %v1108
      %s1112 = scalar_lea.vmem %s292, 16
      %1113 = vst [vmem:[%s1112] sm:$0xff] %v1110
      %v1114 = vadd.f32 %v1102, %v1103
      %1115 = vadd.xlane.f32.xlu0 %v1114
      %v1116 = vpop.xlane.xlu0 %1115
      %v1117 = vadd.f32 %v895, %v1116
      %v1118 = vmul.f32 %v1102, %v1102
      %v1119 = vmul.f32 %v1103, %v1103
      %v1120 = vadd.f32 %v1118, %v1119
      %1121 = vadd.xlane.f32.xlu0 %v1120
      %v1122 = vpop.xlane.xlu0 %1121
      %v1123 = vadd.f32 %v901, %v1122
      %s1124 = scalar_lea.vmem %s285, 24
      %v1125 = vld [vmem:[%s1124] sm:$0xff]
      %v1126 = vunpack.c.l.bf16 %v1125
      %v1127 = vunpack.c.h.bf16 %v1125
      %v1128 = vmul.f32 %v1126, %v312
      %v1129 = vmul.f32 %v1127, %v312
      %v1130 = vadd.f32 %v1128, %v319
      %v1131 = vadd.f32 %v1129, %v319
      %v1132 = vmax.f32 %v1130, 0.0
      %v1133 = vmax.f32 %v1131, 0.0
      %v1134 = vmul.f32 %v1132, %v328
      %v1135 = vmul.f32 %v1133, %v328
      %1136 = vrot.lane.b32.xlu0 %v1132, 17
      %v1137 = vpop.permute.xlu0 %1136
      %1138 = vrot.lane.b32.xlu0 %v1133, 17
      %v1139 = vpop.permute.xlu0 %1138
      %v1140 = vsel %vm338, %v1137, %v1139
      %v1141 = vsel %vm338, %v1139, %v1137
      %v1142 = vmul.f32 %v1141, %v344
      %v1143 = vmul.f32 %v1140, %v348
      %v1144 = vmul.f32 %v1142, %v353
      %v1145 = vmul.f32 %v1143, %v353
      %v1146 = vadd.f32 %v1134, %v1144
      %v1147 = vadd.f32 %v1135, %v1145
      %1148 = vrot.lane.b32.xlu0 %v1132, 16
      %v1149 = vpop.permute.xlu0 %1148
      %1150 = vrot.lane.b32.xlu0 %v1133, 16
      %v1151 = vpop.permute.xlu0 %1150
      %v1152 = vsel %vm363, %v1149, %v1151
      %v1153 = vsel %vm363, %v1151, %v1149
      %v1154 = vmul.f32 %v1153, %v369
      %v1155 = vmul.f32 %v1152, %v373
      %v1156 = vmul.f32 %v1154, %v378
      %v1157 = vmul.f32 %v1155, %v378
      %v1158 = vadd.f32 %v1146, %v1156
      %v1159 = vadd.f32 %v1147, %v1157
      %1160 = vrot.lane.b32.xlu0 %v1132, 15
      %v1161 = vpop.permute.xlu0 %1160
      %1162 = vrot.lane.b32.xlu0 %v1133, 15
      %v1163 = vpop.permute.xlu0 %1162
      %v1164 = vsel %vm388, %v1161, %v1163
      %v1165 = vsel %vm388, %v1163, %v1161
      %v1166 = vmul.f32 %v1165, %v394
      %v1167 = vmul.f32 %v1164, %v398
      %v1168 = vmul.f32 %v1166, %v403
      %v1169 = vmul.f32 %v1167, %v403
      %v1170 = vadd.f32 %v1158, %v1168
      %v1171 = vadd.f32 %v1159, %v1169
      %1172 = vrot.lane.b32.xlu0 %v1132, 1
      %v1173 = vpop.permute.xlu0 %1172
      %1174 = vrot.lane.b32.xlu0 %v1133, 1
      %v1175 = vpop.permute.xlu0 %1174
      %v1176 = vsel %vm413, %v1173, %v1175
      %v1177 = vsel %vm413, %v1175, %v1173
      %v1178 = vmul.f32 %v1177, %v419
      %v1179 = vmul.f32 %v1176, %v423
      %v1180 = vmul.f32 %v1178, %v428
      %v1181 = vmul.f32 %v1179, %v428
      %v1182 = vadd.f32 %v1170, %v1180
      %v1183 = vadd.f32 %v1171, %v1181
      %1184 = vrot.lane.b32.xlu0 %v1132, 127
      %v1185 = vpop.permute.xlu0 %1184
      %1186 = vrot.lane.b32.xlu0 %v1133, 127
      %v1187 = vpop.permute.xlu0 %1186
      %v1188 = vsel %vm438, %v1185, %v1187
      %v1189 = vsel %vm438, %v1187, %v1185
      %v1190 = vmul.f32 %v1188, %v444
      %v1191 = vmul.f32 %v1189, %v448
      %v1192 = vmul.f32 %v1190, %v453
      %v1193 = vmul.f32 %v1191, %v453
      %v1194 = vadd.f32 %v1182, %v1192
      %v1195 = vadd.f32 %v1183, %v1193
      %1196 = vrot.lane.b32.xlu0 %v1132, 113
      %v1197 = vpop.permute.xlu0 %1196
      %1198 = vrot.lane.b32.xlu0 %v1133, 113
      %v1199 = vpop.permute.xlu0 %1198
      %v1200 = vsel %vm463, %v1197, %v1199
      %v1201 = vsel %vm463, %v1199, %v1197
      %v1202 = vmul.f32 %v1200, %v469
      %v1203 = vmul.f32 %v1201, %v473
      %v1204 = vmul.f32 %v1202, %v478
      %v1205 = vmul.f32 %v1203, %v478
      %v1206 = vadd.f32 %v1194, %v1204
      %v1207 = vadd.f32 %v1195, %v1205
      %1208 = vrot.lane.b32.xlu0 %v1132, 112
      %v1209 = vpop.permute.xlu0 %1208
      %1210 = vrot.lane.b32.xlu0 %v1133, 112
      %v1211 = vpop.permute.xlu0 %1210
      %v1212 = vsel %vm488, %v1209, %v1211
      %v1213 = vsel %vm488, %v1211, %v1209
      %v1214 = vmul.f32 %v1212, %v494
      %v1215 = vmul.f32 %v1213, %v498
      %v1216 = vmul.f32 %v1214, %v503
      %v1217 = vmul.f32 %v1215, %v503
      %v1218 = vadd.f32 %v1206, %v1216
      %v1219 = vadd.f32 %v1207, %v1217
      %1220 = vrot.lane.b32.xlu0 %v1132, 111
      %v1221 = vpop.permute.xlu0 %1220
      %1222 = vrot.lane.b32.xlu0 %v1133, 111
      %v1223 = vpop.permute.xlu0 %1222
      %v1224 = vsel %vm513, %v1221, %v1223
      %v1225 = vsel %vm513, %v1223, %v1221
      %v1226 = vmul.f32 %v1224, %v519
      %v1227 = vmul.f32 %v1225, %v523
      %v1228 = vmul.f32 %v1226, %v528
      %v1229 = vmul.f32 %v1227, %v528
      %v1230 = vadd.f32 %v1218, %v1228
      %v1231 = vadd.f32 %v1219, %v1229
      %v1232 = vlaneseq
      %v1233 = vshrl.u32 %v1232, 7
      %v1234 = vsub.s32 0, %v1233
      %v1235 = vrot.slane %v1230, %v1234
      %v1236 = vlaneseq
      %v1237 = vshrl.u32 %v1236, 7
      %v1238 = vsub.s32 0, %v1237
      %v1239 = vrot.slane %v1231, %v1238
      %v1240 = vmul.f32 %v537, %v1235
      %v1241 = vmul.f32 %v537, %v1239
      %v1242 = vlaneseq
      %v1243 = vshrl.u32 %v1242, 7
      %v1244 = vsub.s32 1, %v1243
      %v1245 = vrot.slane %v1230, %v1244
      %v1246 = vlaneseq
      %v1247 = vshrl.u32 %v1246, 7
      %v1248 = vsub.s32 1, %v1247
      %v1249 = vrot.slane %v1231, %v1248
      %v1250 = vmul.f32 %v551, %v1245
      %v1251 = vmul.f32 %v551, %v1249
      %v1252 = vadd.f32 %v1240, %v1250
      %v1253 = vadd.f32 %v1241, %v1251
      %v1254 = vlaneseq
      %v1255 = vshrl.u32 %v1254, 7
      %v1256 = vsub.s32 2, %v1255
      %v1257 = vrot.slane %v1230, %v1256
      %v1258 = vlaneseq
      %v1259 = vshrl.u32 %v1258, 7
      %v1260 = vsub.s32 2, %v1259
      %v1261 = vrot.slane %v1231, %v1260
      %v1262 = vmul.f32 %v567, %v1257
      %v1263 = vmul.f32 %v567, %v1261
      %v1264 = vadd.f32 %v1252, %v1262
      %v1265 = vadd.f32 %v1253, %v1263
      %v1266 = vlaneseq
      %v1267 = vshrl.u32 %v1266, 7
      %v1268 = vsub.s32 3, %v1267
      %v1269 = vrot.slane %v1230, %v1268
      %v1270 = vlaneseq
      %v1271 = vshrl.u32 %v1270, 7
      %v1272 = vsub.s32 3, %v1271
      %v1273 = vrot.slane %v1231, %v1272
      %v1274 = vmul.f32 %v583, %v1269
      %v1275 = vmul.f32 %v583, %v1273
      %v1276 = vadd.f32 %v1264, %v1274
      %v1277 = vadd.f32 %v1265, %v1275
      %v1278 = vlaneseq
      %v1279 = vshrl.u32 %v1278, 7
      %v1280 = vsub.s32 4, %v1279
      %v1281 = vrot.slane %v1230, %v1280
      %v1282 = vlaneseq
      %v1283 = vshrl.u32 %v1282, 7
      %v1284 = vsub.s32 4, %v1283
      %v1285 = vrot.slane %v1231, %v1284
      %v1286 = vmul.f32 %v599, %v1281
      %v1287 = vmul.f32 %v599, %v1285
      %v1288 = vadd.f32 %v1276, %v1286
      %v1289 = vadd.f32 %v1277, %v1287
      %v1290 = vlaneseq
      %v1291 = vshrl.u32 %v1290, 7
      %v1292 = vsub.s32 5, %v1291
      %v1293 = vrot.slane %v1230, %v1292
      %v1294 = vlaneseq
      %v1295 = vshrl.u32 %v1294, 7
      %v1296 = vsub.s32 5, %v1295
      %v1297 = vrot.slane %v1231, %v1296
      %v1298 = vmul.f32 %v615, %v1293
      %v1299 = vmul.f32 %v615, %v1297
      %v1300 = vadd.f32 %v1288, %v1298
      %v1301 = vadd.f32 %v1289, %v1299
      %v1302 = vlaneseq
      %v1303 = vshrl.u32 %v1302, 7
      %v1304 = vsub.s32 6, %v1303
      %v1305 = vrot.slane %v1230, %v1304
      %v1306 = vlaneseq
      %v1307 = vshrl.u32 %v1306, 7
      %v1308 = vsub.s32 6, %v1307
      %v1309 = vrot.slane %v1231, %v1308
      %v1310 = vmul.f32 %v631, %v1305
      %v1311 = vmul.f32 %v631, %v1309
      %v1312 = vadd.f32 %v1300, %v1310
      %v1313 = vadd.f32 %v1301, %v1311
      %v1314 = vlaneseq
      %v1315 = vshrl.u32 %v1314, 7
      %v1316 = vsub.s32 7, %v1315
      %v1317 = vrot.slane %v1230, %v1316
      %v1318 = vlaneseq
      %v1319 = vshrl.u32 %v1318, 7
      %v1320 = vsub.s32 7, %v1319
      %v1321 = vrot.slane %v1231, %v1320
      %v1322 = vmul.f32 %v647, %v1317
      %v1323 = vmul.f32 %v647, %v1321
      %v1324 = vadd.f32 %v1312, %v1322
      %v1325 = vadd.f32 %v1313, %v1323
      %v1326 = vpack.c.bf16 %v1324, %v1324
      %v1327 = vpack.c.bf16 %v1325, %v1325
      %v1330 = vunpack.c.l.b16 %v1326
      %v1331 = vunpack.c.l.b16 %v1327
      %v1332 = vpack.c.b16 %v1331, %v1330
      %s1334 = scalar_lea.vmem %s292, 24
      %1335 = vst [vmem:[%s1334] sm:$0xff] %v1332
      %v1336 = vadd.f32 %v1324, %v1325
      %1337 = vadd.xlane.f32.xlu0 %v1336
      %v1338 = vpop.xlane.xlu0 %1337
      %v1339 = vadd.f32 %v1117, %v1338
      %v1340 = vmul.f32 %v1324, %v1324
      %v1341 = vmul.f32 %v1325, %v1325
      %v1342 = vadd.f32 %v1340, %v1341
      %1343 = vadd.xlane.f32.xlu0 %v1342
      %v1344 = vpop.xlane.xlu0 %1343
      %v1345 = vadd.f32 %v1123, %v1344
      %vm1346 = vcmask 7168
      %v1347 = vsel %vm1346, %v1339, %v1345
      %vm1348 = vcmask 15360
      %1349 = vst.msk [vmem:[%s297] sm:$0xff] %vm1348, %v1347
      %s1350 = smul.u32 4, %s19
      %p1351 = scmp.lt.s32.totalorder %s1350, 7
      %s1352 = scalar_select %p1351, %s1350, 7
      %s1353 = smul.addr %s1352, 2
      %s1354 = smul.addr %s1353, 4
      %s1355 = scalar_lea.vmem %s6, %s1354
      %p1356 = scmp.lt.s32.totalorder %s19, 1
      %s1357 = scalar_select %p1356, %s19, 1
      %s1358 = smul.addr %s1357, 8
      %s1359 = scalar_lea.vmem %s7, %s1358
      // Predicated region
      $region45: #{_lambda_.4} parent=43 // pred_check
        %p1360 = pneg %p168
      $region46: #{_lambda_.4} parent=43 // pred_check_branch
        %1362 = sbr.rel (%p1360) target = $region48
      $region47: #{_lambda_.4} parent=43 // pred_region
        %s1363 = smul.u32 4, %s19
      $region48: #{_lambda_.4} parent=43 // pred_fallthru
        _
      // Predicated region
      $region49: #{_lambda_.4} parent=43 // pred_check
        %p1364 = pneg %p194
      $region50: #{_lambda_.4} parent=43 // pred_check_branch
        %1366 = sbr.rel (%p1364) target = $region52
      $region51: #{_lambda_.4} parent=43 // pred_region
        _
      $region52: #{_lambda_.4} parent=43 // pred_fallthru
        _
    $region44: #{_lambda_.4} parent=5 // pred_fallthru
      _
    %p1367 = scmp.le.s32.totalorder 2, %s14
    // Predicated region
    $region53: #{_lambda_.4} parent=5 // pred_check
      %p1368 = pneg %p1367
    $region54: #{_lambda_.4} parent=5 // pred_check_branch
      %1370 = sbr.rel (%p1368) target = $region56
    $region55: #{_lambda_.4} parent=5 // pred_region
      %s1371 = ssub.s32 %s14, 2
      // Predicated region
      $region57: #{_lambda_.4} parent=55 // pred_check
        %p1372 = pneg %p174
      $region58: #{_lambda_.4} parent=55 // pred_check_branch
        %1374 = sbr.rel (%p1372) target = $region60
      $region59: #{_lambda_.4} parent=55 // pred_region
        %s1375 = smul.u32 4, %s20
        %p1376 = scmp.lt.s32.totalorder %s1375, 7
        %s1377 = scalar_select %p1376, %s1375, 7
        %s1378 = smul.addr %s1377, 2
        %s1379 = smul.addr %s1378, 4
        %s1380 = scalar_lea.vmem %s6, %s1379
      $region60: #{_lambda_.4} parent=55 // pred_fallthru
        _
      // Predicated region
      $region61: #{_lambda_.4} parent=55 // pred_check
        %p1381 = pneg %p200
      $region62: #{_lambda_.4} parent=55 // pred_check_branch
        %1383 = sbr.rel (%p1381) target = $region64
      $region63: #{_lambda_.4} parent=55 // pred_region
        %p1384 = scmp.lt.s32.totalorder %s20, 1
        %s1385 = scalar_select %p1384, %s20, 1
        %s1386 = smul.addr %s1385, 8
        %s1387 = scalar_lea.vmem %s7, %s1386
      $region64: #{_lambda_.4} parent=55 // pred_fallthru
        _
    $region56: #{_lambda_.4} parent=5 // pred_fallthru
      _
  $region6: #{_lambda_.4} parent=0 // loop_footer
    %s18 = sadd.s32 1, %s14
  $region7: #{_lambda_.4} parent=0 // loop_footer_branch
    %13 = sbr.rel target = $region3
  $region8: #{_lambda_.4} parent=0 // loop_exit
    _

</llo_original>
